<compile_context>
chip_gen: v7x
topology: tpu7x:2x2x1
jax: 0.10.0
libtpu: 0.0.40
codegen_flags: <defaults>
</compile_context>

<pallas_src>
import functools
import math

import jax
import jax.numpy as jnp
from jax.experimental import pallas as pl
from jax.experimental.pallas import tpu as pltpu

# Small, self-consistent hyperparameters (scaled down from the original
# embedding_dim=384/heads=6/seq=256 to keep the example tiny but TPU-tile
# friendly).
B = 2           # batch
S = 128         # sequence length
D = 128         # embedding_dim
H = 4           # num_heads
HD = D // H     # head_dim = 32
FF = 4 * D      # feed-forward hidden = 512
EPS = 1e-5      # nn.LayerNorm default eps
NEG_BIG = -1e30  # finite mask value (safe vs -inf + bf16 downstream)


def _layernorm(x, gamma, beta):
    mean = jnp.mean(x, axis=-1, keepdims=True)
    var = jnp.mean((x - mean) ** 2, axis=-1, keepdims=True)
    return (x - mean) * jax.lax.rsqrt(var + EPS) * gamma + beta


def fused_block_kernel(x_ref, vecs_ref, bb1_ref, wqkv_ref, wo_ref, w1_ref,
                       w2_ref, o_ref, *, num_heads, head_dim, seq_len,
                       batch_per_block):
    """Full transformer block for `batch_per_block` batch rows (R = nb*S rows).

    Activation block is 2-D: (R, D).  LN / QKV / Wo / FFN matmuls run on all R
    rows at once; only the (S, S) scores/softmax loop iterates per batch row
    (row slices are sublane-aligned) and per head.
    """
    x = x_ref[...]                                # (R, D) f32
    d = num_heads * head_dim

    g1, b1, bo = vecs_ref[0], vecs_ref[1], vecs_ref[2]     # (D,)
    g2, b2, bb2 = vecs_ref[3], vecs_ref[4], vecs_ref[5]    # (D,)
    bb1 = bb1_ref[0]                                       # (FF,)

    # ---------------- attention sub-block (pre-LN + residual) --------------
    xn = _layernorm(x, g1, b1)                    # f32

    # One lane-dense QKV matmul: (R, D) @ (D, 3D) -> (R, 3D), f32 accumulate.
    # The 1/sqrt(head_dim) scale is pre-folded into the Wq columns.
    qkv = jnp.dot(xn.astype(jnp.bfloat16), wqkv_ref[...],
                  preferred_element_type=jnp.float32)
    qkv_bf = qkv.astype(jnp.bfloat16)             # single full-tile downcast

    # causal mask (tril), shared by every batch row / head
    row = jax.lax.broadcasted_iota(jnp.int32, (seq_len, seq_len), 0)
    col = jax.lax.broadcasted_iota(jnp.int32, (seq_len, seq_len), 1)
    causal = row >= col

    attn_rows = []
    for bi in range(batch_per_block):             # static unroll (<= 2)
        r0 = bi * seq_len
        heads = []
        for h in range(num_heads):                # static unroll (4 heads)
            lo = h * head_dim
            q = qkv_bf[r0:r0 + seq_len, lo:lo + head_dim]            # scaled
            k = qkv_bf[r0:r0 + seq_len, d + lo:d + lo + head_dim]
            v = qkv_bf[r0:r0 + seq_len, 2 * d + lo:2 * d + lo + head_dim]

            # scores: contract on head_dim directly (no explicit k.T relayout)
            s = jax.lax.dot_general(
                q, k, dimension_numbers=(((1,), (1,)), ((), ())),
                preferred_element_type=jnp.float32)           # (S, S) f32
            s = jnp.where(causal, s, NEG_BIG)

            # softmax: max-subtract + exp (f32, safe on v5e); normalize AFTER
            # the P@V matmul so the broadcast multiply is (S,HD) not (S,S).
            m = jnp.max(s, axis=-1, keepdims=True)
            p = jnp.exp(s - m)                                # values in [0,1]
            denom = jnp.sum(p, axis=-1, keepdims=True)
            head_out = jnp.dot(p.astype(jnp.bfloat16), v,
                               preferred_element_type=jnp.float32)  # (S, HD)
            head_out = head_out * pl.reciprocal(denom, approx=True)
            heads.append(head_out)
        attn_rows.append(jnp.concatenate(heads, axis=-1))     # (S, D) f32

    attn = (attn_rows[0] if batch_per_block == 1
            else jnp.concatenate(attn_rows, axis=0))          # (R, D) f32

    # One full-K output projection instead of num_heads K=32 matmuls.
    attn_proj = jnp.dot(attn.astype(jnp.bfloat16), wo_ref[...],
                        preferred_element_type=jnp.float32) + bo
    x = x + attn_proj                             # residual 1 (f32)

    # ---------------- feed-forward sub-block (pre-LN + residual) -----------
    xn2 = _layernorm(x, g2, b2)                   # f32
    hdd = jnp.dot(xn2.astype(jnp.bfloat16), w1_ref[...],
                  preferred_element_type=jnp.float32) + bb1
    hdd = jnp.maximum(hdd, 0.0)                   # ReLU, f32
    ff_out = jnp.dot(hdd.astype(jnp.bfloat16), w2_ref[...],
                     preferred_element_type=jnp.float32) + bb2

    o_ref[...] = x + ff_out                       # residual 2


def _default_batch_per_block(batch):
    """Merge the batch into M on single-TensorCore chips (v5e / v6e); keep the
    batch as a parallel grid axis on 2-TC chips (v7x, v5p, v4) or unknown."""
    try:
        kind = jax.devices()[0].device_kind.lower()
    except Exception:
        return 1
    single_tc = any(t in kind for t in
                    ("v5e", "v5 lite", "v5lite", "v6e", "v6 lite", "v6lite"))
    return batch if single_tc else 1


def transformer_block(x, params, *, batch_per_block=None):
    """x: (B, S, D) float32. Returns (B, S, D)."""
    b, s, d = x.shape
    if batch_per_block is None:
        batch_per_block = _default_batch_per_block(b)
    assert b % batch_per_block == 0
    nb = batch_per_block
    rows = nb * s

    # Wrapper-side weight prep: fold attention scale into Wq, fuse QKV,
    # cast matmul weights to bf16 (halves weight DMA bytes).
    scale = 1.0 / math.sqrt(HD)
    wqkv = jnp.concatenate(
        [params["wq"] * scale, params["wk"], params["wv"]],
        axis=1).astype(jnp.bfloat16)                       # (D, 3D)
    wo = params["wo"].astype(jnp.bfloat16)                 # (D, D)
    w1 = params["w1"].astype(jnp.bfloat16)                 # (D, FF)
    w2 = params["w2"].astype(jnp.bfloat16)                 # (FF, D)

    # Pack the six (1, D) LN/bias vectors into one (6, D) array (fewer DMAs).
    vecs = jnp.concatenate(
        [params["g1"], params["b1"], params["bo"],
         params["g2"], params["b2"], params["bb2"]], axis=0)  # (6, D) f32
    bb1 = params["bb1"]                                       # (1, FF) f32

    x2 = x.reshape(b * s, d)                      # contiguous, free reshape
    act_spec = pl.BlockSpec((rows, d), lambda i: (i, 0))

    out = pl.pallas_call(
        functools.partial(fused_block_kernel, num_heads=H, head_dim=HD,
                          seq_len=s, batch_per_block=nb),
        out_shape=jax.ShapeDtypeStruct((b * s, d), jnp.float32),
        grid=(b // nb,),
        in_specs=[
            act_spec,                                  # x (residual stream)
            pl.BlockSpec((6, d), lambda i: (0, 0)),    # packed LN/bias vectors
            pl.BlockSpec((1, FF), lambda i: (0, 0)),   # b1 of FFN
            pl.BlockSpec((d, 3 * d), lambda i: (0, 0)),  # Wqkv (bf16, scaled)
            pl.BlockSpec((d, d), lambda i: (0, 0)),      # Wo   (bf16)
            pl.BlockSpec((d, FF), lambda i: (0, 0)),     # W1   (bf16)
            pl.BlockSpec((FF, d), lambda i: (0, 0)),     # W2   (bf16)
        ],
        out_specs=act_spec,
        compiler_params=pltpu.CompilerParams(
            dimension_semantics=("parallel",),   # batch across TCs on v7x
            vmem_limit_bytes=32 * 1024 * 1024,   # safe on v7x's 64 MiB
        ),
    )(x2, vecs, bb1, wqkv, wo, w1, w2)

    return out.reshape(b, s, d)


def init_params(key):
    ks = jax.random.split(key, 8)
    scale = 0.02
    p = {
        "g1": jnp.ones((1, D), jnp.float32),
        "b1": jnp.zeros((1, D), jnp.float32),
        "g2": jnp.ones((1, D), jnp.float32),
        "b2": jnp.zeros((1, D), jnp.float32),
        "wq": scale * jax.random.normal(ks[0], (D, D), jnp.float32),
        "wk": scale * jax.random.normal(ks[1], (D, D), jnp.float32),
        "wv": scale * jax.random.normal(ks[2], (D, D), jnp.float32),
        "wo": scale * jax.random.normal(ks[3], (D, D), jnp.float32),
        "bo": scale * jax.random.normal(ks[4], (1, D), jnp.float32),
        "w1": scale * jax.random.normal(ks[5], (D, FF), jnp.float32),
        "bb1": scale * jax.random.normal(ks[6], (1, FF), jnp.float32),
        "w2": scale * jax.random.normal(ks[7], (FF, D), jnp.float32),
        "bb2": jnp.zeros((1, D), jnp.float32),
    }
    return p


def reference(x, p):
    """Pure-JAX f32 reference mirroring the PyTorch forward (eval mode)."""
    def ln(v, g, b_):
        m = jnp.mean(v, axis=-1, keepdims=True)
        var = jnp.mean((v - m) ** 2, axis=-1, keepdims=True)
        return (v - m) / jnp.sqrt(var + EPS) * g + b_

    xn = ln(x, p["g1"][0], p["b1"][0])
    mask = jnp.tril(jnp.ones((S, S), bool))
    outs = []
    for h in range(H):
        lo, hi = h * HD, (h + 1) * HD
        q = xn @ p["wq"][:, lo:hi]
        k = xn @ p["wk"][:, lo:hi]
        v = xn @ p["wv"][:, lo:hi]
        s = q @ jnp.swapaxes(k, -1, -2) / math.sqrt(HD)
        s = jnp.where(mask, s, -jnp.inf)
        outs.append(jax.nn.softmax(s, axis=-1) @ v)
    x = x + jnp.concatenate(outs, axis=-1) @ p["wo"] + p["bo"][0]
    xn = ln(x, p["g2"][0], p["b2"][0])
    hdd = jnp.maximum(xn @ p["w1"] + p["bb1"][0], 0.0)
    return x + hdd @ p["w2"] + p["bb2"][0]


if __name__ == "__main__":
    key = jax.random.PRNGKey(0)
    kx, kp = jax.random.split(key)
    x = jax.random.normal(kx, (B, S, D), jnp.float32)
    params = init_params(kp)

    out = transformer_block(x, params)
    out = jax.block_until_ready(out)

    ref = reference(x, params)
    assert out.shape == (B, S, D)
    max_err = jnp.max(jnp.abs(out - ref))
    # bf16 matmul operands (f32 accumulation) + approx reciprocal vs the f32
    # reference: expect ~1e-3 absolute error on O(1) outputs; 2e-2 tolerance
    # is comfortable.
    assert jnp.allclose(out, ref, atol=2e-2, rtol=2e-2), \
        f"max err {max_err}"
    print("KERNEL_OK")
</pallas_src>

<mosaic_0001>
module attributes {stable_mosaic.version = 11 : i64} {
  func.func @fused_block_kernel(%arg0: i32, %arg1: memref<128x128xf32, #tpu.memory_space<vmem>>, %arg2: memref<6x128xf32, #tpu.memory_space<vmem>>, %arg3: memref<1x512xf32, #tpu.memory_space<vmem>>, %arg4: memref<128x384xbf16, #tpu.memory_space<vmem>>, %arg5: memref<128x128xbf16, #tpu.memory_space<vmem>>, %arg6: memref<128x512xbf16, #tpu.memory_space<vmem>>, %arg7: memref<512x128xbf16, #tpu.memory_space<vmem>>, %arg8: memref<128x128xf32, #tpu.memory_space<vmem>>) attributes {dimension_semantics = [#tpu.dimension_semantics<parallel>], iteration_bounds = array<i64: 2>, scalar_prefetch = 0 : i64, scratch_operands = 0 : i64, tpu.core_type = #tpu.core_type<tc>, window_params = [{transform_indices = @transform_0, window_bounds = array<i64: 128, 128>}, {pipeline_mode = #tpu.pipeline_mode<synchronous>, transform_indices = @transform_1, window_bounds = array<i64: 6, 128>}, {pipeline_mode = #tpu.pipeline_mode<synchronous>, transform_indices = @transform_2, window_bounds = array<i64: 1, 512>}, {pipeline_mode = #tpu.pipeline_mode<synchronous>, transform_indices = @transform_3, window_bounds = array<i64: 128, 384>}, {pipeline_mode = #tpu.pipeline_mode<synchronous>, transform_indices = @transform_4, window_bounds = array<i64: 128, 128>}, {pipeline_mode = #tpu.pipeline_mode<synchronous>, transform_indices = @transform_5, window_bounds = array<i64: 128, 512>}, {pipeline_mode = #tpu.pipeline_mode<synchronous>, transform_indices = @transform_6, window_bounds = array<i64: 512, 128>}, {transform_indices = @transform_7, window_bounds = array<i64: 128, 128>}]} {
    %c0 = arith.constant 0 : index
    %c0_0 = arith.constant 0 : index
    %0 = vector.load %arg1[%c0, %c0_0] : memref<128x128xf32, #tpu.memory_space<vmem>>, vector<128x128xf32>
    %c0_1 = arith.constant 0 : index
    %c0_2 = arith.constant 0 : index
    %1 = vector.load %arg2[%c0_1, %c0_2] : memref<6x128xf32, #tpu.memory_space<vmem>>, vector<1x128xf32>
    %2 = vector.shape_cast %1 : vector<1x128xf32> to vector<128xf32>
    %c1 = arith.constant 1 : index
    %c0_3 = arith.constant 0 : index
    %3 = vector.load %arg2[%c1, %c0_3] : memref<6x128xf32, #tpu.memory_space<vmem>>, vector<1x128xf32>
    %4 = vector.shape_cast %3 : vector<1x128xf32> to vector<128xf32>
    %c2 = arith.constant 2 : index
    %c0_4 = arith.constant 0 : index
    %5 = vector.load %arg2[%c2, %c0_4] : memref<6x128xf32, #tpu.memory_space<vmem>>, vector<1x128xf32>
    %6 = vector.shape_cast %5 : vector<1x128xf32> to vector<128xf32>
    %c3 = arith.constant 3 : index
    %c0_5 = arith.constant 0 : index
    %7 = vector.load %arg2[%c3, %c0_5] : memref<6x128xf32, #tpu.memory_space<vmem>>, vector<1x128xf32>
    %8 = vector.shape_cast %7 : vector<1x128xf32> to vector<128xf32>
    %c4 = arith.constant 4 : index
    %c0_6 = arith.constant 0 : index
    %9 = vector.load %arg2[%c4, %c0_6] : memref<6x128xf32, #tpu.memory_space<vmem>>, vector<1x128xf32>
    %10 = vector.shape_cast %9 : vector<1x128xf32> to vector<128xf32>
    %c5 = arith.constant 5 : index
    %c0_7 = arith.constant 0 : index
    %11 = vector.load %arg2[%c5, %c0_7] : memref<6x128xf32, #tpu.memory_space<vmem>>, vector<1x128xf32>
    %12 = vector.shape_cast %11 : vector<1x128xf32> to vector<128xf32>
    %c0_8 = arith.constant 0 : index
    %c0_9 = arith.constant 0 : index
    %13 = vector.load %arg3[%c0_8, %c0_9] : memref<1x512xf32, #tpu.memory_space<vmem>>, vector<1x512xf32>
    %14 = vector.shape_cast %13 : vector<1x512xf32> to vector<512xf32>
    %cst = arith.constant dense<0.000000e+00> : vector<128xf32>
    %15 = vector.multi_reduction <add>, %0, %cst [1] : vector<128x128xf32> to vector<128xf32>
    %16 = vector.shape_cast %15 : vector<128xf32> to vector<128x1xf32>
    %cst_10 = arith.constant 1.280000e+02 : f32
    %17 = vector.broadcast %cst_10 : f32 to vector<128x1xf32>
    %18 = arith.divf %16, %17 : vector<128x1xf32>
    %19 = vector.broadcast %18 : vector<128x1xf32> to vector<128x128xf32>
    %20 = arith.subf %0, %19 : vector<128x128xf32>
    %21 = arith.mulf %20, %20 : vector<128x128xf32>
    %cst_11 = arith.constant dense<0.000000e+00> : vector<128xf32>
    %22 = vector.multi_reduction <add>, %21, %cst_11 [1] : vector<128x128xf32> to vector<128xf32>
    %23 = vector.shape_cast %22 : vector<128xf32> to vector<128x1xf32>
    %cst_12 = arith.constant 1.280000e+02 : f32
    %24 = vector.broadcast %cst_12 : f32 to vector<128x1xf32>
    %25 = arith.divf %23, %24 : vector<128x1xf32>
    %26 = vector.broadcast %18 : vector<128x1xf32> to vector<128x128xf32>
    %27 = arith.subf %0, %26 : vector<128x128xf32>
    %cst_13 = arith.constant 9.99999974E-6 : f32
    %28 = vector.broadcast %cst_13 : f32 to vector<128x1xf32>
    %29 = arith.addf %25, %28 : vector<128x1xf32>
    %30 = math.rsqrt %29 : vector<128x1xf32>
    %31 = vector.broadcast %30 : vector<128x1xf32> to vector<128x128xf32>
    %32 = arith.mulf %27, %31 : vector<128x128xf32>
    %33 = vector.shape_cast %2 : vector<128xf32> to vector<1x128xf32>
    %34 = vector.broadcast %33 : vector<1x128xf32> to vector<128x128xf32>
    %35 = arith.mulf %32, %34 : vector<128x128xf32>
    %36 = vector.shape_cast %4 : vector<128xf32> to vector<1x128xf32>
    %37 = vector.broadcast %36 : vector<1x128xf32> to vector<128x128xf32>
    %38 = arith.addf %35, %37 : vector<128x128xf32>
    %39 = arith.truncf %38 : vector<128x128xf32> to vector<128x128xbf16>
    %c0_14 = arith.constant 0 : index
    %c0_15 = arith.constant 0 : index
    %40 = vector.load %arg4[%c0_14, %c0_15] : memref<128x384xbf16, #tpu.memory_space<vmem>>, vector<128x384xbf16>
    %cst_16 = arith.constant dense<0.000000e+00> : vector<128x384xf32>
    %41 = tpu.matmul %39, %40, %cst_16 {dimension_numbers = #tpu.dot_dimension_numbers<[1], [0], [0], [1], [0, 0, 1, 1], [], []>} : vector<128x128xbf16>, vector<128x384xbf16>, vector<128x384xf32> -> vector<128x384xf32>
    %42 = arith.truncf %41 : vector<128x384xf32> to vector<128x384xbf16>
    %43 = tpu.iota {dimensions = array<i32: 0>} : vector<128x128xi32>
    %44 = tpu.iota {dimensions = array<i32: 1>} : vector<128x128xi32>
    %45 = arith.cmpi sge, %43, %44 : vector<128x128xi32>
    %46 = vector.extract_strided_slice %42 {offsets = [0, 0], sizes = [128, 32], strides = [1, 1]} : vector<128x384xbf16> to vector<128x32xbf16>
    %47 = vector.extract_strided_slice %42 {offsets = [0, 128], sizes = [128, 32], strides = [1, 1]} : vector<128x384xbf16> to vector<128x32xbf16>
    %48 = vector.extract_strided_slice %42 {offsets = [0, 256], sizes = [128, 32], strides = [1, 1]} : vector<128x384xbf16> to vector<128x32xbf16>
    %cst_17 = arith.constant dense<0.000000e+00> : vector<128x128xf32>
    %49 = tpu.matmul %46, %47, %cst_17 {dimension_numbers = #tpu.dot_dimension_numbers<[1], [1], [0], [0], [0, 0, 1, 0], [], []>} : vector<128x32xbf16>, vector<128x32xbf16>, vector<128x128xf32> -> vector<128x128xf32>
    %cst_18 = arith.constant -1.000000e+30 : f32
    %50 = vector.broadcast %cst_18 : f32 to vector<128x128xf32>
    %51 = arith.select %45, %49, %50 : vector<128x128xi1>, vector<128x128xf32>
    %cst_19 = arith.constant dense<0xFF800000> : vector<128xf32>
    %52 = vector.multi_reduction <maximumf>, %51, %cst_19 [1] : vector<128x128xf32> to vector<128xf32>
    %53 = vector.shape_cast %52 : vector<128xf32> to vector<128x1xf32>
    %54 = vector.broadcast %53 : vector<128x1xf32> to vector<128x128xf32>
    %55 = arith.subf %51, %54 : vector<128x128xf32>
    %56 = math.exp %55 : vector<128x128xf32>
    %cst_20 = arith.constant dense<0.000000e+00> : vector<128xf32>
    %57 = vector.multi_reduction <add>, %56, %cst_20 [1] : vector<128x128xf32> to vector<128xf32>
    %58 = vector.shape_cast %57 : vector<128xf32> to vector<128x1xf32>
    %59 = arith.truncf %56 : vector<128x128xf32> to vector<128x128xbf16>
    %cst_21 = arith.constant dense<0.000000e+00> : vector<128x32xf32>
    %60 = tpu.matmul %59, %48, %cst_21 {dimension_numbers = #tpu.dot_dimension_numbers<[1], [0], [0], [1], [0, 0, 1, 1], [], []>} : vector<128x128xbf16>, vector<128x32xbf16>, vector<128x32xf32> -> vector<128x32xf32>
    %61 = tpu.reciprocal %58 {approx = true} : vector<128x1xf32> -> vector<128x1xf32>
    %62 = vector.broadcast %61 : vector<128x1xf32> to vector<128x32xf32>
    %63 = arith.mulf %60, %62 : vector<128x32xf32>
    %64 = vector.extract_strided_slice %42 {offsets = [0, 32], sizes = [128, 32], strides = [1, 1]} : vector<128x384xbf16> to vector<128x32xbf16>
    %65 = vector.extract_strided_slice %42 {offsets = [0, 160], sizes = [128, 32], strides = [1, 1]} : vector<128x384xbf16> to vector<128x32xbf16>
    %66 = vector.extract_strided_slice %42 {offsets = [0, 288], sizes = [128, 32], strides = [1, 1]} : vector<128x384xbf16> to vector<128x32xbf16>
    %cst_22 = arith.constant dense<0.000000e+00> : vector<128x128xf32>
    %67 = tpu.matmul %64, %65, %cst_22 {dimension_numbers = #tpu.dot_dimension_numbers<[1], [1], [0], [0], [0, 0, 1, 0], [], []>} : vector<128x32xbf16>, vector<128x32xbf16>, vector<128x128xf32> -> vector<128x128xf32>
    %cst_23 = arith.constant -1.000000e+30 : f32
    %68 = vector.broadcast %cst_23 : f32 to vector<128x128xf32>
    %69 = arith.select %45, %67, %68 : vector<128x128xi1>, vector<128x128xf32>
    %cst_24 = arith.constant dense<0xFF800000> : vector<128xf32>
    %70 = vector.multi_reduction <maximumf>, %69, %cst_24 [1] : vector<128x128xf32> to vector<128xf32>
    %71 = vector.shape_cast %70 : vector<128xf32> to vector<128x1xf32>
    %72 = vector.broadcast %71 : vector<128x1xf32> to vector<128x128xf32>
    %73 = arith.subf %69, %72 : vector<128x128xf32>
    %74 = math.exp %73 : vector<128x128xf32>
    %cst_25 = arith.constant dense<0.000000e+00> : vector<128xf32>
    %75 = vector.multi_reduction <add>, %74, %cst_25 [1] : vector<128x128xf32> to vector<128xf32>
    %76 = vector.shape_cast %75 : vector<128xf32> to vector<128x1xf32>
    %77 = arith.truncf %74 : vector<128x128xf32> to vector<128x128xbf16>
    %cst_26 = arith.constant dense<0.000000e+00> : vector<128x32xf32>
    %78 = tpu.matmul %77, %66, %cst_26 {dimension_numbers = #tpu.dot_dimension_numbers<[1], [0], [0], [1], [0, 0, 1, 1], [], []>} : vector<128x128xbf16>, vector<128x32xbf16>, vector<128x32xf32> -> vector<128x32xf32>
    %79 = tpu.reciprocal %76 {approx = true} : vector<128x1xf32> -> vector<128x1xf32>
    %80 = vector.broadcast %79 : vector<128x1xf32> to vector<128x32xf32>
    %81 = arith.mulf %78, %80 : vector<128x32xf32>
    %82 = vector.extract_strided_slice %42 {offsets = [0, 64], sizes = [128, 32], strides = [1, 1]} : vector<128x384xbf16> to vector<128x32xbf16>
    %83 = vector.extract_strided_slice %42 {offsets = [0, 192], sizes = [128, 32], strides = [1, 1]} : vector<128x384xbf16> to vector<128x32xbf16>
    %84 = vector.extract_strided_slice %42 {offsets = [0, 320], sizes = [128, 32], strides = [1, 1]} : vector<128x384xbf16> to vector<128x32xbf16>
    %cst_27 = arith.constant dense<0.000000e+00> : vector<128x128xf32>
    %85 = tpu.matmul %82, %83, %cst_27 {dimension_numbers = #tpu.dot_dimension_numbers<[1], [1], [0], [0], [0, 0, 1, 0], [], []>} : vector<128x32xbf16>, vector<128x32xbf16>, vector<128x128xf32> -> vector<128x128xf32>
    %cst_28 = arith.constant -1.000000e+30 : f32
    %86 = vector.broadcast %cst_28 : f32 to vector<128x128xf32>
    %87 = arith.select %45, %85, %86 : vector<128x128xi1>, vector<128x128xf32>
    %cst_29 = arith.constant dense<0xFF800000> : vector<128xf32>
    %88 = vector.multi_reduction <maximumf>, %87, %cst_29 [1] : vector<128x128xf32> to vector<128xf32>
    %89 = vector.shape_cast %88 : vector<128xf32> to vector<128x1xf32>
    %90 = vector.broadcast %89 : vector<128x1xf32> to vector<128x128xf32>
    %91 = arith.subf %87, %90 : vector<128x128xf32>
    %92 = math.exp %91 : vector<128x128xf32>
    %cst_30 = arith.constant dense<0.000000e+00> : vector<128xf32>
    %93 = vector.multi_reduction <add>, %92, %cst_30 [1] : vector<128x128xf32> to vector<128xf32>
    %94 = vector.shape_cast %93 : vector<128xf32> to vector<128x1xf32>
    %95 = arith.truncf %92 : vector<128x128xf32> to vector<128x128xbf16>
    %cst_31 = arith.constant dense<0.000000e+00> : vector<128x32xf32>
    %96 = tpu.matmul %95, %84, %cst_31 {dimension_numbers = #tpu.dot_dimension_numbers<[1], [0], [0], [1], [0, 0, 1, 1], [], []>} : vector<128x128xbf16>, vector<128x32xbf16>, vector<128x32xf32> -> vector<128x32xf32>
    %97 = tpu.reciprocal %94 {approx = true} : vector<128x1xf32> -> vector<128x1xf32>
    %98 = vector.broadcast %97 : vector<128x1xf32> to vector<128x32xf32>
    %99 = arith.mulf %96, %98 : vector<128x32xf32>
    %100 = vector.extract_strided_slice %42 {offsets = [0, 96], sizes = [128, 32], strides = [1, 1]} : vector<128x384xbf16> to vector<128x32xbf16>
    %101 = vector.extract_strided_slice %42 {offsets = [0, 224], sizes = [128, 32], strides = [1, 1]} : vector<128x384xbf16> to vector<128x32xbf16>
    %102 = vector.extract_strided_slice %42 {offsets = [0, 352], sizes = [128, 32], strides = [1, 1]} : vector<128x384xbf16> to vector<128x32xbf16>
    %cst_32 = arith.constant dense<0.000000e+00> : vector<128x128xf32>
    %103 = tpu.matmul %100, %101, %cst_32 {dimension_numbers = #tpu.dot_dimension_numbers<[1], [1], [0], [0], [0, 0, 1, 0], [], []>} : vector<128x32xbf16>, vector<128x32xbf16>, vector<128x128xf32> -> vector<128x128xf32>
    %cst_33 = arith.constant -1.000000e+30 : f32
    %104 = vector.broadcast %cst_33 : f32 to vector<128x128xf32>
    %105 = arith.select %45, %103, %104 : vector<128x128xi1>, vector<128x128xf32>
    %cst_34 = arith.constant dense<0xFF800000> : vector<128xf32>
    %106 = vector.multi_reduction <maximumf>, %105, %cst_34 [1] : vector<128x128xf32> to vector<128xf32>
    %107 = vector.shape_cast %106 : vector<128xf32> to vector<128x1xf32>
    %108 = vector.broadcast %107 : vector<128x1xf32> to vector<128x128xf32>
    %109 = arith.subf %105, %108 : vector<128x128xf32>
    %110 = math.exp %109 : vector<128x128xf32>
    %cst_35 = arith.constant dense<0.000000e+00> : vector<128xf32>
    %111 = vector.multi_reduction <add>, %110, %cst_35 [1] : vector<128x128xf32> to vector<128xf32>
    %112 = vector.shape_cast %111 : vector<128xf32> to vector<128x1xf32>
    %113 = arith.truncf %110 : vector<128x128xf32> to vector<128x128xbf16>
    %cst_36 = arith.constant dense<0.000000e+00> : vector<128x32xf32>
    %114 = tpu.matmul %113, %102, %cst_36 {dimension_numbers = #tpu.dot_dimension_numbers<[1], [0], [0], [1], [0, 0, 1, 1], [], []>} : vector<128x128xbf16>, vector<128x32xbf16>, vector<128x32xf32> -> vector<128x32xf32>
    %115 = tpu.reciprocal %112 {approx = true} : vector<128x1xf32> -> vector<128x1xf32>
    %116 = vector.broadcast %115 : vector<128x1xf32> to vector<128x32xf32>
    %117 = arith.mulf %114, %116 : vector<128x32xf32>
    %118 = tpu.concatenate %63, %81, %99, %117 in 1 : vector<128x32xf32>, vector<128x32xf32>, vector<128x32xf32>, vector<128x32xf32> -> vector<128x128xf32>
    %119 = arith.truncf %118 : vector<128x128xf32> to vector<128x128xbf16>
    %c0_37 = arith.constant 0 : index
    %c0_38 = arith.constant 0 : index
    %120 = vector.load %arg5[%c0_37, %c0_38] : memref<128x128xbf16, #tpu.memory_space<vmem>>, vector<128x128xbf16>
    %cst_39 = arith.constant dense<0.000000e+00> : vector<128x128xf32>
    %121 = tpu.matmul %119, %120, %cst_39 {dimension_numbers = #tpu.dot_dimension_numbers<[1], [0], [0], [1], [0, 0, 1, 1], [], []>} : vector<128x128xbf16>, vector<128x128xbf16>, vector<128x128xf32> -> vector<128x128xf32>
    %122 = vector.shape_cast %6 : vector<128xf32> to vector<1x128xf32>
    %123 = vector.broadcast %122 : vector<1x128xf32> to vector<128x128xf32>
    %124 = arith.addf %121, %123 : vector<128x128xf32>
    %125 = arith.addf %0, %124 : vector<128x128xf32>
    %cst_40 = arith.constant dense<0.000000e+00> : vector<128xf32>
    %126 = vector.multi_reduction <add>, %125, %cst_40 [1] : vector<128x128xf32> to vector<128xf32>
    %127 = vector.shape_cast %126 : vector<128xf32> to vector<128x1xf32>
    %cst_41 = arith.constant 1.280000e+02 : f32
    %128 = vector.broadcast %cst_41 : f32 to vector<128x1xf32>
    %129 = arith.divf %127, %128 : vector<128x1xf32>
    %130 = vector.broadcast %129 : vector<128x1xf32> to vector<128x128xf32>
    %131 = arith.subf %125, %130 : vector<128x128xf32>
    %132 = arith.mulf %131, %131 : vector<128x128xf32>
    %cst_42 = arith.constant dense<0.000000e+00> : vector<128xf32>
    %133 = vector.multi_reduction <add>, %132, %cst_42 [1] : vector<128x128xf32> to vector<128xf32>
    %134 = vector.shape_cast %133 : vector<128xf32> to vector<128x1xf32>
    %cst_43 = arith.constant 1.280000e+02 : f32
    %135 = vector.broadcast %cst_43 : f32 to vector<128x1xf32>
    %136 = arith.divf %134, %135 : vector<128x1xf32>
    %137 = vector.broadcast %129 : vector<128x1xf32> to vector<128x128xf32>
    %138 = arith.subf %125, %137 : vector<128x128xf32>
    %cst_44 = arith.constant 9.99999974E-6 : f32
    %139 = vector.broadcast %cst_44 : f32 to vector<128x1xf32>
    %140 = arith.addf %136, %139 : vector<128x1xf32>
    %141 = math.rsqrt %140 : vector<128x1xf32>
    %142 = vector.broadcast %141 : vector<128x1xf32> to vector<128x128xf32>
    %143 = arith.mulf %138, %142 : vector<128x128xf32>
    %144 = vector.shape_cast %8 : vector<128xf32> to vector<1x128xf32>
    %145 = vector.broadcast %144 : vector<1x128xf32> to vector<128x128xf32>
    %146 = arith.mulf %143, %145 : vector<128x128xf32>
    %147 = vector.shape_cast %10 : vector<128xf32> to vector<1x128xf32>
    %148 = vector.broadcast %147 : vector<1x128xf32> to vector<128x128xf32>
    %149 = arith.addf %146, %148 : vector<128x128xf32>
    %150 = arith.truncf %149 : vector<128x128xf32> to vector<128x128xbf16>
    %c0_45 = arith.constant 0 : index
    %c0_46 = arith.constant 0 : index
    %151 = vector.load %arg6[%c0_45, %c0_46] : memref<128x512xbf16, #tpu.memory_space<vmem>>, vector<128x512xbf16>
    %cst_47 = arith.constant dense<0.000000e+00> : vector<128x512xf32>
    %152 = tpu.matmul %150, %151, %cst_47 {dimension_numbers = #tpu.dot_dimension_numbers<[1], [0], [0], [1], [0, 0, 1, 1], [], []>} : vector<128x128xbf16>, vector<128x512xbf16>, vector<128x512xf32> -> vector<128x512xf32>
    %153 = vector.shape_cast %14 : vector<512xf32> to vector<1x512xf32>
    %154 = vector.broadcast %153 : vector<1x512xf32> to vector<128x512xf32>
    %155 = arith.addf %152, %154 : vector<128x512xf32>
    %cst_48 = arith.constant 0.000000e+00 : f32
    %156 = vector.broadcast %cst_48 : f32 to vector<128x512xf32>
    %157 = arith.maximumf %155, %156 : vector<128x512xf32>
    %158 = arith.truncf %157 : vector<128x512xf32> to vector<128x512xbf16>
    %c0_49 = arith.constant 0 : index
    %c0_50 = arith.constant 0 : index
    %159 = vector.load %arg7[%c0_49, %c0_50] : memref<512x128xbf16, #tpu.memory_space<vmem>>, vector<512x128xbf16>
    %cst_51 = arith.constant dense<0.000000e+00> : vector<128x128xf32>
    %160 = tpu.matmul %158, %159, %cst_51 {dimension_numbers = #tpu.dot_dimension_numbers<[1], [0], [0], [1], [0, 0, 1, 1], [], []>} : vector<128x512xbf16>, vector<512x128xbf16>, vector<128x128xf32> -> vector<128x128xf32>
    %161 = vector.shape_cast %12 : vector<128xf32> to vector<1x128xf32>
    %162 = vector.broadcast %161 : vector<1x128xf32> to vector<128x128xf32>
    %163 = arith.addf %160, %162 : vector<128x128xf32>
    %164 = arith.addf %125, %163 : vector<128x128xf32>
    %c0_52 = arith.constant 0 : index
    %c0_53 = arith.constant 0 : index
    %165 = vector.load %arg8[%c0_52, %c0_53] : memref<128x128xf32, #tpu.memory_space<vmem>>, vector<128x128xf32>
    tpu.vector_store %arg8[%c0_52, %c0_53], %164 {strides = array<i32>} : memref<128x128xf32, #tpu.memory_space<vmem>>, vector<128x128xf32>,
    return
  }
  func.func @transform_0(%arg0: i32) -> (i32, i32) {
    %c0_i32 = arith.constant 0 : i32
    %c0_i32_0 = arith.constant 0 : i32
    return %arg0, %c0_i32 : i32, i32
  }
  func.func @transform_1(%arg0: i32) -> (i32, i32) {
    %c0_i32 = arith.constant 0 : i32
    %c0_i32_0 = arith.constant 0 : i32
    %c0_i32_1 = arith.constant 0 : i32
    return %c0_i32, %c0_i32_0 : i32, i32
  }
  func.func @transform_2(%arg0: i32) -> (i32, i32) {
    %c0_i32 = arith.constant 0 : i32
    %c0_i32_0 = arith.constant 0 : i32
    %c0_i32_1 = arith.constant 0 : i32
    return %c0_i32, %c0_i32_0 : i32, i32
  }
  func.func @transform_3(%arg0: i32) -> (i32, i32) {
    %c0_i32 = arith.constant 0 : i32
    %c0_i32_0 = arith.constant 0 : i32
    %c0_i32_1 = arith.constant 0 : i32
    return %c0_i32, %c0_i32_0 : i32, i32
  }
  func.func @transform_4(%arg0: i32) -> (i32, i32) {
    %c0_i32 = arith.constant 0 : i32
    %c0_i32_0 = arith.constant 0 : i32
    %c0_i32_1 = arith.constant 0 : i32
    return %c0_i32, %c0_i32_0 : i32, i32
  }
  func.func @transform_5(%arg0: i32) -> (i32, i32) {
    %c0_i32 = arith.constant 0 : i32
    %c0_i32_0 = arith.constant 0 : i32
    %c0_i32_1 = arith.constant 0 : i32
    return %c0_i32, %c0_i32_0 : i32, i32
  }
  func.func @transform_6(%arg0: i32) -> (i32, i32) {
    %c0_i32 = arith.constant 0 : i32
    %c0_i32_0 = arith.constant 0 : i32
    %c0_i32_1 = arith.constant 0 : i32
    return %c0_i32, %c0_i32_0 : i32, i32
  }
  func.func @transform_7(%arg0: i32) -> (i32, i32) {
    %c0_i32 = arith.constant 0 : i32
    %c0_i32_0 = arith.constant 0 : i32
    return %arg0, %c0_i32 : i32, i32
  }
}

</mosaic_0001>

<llo_original>
// kernel: tpu_custom_call.1
$region0: #{tpu_custom_call.1}
  #allocation0 [shape = 'u32[]', space=smem, size = 0x4, offset = 0x4, fixed_abs, tag = 'smem constant byte address 0x4 - core index']
  #allocation1 [shape = 'u32[144,128]{1,0:T(1,128)}', space=vmem, size = 0x12000, scoped, tag = 'internal scratch']
  %s0 = inlined_call_operand.hbm [shape: f32[256,128], index: 0, kind: input, shape index: {}]
  %s1 = inlined_call_operand.hbm [shape: f32[6,128], index: 1, kind: input, shape index: {}]
  %s2 = inlined_call_operand.vmem [shape: f32[1,512], index: 2, kind: input, shape index: {}]
  %s3 = inlined_call_operand.hbm [shape: bf16[128,384], index: 3, kind: input, shape index: {}]
  %s4 = inlined_call_operand.hbm [shape: bf16[128,128], index: 4, kind: input, shape index: {}]
  %s5 = inlined_call_operand.hbm [shape: bf16[128,512], index: 5, kind: input, shape index: {}]
  %s6 = inlined_call_operand.hbm [shape: bf16[512,128], index: 6, kind: input, shape index: {}]
  %s7 = inlined_call_operand.hbm [shape: f32[256,128], index: 7, kind: output, shape index: {}]
  %s8 = sld [smem:[#allocation0]]
  $region85: #{tpu_custom_call.1} parent=0
    _
  %s10 = ssub.s32 1, %s8
  %s11 = scalar_select 0, %s10, %s8
  $region1: #{tpu_custom_call.1} parent=0
    #allocation2 [shape = 'u8[131072]{0}', space=vmem, size = 0x20000, scoped, tag = 'input window, operand 0']
    #allocation3 [shape = 's32[2]{0}', space=sflag, size = 0x8, scoped, tag = 'scoped memory for tpu_custom_call.1']
    #allocation4 [shape = 's32[2]{0}', space=sflag, size = 0x8, scoped, tag = 'scoped memory for tpu_custom_call.1']
    #allocation5 [shape = 'u8[4096]{0}', space=vmem, size = 0x1000, scoped, tag = 'input window, operand 1, single buffered']
    #allocation6 [shape = 's32[1]{0}', space=sflag, size = 0x4, scoped, tag = 'scoped memory for tpu_custom_call.1']
    #allocation7 [shape = 'u8[98304]{0}', space=vmem, size = 0x18000, scoped, tag = 'input window, operand 3, single buffered']
    #allocation8 [shape = 'u8[32768]{0}', space=vmem, size = 0x8000, scoped, tag = 'input window, operand 4, single buffered']
    #allocation9 [shape = 's32[1]{0}', space=sflag, size = 0x4, scoped, tag = 'scoped memory for tpu_custom_call.1']
    #allocation10 [shape = 'u8[131072]{0}', space=vmem, size = 0x20000, scoped, tag = 'input window, operand 5, single buffered']
    #allocation11 [shape = 'u8[131072]{0}', space=vmem, size = 0x20000, scoped, tag = 'input window, operand 6, single buffered']
    #allocation12 [shape = 's32[1]{0}', space=sflag, size = 0x4, scoped, tag = 'scoped memory for tpu_custom_call.1']
    #allocation13 [shape = 'u8[131072]{0}', space=vmem, size = 0x20000, scoped, tag = 'output window, operand 0']
    %12 = vsyncpa [#allocation3], 0
    %s13 = scalar_lea.sflag [#allocation3], 1
    %14 = vsyncpa %s13, 0
    %15 = vsyncpa [#allocation6], 0
    %16 = vsyncpa [#allocation9], 0
    %17 = vsyncpa [#allocation12], 0
    %18 = vsyncpa [#allocation4], 0
    %s19 = scalar_lea.sflag [#allocation4], 1
    %20 = vsyncpa %s19, 0
    loop: start=0, step=1, limit=4
    $region2: #{tpu_custom_call.1} parent=1 // loop_pre_header
      _
    $region3: #{tpu_custom_call.1} parent=1 // loop_header
      %s22 = sphi 0, %s26
      %p23 = scmp.ge.s32.totalorder %s22, 4
      %s32 = sphi 0, %s34
      %s35 = sphi 0, %s32
      %s36 = sphi 0, %s35
      %s52 = sphi 0, %s36
      %s56 = sphi 0, %s56
      %s58 = sphi 0, %s56
      %s59 = sphi 0, %s58
      %s73 = sphi 0, %s59
      %s77 = sphi 0, %s77
      %s79 = sphi 0, %s77
      %s80 = sphi 0, %s79
      %s94 = sphi 0, %s80
      %s98 = sphi 0, %s98
      %s100 = sphi 0, %s98
      %s101 = sphi 0, %s100
      %s115 = sphi 0, %s101
      %s119 = sphi 0, %s119
      %s121 = sphi 0, %s119
      %s122 = sphi 0, %s121
      %s136 = sphi 0, %s122
      %s140 = sphi 0, %s140
      %s142 = sphi 0, %s140
      %s143 = sphi 0, %s142
      %s157 = sphi 0, %s143
      %s161 = sphi 0, %s161
      %s163 = sphi 0, %s161
      %s164 = sphi 0, %s163
      %s178 = sphi 0, %s164
      %s184 = sphi 0, %s186
      %s187 = sphi 0, %s184
      %s188 = sphi 0, %s187
      %s204 = sphi 0, %s188
    $region4: #{tpu_custom_call.1} parent=1 // loop_header_branch
      %25 = sbr.rel (%p23) target = $region8
    $region5: #{tpu_custom_call.1} parent=1 // loop_body
      %s27 = ssub.s32 %s22, 1
      %s28 = ssub.s32 %s22, 2
      %s29 = sadd.s32 %s22, 1
      %s30 = ssub.s32 %s22, %s29
      %p31 = scmp.eq.s32.totalorder %s30, 0
      %s33 = sadd.s32 %s32, 1
      %s34 = scalar_select %p31, %s32, %s33
      %p37 = pneg %p31
      %p38 = scmp.eq.s32.totalorder %s22, 1
      %p39 = por %p37, %p38
      %p40 = scmp.ne.s32.totalorder %s32, %s35
      %p41 = scmp.eq.s32.totalorder %s22, 0
      %p42 = por %p40, %p41
      %p43 = scmp.ne.s32.totalorder %s32, %s35
      %p44 = scmp.eq.s32.totalorder %s27, 1
      %p45 = por %p43, %p44
      %p46 = scmp.ne.s32.totalorder %s35, %s36
      %p47 = scmp.eq.s32.totalorder %s27, 0
      %p48 = por %p46, %p47
      %p49 = scmp.ne.s32.totalorder %s35, %s36
      %p50 = scmp.eq.s32.totalorder %s28, 1
      %p51 = por %p49, %p50
      %p53 = scmp.ne.s32.totalorder %s36, %s52
      %p54 = scmp.eq.s32.totalorder %s28, 0
      %p55 = por %p53, %p54
      %s57 = sadd.s32 %s56, 1
      %p60 = scmp.eq.s32.totalorder %s22, 1
      %p61 = scmp.ne.s32.totalorder %s56, %s58
      %p62 = scmp.eq.s32.totalorder %s22, 0
      %p63 = por %p61, %p62
      %p64 = scmp.ne.s32.totalorder %s56, %s58
      %p65 = scmp.eq.s32.totalorder %s27, 1
      %p66 = por %p64, %p65
      %p67 = scmp.ne.s32.totalorder %s58, %s59
      %p68 = scmp.eq.s32.totalorder %s27, 0
      %p69 = por %p67, %p68
      %p70 = scmp.ne.s32.totalorder %s58, %s59
      %p71 = scmp.eq.s32.totalorder %s28, 1
      %p72 = por %p70, %p71
      %p74 = scmp.ne.s32.totalorder %s59, %s73
      %p75 = scmp.eq.s32.totalorder %s28, 0
      %p76 = por %p74, %p75
      %s78 = sadd.s32 %s77, 1
      %p81 = scmp.eq.s32.totalorder %s22, 1
      %p82 = scmp.ne.s32.totalorder %s77, %s79
      %p83 = scmp.eq.s32.totalorder %s22, 0
      %p84 = por %p82, %p83
      %p85 = scmp.ne.s32.totalorder %s77, %s79
      %p86 = scmp.eq.s32.totalorder %s27, 1
      %p87 = por %p85, %p86
      %p88 = scmp.ne.s32.totalorder %s79, %s80
      %p89 = scmp.eq.s32.totalorder %s27, 0
      %p90 = por %p88, %p89
      %p91 = scmp.ne.s32.totalorder %s79, %s80
      %p92 = scmp.eq.s32.totalorder %s28, 1
      %p93 = por %p91, %p92
      %p95 = scmp.ne.s32.totalorder %s80, %s94
      %p96 = scmp.eq.s32.totalorder %s28, 0
      %p97 = por %p95, %p96
      %s99 = sadd.s32 %s98, 1
      %p102 = scmp.eq.s32.totalorder %s22, 1
      %p103 = scmp.ne.s32.totalorder %s98, %s100
      %p104 = scmp.eq.s32.totalorder %s22, 0
      %p105 = por %p103, %p104
      %p106 = scmp.ne.s32.totalorder %s98, %s100
      %p107 = scmp.eq.s32.totalorder %s27, 1
      %p108 = por %p106, %p107
      %p109 = scmp.ne.s32.totalorder %s100, %s101
      %p110 = scmp.eq.s32.totalorder %s27, 0
      %p111 = por %p109, %p110
      %p112 = scmp.ne.s32.totalorder %s100, %s101
      %p113 = scmp.eq.s32.totalorder %s28, 1
      %p114 = por %p112, %p113
      %p116 = scmp.ne.s32.totalorder %s101, %s115
      %p117 = scmp.eq.s32.totalorder %s28, 0
      %p118 = por %p116, %p117
      %s120 = sadd.s32 %s119, 1
      %p123 = scmp.eq.s32.totalorder %s22, 1
      %p124 = scmp.ne.s32.totalorder %s119, %s121
      %p125 = scmp.eq.s32.totalorder %s22, 0
      %p126 = por %p124, %p125
      %p127 = scmp.ne.s32.totalorder %s119, %s121
      %p128 = scmp.eq.s32.totalorder %s27, 1
      %p129 = por %p127, %p128
      %p130 = scmp.ne.s32.totalorder %s121, %s122
      %p131 = scmp.eq.s32.totalorder %s27, 0
      %p132 = por %p130, %p131
      %p133 = scmp.ne.s32.totalorder %s121, %s122
      %p134 = scmp.eq.s32.totalorder %s28, 1
      %p135 = por %p133, %p134
      %p137 = scmp.ne.s32.totalorder %s122, %s136
      %p138 = scmp.eq.s32.totalorder %s28, 0
      %p139 = por %p137, %p138
      %s141 = sadd.s32 %s140, 1
      %p144 = scmp.eq.s32.totalorder %s22, 1
      %p145 = scmp.ne.s32.totalorder %s140, %s142
      %p146 = scmp.eq.s32.totalorder %s22, 0
      %p147 = por %p145, %p146
      %p148 = scmp.ne.s32.totalorder %s140, %s142
      %p149 = scmp.eq.s32.totalorder %s27, 1
      %p150 = por %p148, %p149
      %p151 = scmp.ne.s32.totalorder %s142, %s143
      %p152 = scmp.eq.s32.totalorder %s27, 0
      %p153 = por %p151, %p152
      %p154 = scmp.ne.s32.totalorder %s142, %s143
      %p155 = scmp.eq.s32.totalorder %s28, 1
      %p156 = por %p154, %p155
      %p158 = scmp.ne.s32.totalorder %s143, %s157
      %p159 = scmp.eq.s32.totalorder %s28, 0
      %p160 = por %p158, %p159
      %s162 = sadd.s32 %s161, 1
      %p165 = scmp.eq.s32.totalorder %s22, 1
      %p166 = scmp.ne.s32.totalorder %s161, %s163
      %p167 = scmp.eq.s32.totalorder %s22, 0
      %p168 = por %p166, %p167
      %p169 = scmp.ne.s32.totalorder %s161, %s163
      %p170 = scmp.eq.s32.totalorder %s27, 1
      %p171 = por %p169, %p170
      %p172 = scmp.ne.s32.totalorder %s163, %s164
      %p173 = scmp.eq.s32.totalorder %s27, 0
      %p174 = por %p172, %p173
      %p175 = scmp.ne.s32.totalorder %s163, %s164
      %p176 = scmp.eq.s32.totalorder %s28, 1
      %p177 = por %p175, %p176
      %p179 = scmp.ne.s32.totalorder %s164, %s178
      %p180 = scmp.eq.s32.totalorder %s28, 0
      %p181 = por %p179, %p180
      %s182 = ssub.s32 %s22, %s29
      %p183 = scmp.eq.s32.totalorder %s182, 0
      %s185 = sadd.s32 %s184, 1
      %s186 = scalar_select %p183, %s184, %s185
      %p189 = pneg %p183
      %p190 = scmp.eq.s32.totalorder %s22, 1
      %p191 = por %p189, %p190
      %p192 = scmp.ne.s32.totalorder %s184, %s187
      %p193 = scmp.eq.s32.totalorder %s22, 0
      %p194 = por %p192, %p193
      %p195 = scmp.ne.s32.totalorder %s184, %s187
      %p196 = scmp.eq.s32.totalorder %s27, 1
      %p197 = por %p195, %p196
      %p198 = scmp.ne.s32.totalorder %s187, %s188
      %p199 = scmp.eq.s32.totalorder %s27, 0
      %p200 = por %p198, %p199
      %p201 = scmp.ne.s32.totalorder %s187, %s188
      %p202 = scmp.eq.s32.totalorder %s28, 1
      %p203 = por %p201, %p202
      %p205 = scmp.ne.s32.totalorder %s188, %s204
      %p206 = scmp.eq.s32.totalorder %s28, 0
      %p207 = por %p205, %p206
      %p208 = scmp.le.s32.totalorder 1, %s22
      %p209 = scmp.lt.s32.totalorder %s22, 3
      %p210 = pnand %p208, %p209
      %p211 = pneg %p210
      // Predicated region
      $region9: #{tpu_custom_call.1} parent=5 // pred_check
        _
      $region10: #{tpu_custom_call.1} parent=5 // pred_check_branch
        %213 = sbr.rel (%p210) target = $region12
      $region11: #{tpu_custom_call.1} parent=5 // pred_region
        %s214 = ssub.s32 %s22, 1
        // Predicated region
        $region13: #{tpu_custom_call.1} parent=11 // pred_check
          %p215 = pneg %p69
        $region14: #{tpu_custom_call.1} parent=11 // pred_check_branch
          %217 = sbr.rel (%p215) target = $region16
        $region15: #{tpu_custom_call.1} parent=11 // pred_region
          %s219 = ssub.s32 128, 128
          %220 = vsyncadd [#allocation6], %s219
          %s222 = sshll.u32 [#allocation5], 4
          %s223 = int_to_ptr.vmem [resolvable:$true] %s222
          %225 = dma.hbm_to_vmem [thread:$0]  %s1, 128, %s223, [#allocation6]
        $region16: #{tpu_custom_call.1} parent=11 // pred_fallthru
          _
        // Predicated region
        $region17: #{tpu_custom_call.1} parent=11 // pred_check
          %p226 = pneg %p90
        $region18: #{tpu_custom_call.1} parent=11 // pred_check_branch
          %228 = sbr.rel (%p226) target = $region20
        $region19: #{tpu_custom_call.1} parent=11 // pred_region
          _
        $region20: #{tpu_custom_call.1} parent=11 // pred_fallthru
          _
        // Predicated region
        $region21: #{tpu_custom_call.1} parent=11 // pred_check
          %p229 = pneg %p111
        $region22: #{tpu_custom_call.1} parent=11 // pred_check_branch
          %231 = sbr.rel (%p229) target = $region24
        $region23: #{tpu_custom_call.1} parent=11 // pred_region
          %s233 = ssub.s32 3072, 3072
          %234 = vsyncadd [#allocation6], %s233
          %s235 = sshll.u32 [#allocation7], 4
          %s236 = int_to_ptr.vmem [resolvable:$true] %s235
          %241 = dma.hbm_to_vmem [thread:$0]  %s3, 3072, %s236, [#allocation6], 192, 192, 12
        $region24: #{tpu_custom_call.1} parent=11 // pred_fallthru
          _
        // Predicated region
        $region25: #{tpu_custom_call.1} parent=11 // pred_check
          %p242 = pneg %p132
        $region26: #{tpu_custom_call.1} parent=11 // pred_check_branch
          %244 = sbr.rel (%p242) target = $region28
        $region27: #{tpu_custom_call.1} parent=11 // pred_region
          %s246 = ssub.s32 1024, 1024
          %247 = vsyncadd [#allocation9], %s246
          %s248 = sshll.u32 [#allocation8], 4
          %s249 = int_to_ptr.vmem [resolvable:$true] %s248
          %254 = dma.hbm_to_vmem [thread:$0]  %s4, 1024, %s249, [#allocation9], 64, 64, 4
        $region28: #{tpu_custom_call.1} parent=11 // pred_fallthru
          _
        // Predicated region
        $region29: #{tpu_custom_call.1} parent=11 // pred_check
          %p255 = pneg %p153
        $region30: #{tpu_custom_call.1} parent=11 // pred_check_branch
          %257 = sbr.rel (%p255) target = $region32
        $region31: #{tpu_custom_call.1} parent=11 // pred_region
          %s259 = ssub.s32 4096, 4096
          %260 = vsyncadd [#allocation9], %s259
          %s261 = sshll.u32 [#allocation10], 4
          %s262 = int_to_ptr.vmem [resolvable:$true] %s261
          %267 = dma.hbm_to_vmem [thread:$0]  %s5, 4096, %s262, [#allocation9], 256, 256, 16
        $region32: #{tpu_custom_call.1} parent=11 // pred_fallthru
          _
        // Predicated region
        $region33: #{tpu_custom_call.1} parent=11 // pred_check
          %p268 = pneg %p174
        $region34: #{tpu_custom_call.1} parent=11 // pred_check_branch
          %270 = sbr.rel (%p268) target = $region36
        $region35: #{tpu_custom_call.1} parent=11 // pred_region
          %s272 = ssub.s32 4096, 4096
          %273 = vsyncadd [#allocation12], %s272
          %s274 = sshll.u32 [#allocation11], 4
          %s275 = int_to_ptr.vmem [resolvable:$true] %s274
          %280 = dma.hbm_to_vmem [thread:$0]  %s6, 4096, %s275, [#allocation12], 64, 64, 4
        $region36: #{tpu_custom_call.1} parent=11 // pred_fallthru
          _
      $region12: #{tpu_custom_call.1} parent=5 // pred_fallthru
        _
      %p281 = scmp.lt.s32.totalorder %s22, 2
      // Predicated region
      $region37: #{tpu_custom_call.1} parent=5 // pred_check
        %p282 = pneg %p281
      $region38: #{tpu_custom_call.1} parent=5 // pred_check_branch
        %284 = sbr.rel (%p282) target = $region40
      $region39: #{tpu_custom_call.1} parent=5 // pred_region
        // Predicated region
        $region41: #{tpu_custom_call.1} parent=39 // pred_check
          %p285 = pneg %p42
        $region42: #{tpu_custom_call.1} parent=39 // pred_check_branch
          %287 = sbr.rel (%p285) target = $region44
        $region43: #{tpu_custom_call.1} parent=39 // pred_region
          %s288 = sand.u32 %s32, 1
          %s289 = scalar_lea.sflag [#allocation3], %s288
          %s290 = sand.u32 %s32, 1
          %s291 = smul.addr %s290, 128
          %s292 = scalar_lea.vmem [#allocation2], %s291
          %s293 = smul.u32 16, %s22
          %s295 = ssub.s32 2048, 2048
          %296 = vsyncadd %s289, %s295
          %s297 = smul.addr %s293, 128
          %s298 = scalar_lea.hbm %s0, %s297
          %s299 = sshll.u32 %s292, 4
          %s300 = int_to_ptr.vmem [resolvable:$true] %s299
          %305 = dma.hbm_to_vmem [thread:$0]  %s298, 2048, %s300, %s289, 128, 128, 8
        $region44: #{tpu_custom_call.1} parent=39 // pred_fallthru
          _
      $region40: #{tpu_custom_call.1} parent=5 // pred_fallthru
        _
      %p306 = scmp.le.s32.totalorder 1, %s22
      %p307 = scmp.lt.s32.totalorder %s22, 3
      %p308 = pnand %p306, %p307
      %p309 = pneg %p308
      // Predicated region
      $region45: #{tpu_custom_call.1} parent=5 // pred_check
        _
      $region46: #{tpu_custom_call.1} parent=5 // pred_check_branch
        %311 = sbr.rel (%p308) target = $region48
      $region47: #{tpu_custom_call.1} parent=5 // pred_region
        %s312 = ssub.s32 %s22, 1
        %s313 = sand.u32 %s35, 1
        %s314 = scalar_lea.sflag [#allocation3], %s313
        %s315 = sand.u32 %s35, 1
        %s316 = smul.addr %s315, 128
        %s317 = scalar_lea.vmem [#allocation2], %s316
        // Predicated region
        $region49: #{tpu_custom_call.1} parent=47 // pred_check
          %p318 = pneg %p48
        $region50: #{tpu_custom_call.1} parent=47 // pred_check_branch
          %320 = sbr.rel (%p318) target = $region52
        $region51: #{tpu_custom_call.1} parent=47 // pred_region
          %321 = dma.done %s314, 2048
        $region52: #{tpu_custom_call.1} parent=47 // pred_fallthru
          _
        // Predicated region
        $region53: #{tpu_custom_call.1} parent=47 // pred_check
          %p322 = pneg %p69
        $region54: #{tpu_custom_call.1} parent=47 // pred_check_branch
          %324 = sbr.rel (%p322) target = $region56
        $region55: #{tpu_custom_call.1} parent=47 // pred_region
          %325 = dma.done [#allocation6], 128
        $region56: #{tpu_custom_call.1} parent=47 // pred_fallthru
          _
        // Predicated region
        $region57: #{tpu_custom_call.1} parent=47 // pred_check
          %p326 = pneg %p111
        $region58: #{tpu_custom_call.1} parent=47 // pred_check_branch
          %328 = sbr.rel (%p326) target = $region60
        $region59: #{tpu_custom_call.1} parent=47 // pred_region
          %329 = dma.done [#allocation6], 3072
        $region60: #{tpu_custom_call.1} parent=47 // pred_fallthru
          _
        // Predicated region
        $region61: #{tpu_custom_call.1} parent=47 // pred_check
          %p330 = pneg %p132
        $region62: #{tpu_custom_call.1} parent=47 // pred_check_branch
          %332 = sbr.rel (%p330) target = $region64
        $region63: #{tpu_custom_call.1} parent=47 // pred_region
          %333 = dma.done [#allocation9], 1024
        $region64: #{tpu_custom_call.1} parent=47 // pred_fallthru
          _
        // Predicated region
        $region65: #{tpu_custom_call.1} parent=47 // pred_check
          %p334 = pneg %p153
        $region66: #{tpu_custom_call.1} parent=47 // pred_check_branch
          %336 = sbr.rel (%p334) target = $region68
        $region67: #{tpu_custom_call.1} parent=47 // pred_region
          %337 = dma.done [#allocation9], 4096
        $region68: #{tpu_custom_call.1} parent=47 // pred_fallthru
          _
        // Predicated region
        $region69: #{tpu_custom_call.1} parent=47 // pred_check
          %p338 = pneg %p174
        $region70: #{tpu_custom_call.1} parent=47 // pred_check_branch
          %340 = sbr.rel (%p338) target = $region72
        $region71: #{tpu_custom_call.1} parent=47 // pred_region
          %341 = dma.done [#allocation12], 4096
        $region72: #{tpu_custom_call.1} parent=47 // pred_fallthru
          _
        %s342 = sand.u32 %s35, 1
        %s343 = scalar_lea.sflag [#allocation3], %s342
        %s344 = sand.u32 %s35, 1
        %s345 = smul.addr %s344, 128
        %s346 = scalar_lea.vmem [#allocation2], %s345
        %p347 = pneg %p48
        %p348 = pneg %p45
        %p349 = pneg %p69
        %p350 = pneg %p66
        %p351 = pneg %p90
        %p352 = pneg %p87
        %p353 = pneg %p111
        %p354 = pneg %p108
        %p355 = pneg %p132
        %p356 = pneg %p129
        %p357 = pneg %p153
        %p358 = pneg %p150
        %p359 = pneg %p174
        %p360 = pneg %p171
        %p361 = pneg %p200
        %p362 = pneg %p197
        %s363 = sand.u32 %s187, 1
        %s364 = scalar_lea.sflag [#allocation4], %s363
        %s365 = sand.u32 %s187, 1
        %s366 = smul.addr %s365, 128
        %s367 = scalar_lea.vmem [#allocation13], %s366
        %s368 = smul.u32 16, %s27
        %s369 = smul.u32 16, %s27
        %v371 = vld [vmem:[%s317] sm:$0xff]
        %v372 = vld [vmem:[%s317 + $0x8] sm:$0xff]
        %v373 = vld [vmem:[%s317 + $0x10] sm:$0xff]
        %v374 = vld [vmem:[%s317 + $0x18] sm:$0xff]
        %v375 = vld [vmem:[%s317 + $0x20] sm:$0xff]
        %v376 = vld [vmem:[%s317 + $0x28] sm:$0xff]
        %v377 = vld [vmem:[%s317 + $0x30] sm:$0xff]
        %v378 = vld [vmem:[%s317 + $0x38] sm:$0xff]
        %v379 = vld [vmem:[%s317 + $0x40] sm:$0xff]
        %v380 = vld [vmem:[%s317 + $0x48] sm:$0xff]
        %v381 = vld [vmem:[%s317 + $0x50] sm:$0xff]
        %v382 = vld [vmem:[%s317 + $0x58] sm:$0xff]
        %v383 = vld [vmem:[%s317 + $0x60] sm:$0xff]
        %v384 = vld [vmem:[%s317 + $0x68] sm:$0xff]
        %v385 = vld [vmem:[%s317 + $0x70] sm:$0xff]
        %v386 = vld [vmem:[%s317 + $0x78] sm:$0xff]
        %v387 = vld [vmem:[#allocation5] sm:$0x1]
        %v388 = vld [vmem:[#allocation5 + $0x1] sm:$0x1]
        %v389 = vld [vmem:[#allocation5 + $0x2] sm:$0x1]
        %v390 = vld [vmem:[#allocation5 + $0x3] sm:$0x1]
        %v391 = vld [vmem:[#allocation5 + $0x4] sm:$0x1]
        %v392 = vld [vmem:[#allocation5 + $0x5] sm:$0x1]
        %v393 = vld [vmem:[%s2] sm:$0xf]
        %394 = vadd.xlane.f32.xlu0 %v371
        %v395 = vpop.xlane.xlu0 %394
        %396 = vadd.xlane.f32.xlu0 %v372
        %v397 = vpop.xlane.xlu0 %396
        %398 = vadd.xlane.f32.xlu0 %v373
        %v399 = vpop.xlane.xlu0 %398
        %400 = vadd.xlane.f32.xlu0 %v374
        %v401 = vpop.xlane.xlu0 %400
        %402 = vadd.xlane.f32.xlu0 %v375
        %v403 = vpop.xlane.xlu0 %402
        %404 = vadd.xlane.f32.xlu0 %v376
        %v405 = vpop.xlane.xlu0 %404
        %406 = vadd.xlane.f32.xlu0 %v377
        %v407 = vpop.xlane.xlu0 %406
        %408 = vadd.xlane.f32.xlu0 %v378
        %v409 = vpop.xlane.xlu0 %408
        %410 = vadd.xlane.f32.xlu0 %v379
        %v411 = vpop.xlane.xlu0 %410
        %412 = vadd.xlane.f32.xlu0 %v380
        %v413 = vpop.xlane.xlu0 %412
        %414 = vadd.xlane.f32.xlu0 %v381
        %v415 = vpop.xlane.xlu0 %414
        %416 = vadd.xlane.f32.xlu0 %v382
        %v417 = vpop.xlane.xlu0 %416
        %418 = vadd.xlane.f32.xlu0 %v383
        %v419 = vpop.xlane.xlu0 %418
        %420 = vadd.xlane.f32.xlu0 %v384
        %v421 = vpop.xlane.xlu0 %420
        %422 = vadd.xlane.f32.xlu0 %v385
        %v423 = vpop.xlane.xlu0 %422
        %424 = vadd.xlane.f32.xlu0 %v386
        %v425 = vpop.xlane.xlu0 %424
        %v426 = vrcp.pop 128.0
        %v427 = vmul.f32 %v395, %v426
        %v428 = vmul.f32 %v397, %v426
        %v429 = vmul.f32 %v399, %v426
        %v430 = vmul.f32 %v401, %v426
        %v431 = vmul.f32 %v403, %v426
        %v432 = vmul.f32 %v405, %v426
        %v433 = vmul.f32 %v407, %v426
        %v434 = vmul.f32 %v409, %v426
        %v435 = vmul.f32 %v411, %v426
        %v436 = vmul.f32 %v413, %v426
        %v437 = vmul.f32 %v415, %v426
        %v438 = vmul.f32 %v417, %v426
        %v439 = vmul.f32 %v419, %v426
        %v440 = vmul.f32 %v421, %v426
        %v441 = vmul.f32 %v423, %v426
        %v442 = vmul.f32 %v425, %v426
        %v443 = vsub.f32 %v371, %v427
        %v444 = vsub.f32 %v372, %v428
        %v445 = vsub.f32 %v373, %v429
        %v446 = vsub.f32 %v374, %v430
        %v447 = vsub.f32 %v375, %v431
        %v448 = vsub.f32 %v376, %v432
        %v449 = vsub.f32 %v377, %v433
        %v450 = vsub.f32 %v378, %v434
        %v451 = vsub.f32 %v379, %v435
        %v452 = vsub.f32 %v380, %v436
        %v453 = vsub.f32 %v381, %v437
        %v454 = vsub.f32 %v382, %v438
        %v455 = vsub.f32 %v383, %v439
        %v456 = vsub.f32 %v384, %v440
        %v457 = vsub.f32 %v385, %v441
        %v458 = vsub.f32 %v386, %v442
        %v459 = vmul.f32 %v443, %v443
        %v460 = vmul.f32 %v444, %v444
        %v461 = vmul.f32 %v445, %v445
        %v462 = vmul.f32 %v446, %v446
        %v463 = vmul.f32 %v447, %v447
        %v464 = vmul.f32 %v448, %v448
        %v465 = vmul.f32 %v449, %v449
        %v466 = vmul.f32 %v450, %v450
        %v467 = vmul.f32 %v451, %v451
        %v468 = vmul.f32 %v452, %v452
        %v469 = vmul.f32 %v453, %v453
        %v470 = vmul.f32 %v454, %v454
        %v471 = vmul.f32 %v455, %v455
        %v472 = vmul.f32 %v456, %v456
        %v473 = vmul.f32 %v457, %v457
        %v474 = vmul.f32 %v458, %v458
        %475 = vadd.xlane.f32.xlu0 %v459
        %v476 = vpop.xlane.xlu0 %475
        %477 = vadd.xlane.f32.xlu0 %v460
        %v478 = vpop.xlane.xlu0 %477
        %479 = vadd.xlane.f32.xlu0 %v461
        %v480 = vpop.xlane.xlu0 %479
        %481 = vadd.xlane.f32.xlu0 %v462
        %v482 = vpop.xlane.xlu0 %481
        %483 = vadd.xlane.f32.xlu0 %v463
        %v484 = vpop.xlane.xlu0 %483
        %485 = vadd.xlane.f32.xlu0 %v464
        %v486 = vpop.xlane.xlu0 %485
        %487 = vadd.xlane.f32.xlu0 %v465
        %v488 = vpop.xlane.xlu0 %487
        %489 = vadd.xlane.f32.xlu0 %v466
        %v490 = vpop.xlane.xlu0 %489
        %491 = vadd.xlane.f32.xlu0 %v467
        %v492 = vpop.xlane.xlu0 %491
        %493 = vadd.xlane.f32.xlu0 %v468
        %v494 = vpop.xlane.xlu0 %493
        %495 = vadd.xlane.f32.xlu0 %v469
        %v496 = vpop.xlane.xlu0 %495
        %497 = vadd.xlane.f32.xlu0 %v470
        %v498 = vpop.xlane.xlu0 %497
        %499 = vadd.xlane.f32.xlu0 %v471
        %v500 = vpop.xlane.xlu0 %499
        %501 = vadd.xlane.f32.xlu0 %v472
        %v502 = vpop.xlane.xlu0 %501
        %503 = vadd.xlane.f32.xlu0 %v473
        %v504 = vpop.xlane.xlu0 %503
        %505 = vadd.xlane.f32.xlu0 %v474
        %v506 = vpop.xlane.xlu0 %505
        %v507 = vmul.f32 %v476, %v426
        %v508 = vmul.f32 %v478, %v426
        %v509 = vmul.f32 %v480, %v426
        %v510 = vmul.f32 %v482, %v426
        %v511 = vmul.f32 %v484, %v426
        %v512 = vmul.f32 %v486, %v426
        %v513 = vmul.f32 %v488, %v426
        %v514 = vmul.f32 %v490, %v426
        %v515 = vmul.f32 %v492, %v426
        %v516 = vmul.f32 %v494, %v426
        %v517 = vmul.f32 %v496, %v426
        %v518 = vmul.f32 %v498, %v426
        %v519 = vmul.f32 %v500, %v426
        %v520 = vmul.f32 %v502, %v426
        %v521 = vmul.f32 %v504, %v426
        %v522 = vmul.f32 %v506, %v426
        %v523 = vadd.f32 %v507, 1e-05
        %v524 = vadd.f32 %v508, 1e-05
        %v525 = vadd.f32 %v509, 1e-05
        %v526 = vadd.f32 %v510, 1e-05
        %v527 = vadd.f32 %v511, 1e-05
        %v528 = vadd.f32 %v512, 1e-05
        %v529 = vadd.f32 %v513, 1e-05
        %v530 = vadd.f32 %v514, 1e-05
        %v531 = vadd.f32 %v515, 1e-05
        %v532 = vadd.f32 %v516, 1e-05
        %v533 = vadd.f32 %v517, 1e-05
        %v534 = vadd.f32 %v518, 1e-05
        %v535 = vadd.f32 %v519, 1e-05
        %v536 = vadd.f32 %v520, 1e-05
        %v537 = vadd.f32 %v521, 1e-05
        %v538 = vadd.f32 %v522, 1e-05
        %v539 = vrsqrt.pop %v523
        %v540 = vrsqrt.pop %v524
        %v541 = vrsqrt.pop %v525
        %v542 = vrsqrt.pop %v526
        %v543 = vrsqrt.pop %v527
        %v544 = vrsqrt.pop %v528
        %v545 = vrsqrt.pop %v529
        %v546 = vrsqrt.pop %v530
        %v547 = vrsqrt.pop %v531
        %v548 = vrsqrt.pop %v532
        %v549 = vrsqrt.pop %v533
        %v550 = vrsqrt.pop %v534
        %v551 = vrsqrt.pop %v535
        %v552 = vrsqrt.pop %v536
        %v553 = vrsqrt.pop %v537
        %v554 = vrsqrt.pop %v538
        %v555 = vmul.f32 %v443, %v539
        %v556 = vmul.f32 %v444, %v540
        %v557 = vmul.f32 %v445, %v541
        %v558 = vmul.f32 %v446, %v542
        %v559 = vmul.f32 %v447, %v543
        %v560 = vmul.f32 %v448, %v544
        %v561 = vmul.f32 %v449, %v545
        %v562 = vmul.f32 %v450, %v546
        %v563 = vmul.f32 %v451, %v547
        %v564 = vmul.f32 %v452, %v548
        %v565 = vmul.f32 %v453, %v549
        %v566 = vmul.f32 %v454, %v550
        %v567 = vmul.f32 %v455, %v551
        %v568 = vmul.f32 %v456, %v552
        %v569 = vmul.f32 %v457, %v553
        %v570 = vmul.f32 %v458, %v554
        %v571 = vlaneseq
        %v572 = vshrl.u32 %v571, 7
        %v573 = vsub.s32 0, %v572
        %v574 = vrot.slane %v387, %v573
        %v575 = vmul.f32 %v555, %v574
        %v576 = vmul.f32 %v556, %v574
        %v577 = vmul.f32 %v557, %v574
        %v578 = vmul.f32 %v558, %v574
        %v579 = vmul.f32 %v559, %v574
        %v580 = vmul.f32 %v560, %v574
        %v581 = vmul.f32 %v561, %v574
        %v582 = vmul.f32 %v562, %v574
        %v583 = vmul.f32 %v563, %v574
        %v584 = vmul.f32 %v564, %v574
        %v585 = vmul.f32 %v565, %v574
        %v586 = vmul.f32 %v566, %v574
        %v587 = vmul.f32 %v567, %v574
        %v588 = vmul.f32 %v568, %v574
        %v589 = vmul.f32 %v569, %v574
        %v590 = vmul.f32 %v570, %v574
        %v591 = vlaneseq
        %v592 = vshrl.u32 %v591, 7
        %v593 = vsub.s32 0, %v592
        %v594 = vrot.slane %v388, %v593
        %v595 = vadd.f32 %v575, %v594
        %v596 = vadd.f32 %v576, %v594
        %v597 = vadd.f32 %v577, %v594
        %v598 = vadd.f32 %v578, %v594
        %v599 = vadd.f32 %v579, %v594
        %v600 = vadd.f32 %v580, %v594
        %v601 = vadd.f32 %v581, %v594
        %v602 = vadd.f32 %v582, %v594
        %v603 = vadd.f32 %v583, %v594
        %v604 = vadd.f32 %v584, %v594
        %v605 = vadd.f32 %v585, %v594
        %v606 = vadd.f32 %v586, %v594
        %v607 = vadd.f32 %v587, %v594
        %v608 = vadd.f32 %v588, %v594
        %v609 = vadd.f32 %v589, %v594
        %v610 = vadd.f32 %v590, %v594
        %v611 = vpack.c.bf16 %v596, %v595
        %v612 = vpack.c.bf16 %v598, %v597
        %v613 = vpack.c.bf16 %v600, %v599
        %v614 = vpack.c.bf16 %v602, %v601
        %v615 = vpack.c.bf16 %v604, %v603
        %v616 = vpack.c.bf16 %v606, %v605
        %v617 = vpack.c.bf16 %v608, %v607
        %v618 = vpack.c.bf16 %v610, %v609
        %v619 = vld [vmem:[#allocation7] sm:$0xff]
        %v620 = vld [vmem:[#allocation7 + $0x8] sm:$0xf]
        %v621 = vld [vmem:[#allocation7 + $0xc] sm:$0xff]
        %v622 = vld [vmem:[#allocation7 + $0x14] sm:$0xf]
        %v623 = vld [vmem:[#allocation7 + $0x18] sm:$0xff]
        %v624 = vld [vmem:[#allocation7 + $0x20] sm:$0xf]
        %v625 = vld [vmem:[#allocation7 + $0x24] sm:$0xff]
        %v626 = vld [vmem:[#allocation7 + $0x2c] sm:$0xf]
        %v627 = vld [vmem:[#allocation7 + $0x30] sm:$0xff]
        %v628 = vld [vmem:[#allocation7 + $0x38] sm:$0xf]
        %v629 = vld [vmem:[#allocation7 + $0x3c] sm:$0xff]
        %v630 = vld [vmem:[#allocation7 + $0x44] sm:$0xf]
        %v631 = vld [vmem:[#allocation7 + $0x48] sm:$0xff]
        %v632 = vld [vmem:[#allocation7 + $0x50] sm:$0xf]
        %v633 = vld [vmem:[#allocation7 + $0x54] sm:$0xff]
        %v634 = vld [vmem:[#allocation7 + $0x5c] sm:$0xf]
        %v635 = vld [vmem:[#allocation7 + $0x60] sm:$0xff]
        %v636 = vld [vmem:[#allocation7 + $0x68] sm:$0xf]
        %v637 = vld [vmem:[#allocation7 + $0x6c] sm:$0xff]
        %v638 = vld [vmem:[#allocation7 + $0x74] sm:$0xf]
        %v639 = vld [vmem:[#allocation7 + $0x78] sm:$0xff]
        %v640 = vld [vmem:[#allocation7 + $0x80] sm:$0xf]
        %v641 = vld [vmem:[#allocation7 + $0x84] sm:$0xff]
        %v642 = vld [vmem:[#allocation7 + $0x8c] sm:$0xf]
        %v643 = vld [vmem:[#allocation7 + $0x90] sm:$0xff]
        %v644 = vld [vmem:[#allocation7 + $0x98] sm:$0xf]
        %v645 = vld [vmem:[#allocation7 + $0x9c] sm:$0xff]
        %v646 = vld [vmem:[#allocation7 + $0xa4] sm:$0xf]
        %v647 = vld [vmem:[#allocation7 + $0xa8] sm:$0xff]
        %v648 = vld [vmem:[#allocation7 + $0xb0] sm:$0xf]
        %v649 = vld [vmem:[#allocation7 + $0xb4] sm:$0xff]
        %v650 = vld [vmem:[#allocation7 + $0xbc] sm:$0xf]
        %v683 = vunpack.c.l.b16 %v619
        %v684 = vunpack.c.h.b16 %v619
        %v685 = vunpack.c.l.b16 %v620
        %v686 = vunpack.c.l.b16 %v621
        %v687 = vunpack.c.h.b16 %v621
        %v688 = vunpack.c.l.b16 %v622
        %v689 = vunpack.c.l.b16 %v623
        %v690 = vunpack.c.h.b16 %v623
        %v691 = vunpack.c.l.b16 %v624
        %v692 = vunpack.c.l.b16 %v625
        %v693 = vunpack.c.h.b16 %v625
        %v694 = vunpack.c.l.b16 %v626
        %v695 = vunpack.c.l.b16 %v627
        %v696 = vunpack.c.h.b16 %v627
        %v697 = vunpack.c.l.b16 %v628
        %v698 = vunpack.c.l.b16 %v629
        %v699 = vunpack.c.h.b16 %v629
        %v700 = vunpack.c.l.b16 %v630
        %v701 = vunpack.c.l.b16 %v631
        %v702 = vunpack.c.h.b16 %v631
        %v703 = vunpack.c.l.b16 %v632
        %v704 = vunpack.c.l.b16 %v633
        %v705 = vunpack.c.h.b16 %v633
        %v706 = vunpack.c.l.b16 %v634
        %v707 = vunpack.c.l.b16 %v635
        %v708 = vunpack.c.h.b16 %v635
        %v709 = vunpack.c.l.b16 %v636
        %v710 = vunpack.c.l.b16 %v637
        %v711 = vunpack.c.h.b16 %v637
        %v712 = vunpack.c.l.b16 %v638
        %v713 = vunpack.c.l.b16 %v639
        %v714 = vunpack.c.h.b16 %v639
        %v715 = vunpack.c.l.b16 %v640
        %v716 = vunpack.c.l.b16 %v641
        %v717 = vunpack.c.h.b16 %v641
        %v718 = vunpack.c.l.b16 %v642
        %v719 = vunpack.c.l.b16 %v643
        %v720 = vunpack.c.h.b16 %v643
        %v721 = vunpack.c.l.b16 %v644
        %v722 = vunpack.c.l.b16 %v645
        %v723 = vunpack.c.h.b16 %v645
        %v724 = vunpack.c.l.b16 %v646
        %v725 = vunpack.c.l.b16 %v647
        %v726 = vunpack.c.h.b16 %v647
        %v727 = vunpack.c.l.b16 %v648
        %v728 = vunpack.c.l.b16 %v649
        %v729 = vunpack.c.h.b16 %v649
        %v730 = vunpack.c.l.b16 %v650
        %v731 = vpack.c.b16 %v686, %v683
        %v732 = vpack.c.b16 %v687, %v684
        %v733 = vpack.c.b16 %v688, %v685
        %v734 = vpack.c.b16 %v692, %v689
        %v735 = vpack.c.b16 %v693, %v690
        %v736 = vpack.c.b16 %v694, %v691
        %v737 = vpack.c.b16 %v698, %v695
        %v738 = vpack.c.b16 %v699, %v696
        %v739 = vpack.c.b16 %v700, %v697
        %v740 = vpack.c.b16 %v704, %v701
        %v741 = vpack.c.b16 %v705, %v702
        %v742 = vpack.c.b16 %v706, %v703
        %v743 = vpack.c.b16 %v710, %v707
        %v744 = vpack.c.b16 %v711, %v708
        %v745 = vpack.c.b16 %v712, %v709
        %v746 = vpack.c.b16 %v716, %v713
        %v747 = vpack.c.b16 %v717, %v714
        %v748 = vpack.c.b16 %v718, %v715
        %v749 = vpack.c.b16 %v722, %v719
        %v750 = vpack.c.b16 %v723, %v720
        %v751 = vpack.c.b16 %v724, %v721
        %v752 = vpack.c.b16 %v728, %v725
        %v753 = vpack.c.b16 %v729, %v726
        %v754 = vpack.c.b16 %v730, %v727
        %779 = vmatprep.subr.bf16.mxu0 %v732
        %780 = vmatpush1.bf16.msra.mxu0 %v731
        %781 = vmatprep.subr.bf16.mxu0 %v735
        %782 = vmatpush1.bf16.msra.mxu0 %v734
        %783 = vmatprep.subr.bf16.mxu0 %v738
        %784 = vmatpush1.bf16.msra.mxu0 %v737
        %785 = vmatprep.subr.bf16.mxu0 %v741
        %786 = vmatpush1.bf16.msra.mxu0 %v740
        %787 = vmatprep.subr.bf16.mxu0 %v744
        %788 = vmatpush1.bf16.msra.mxu0 %v743
        %789 = vmatprep.subr.bf16.mxu0 %v747
        %790 = vmatpush1.bf16.msra.mxu0 %v746
        %791 = vmatprep.subr.bf16.mxu0 %v750
        %792 = vmatpush1.bf16.msra.mxu0 %v749
        %793 = vmatprep.subr.bf16.mxu0 %v753
        %794 = vmatpush1.bf16.msra.mxu0 %v752
        %795 = vmatprep.subr.bf16.mxu0 0
        %796 = vmatpush1.bf16.msra.mxu0 0
        %797 = vmatprep.subr.bf16.mxu0 0
        %798 = vmatpush1.bf16.msra.mxu0 0
        %799 = vmatprep.subr.bf16.mxu0 0
        %800 = vmatpush1.bf16.msra.mxu0 0
        %801 = vmatprep.subr.bf16.mxu0 0
        %802 = vmatpush1.bf16.msra.mxu0 0
        %803 = vmatprep.subr.bf16.mxu0 0
        %804 = vmatpush1.bf16.msra.mxu0 0
        %805 = vmatprep.subr.bf16.mxu0 0
        %806 = vmatpush1.bf16.msra.mxu0 0
        %807 = vmatprep.subr.bf16.mxu0 0
        %808 = vmatpush1.bf16.msra.mxu0 0
        %809 = vmatprep.subr.bf16.mxu0 0
        %810 = vmatpush1.bf16.msra.mxu0 0
        %811 = vmatprep.mubr.bf16.mxu0 0
        %812 = vmatmul.mubr.bf16.gmra.mrb[0].mxu0 %v611
        %v813 = vpop.f32.mrb[0].mxu0
        %v814 = vadd.f32 0.0, %v813
        %v815 = vpop.f32.mrb[0].mxu0
        %v816 = vadd.f32 0.0, %v815
        %v817 = vpop.f32.mrb[0].mxu0
        %v818 = vadd.f32 0.0, %v817
        %v819 = vpop.f32.mrb[0].mxu0
        %v820 = vadd.f32 0.0, %v819
        %821 = vmatprep.mubr.bf16.mxu0 0
        %822 = vmatmul.mubr.bf16.gmra.mrb[0].mxu0 %v612
        %v823 = vpop.f32.mrb[0].mxu0
        %v824 = vadd.f32 0.0, %v823
        %v825 = vpop.f32.mrb[0].mxu0
        %v826 = vadd.f32 0.0, %v825
        %v827 = vpop.f32.mrb[0].mxu0
        %v828 = vadd.f32 0.0, %v827
        %v829 = vpop.f32.mrb[0].mxu0
        %v830 = vadd.f32 0.0, %v829
        %831 = vmatprep.mubr.bf16.mxu0 0
        %832 = vmatmul.mubr.bf16.gmra.mrb[0].mxu0 %v613
        %v833 = vpop.f32.mrb[0].mxu0
        %v834 = vadd.f32 0.0, %v833
        %v835 = vpop.f32.mrb[0].mxu0
        %v836 = vadd.f32 0.0, %v835
        %v837 = vpop.f32.mrb[0].mxu0
        %v838 = vadd.f32 0.0, %v837
        %v839 = vpop.f32.mrb[0].mxu0
        %v840 = vadd.f32 0.0, %v839
        %841 = vmatprep.mubr.bf16.mxu0 0
        %842 = vmatmul.mubr.bf16.gmra.mrb[0].mxu0 %v614
        %v843 = vpop.f32.mrb[0].mxu0
        %v844 = vadd.f32 0.0, %v843
        %v845 = vpop.f32.mrb[0].mxu0
        %v846 = vadd.f32 0.0, %v845
        %v847 = vpop.f32.mrb[0].mxu0
        %v848 = vadd.f32 0.0, %v847
        %v849 = vpop.f32.mrb[0].mxu0
        %v850 = vadd.f32 0.0, %v849
        %851 = vmatprep.mubr.bf16.mxu0 0
        %852 = vmatmul.mubr.bf16.gmra.mrb[0].mxu0 %v615
        %v853 = vpop.f32.mrb[0].mxu0
        %v854 = vadd.f32 0.0, %v853
        %v855 = vpop.f32.mrb[0].mxu0
        %v856 = vadd.f32 0.0, %v855
        %v857 = vpop.f32.mrb[0].mxu0
        %v858 = vadd.f32 0.0, %v857
        %v859 = vpop.f32.mrb[0].mxu0
        %v860 = vadd.f32 0.0, %v859
        %861 = vmatprep.mubr.bf16.mxu0 0
        %862 = vmatmul.mubr.bf16.gmra.mrb[0].mxu0 %v616
        %v863 = vpop.f32.mrb[0].mxu0
        %v864 = vadd.f32 0.0, %v863
        %v865 = vpop.f32.mrb[0].mxu0
        %v866 = vadd.f32 0.0, %v865
        %v867 = vpop.f32.mrb[0].mxu0
        %v868 = vadd.f32 0.0, %v867
        %v869 = vpop.f32.mrb[0].mxu0
        %v870 = vadd.f32 0.0, %v869
        %871 = vmatprep.mubr.bf16.mxu0 0
        %872 = vmatmul.mubr.bf16.gmra.mrb[0].mxu0 %v617
        %v873 = vpop.f32.mrb[0].mxu0
        %v874 = vadd.f32 0.0, %v873
        %v875 = vpop.f32.mrb[0].mxu0
        %v876 = vadd.f32 0.0, %v875
        %v877 = vpop.f32.mrb[0].mxu0
        %v878 = vadd.f32 0.0, %v877
        %v879 = vpop.f32.mrb[0].mxu0
        %v880 = vadd.f32 0.0, %v879
        %881 = vmatprep.mubr.bf16.mxu0 0
        %882 = vmatmul.mubr.bf16.gmra.mrb[0].mxu0 %v618
        %v883 = vpop.f32.mrb[0].mxu0
        %v884 = vadd.f32 0.0, %v883
        %v885 = vpop.f32.mrb[0].mxu0
        %v886 = vadd.f32 0.0, %v885
        %v887 = vpop.f32.mrb[0].mxu0
        %v888 = vadd.f32 0.0, %v887
        %v889 = vpop.f32.mrb[0].mxu0
        %v890 = vadd.f32 0.0, %v889
        %891 = vdwg.mxu0
        %892 = vmatprep.subr.bf16.mxu0 0
        %893 = vmatpush1.bf16.msra.mxu0 %v733
        %894 = vmatprep.subr.bf16.mxu0 0
        %895 = vmatpush1.bf16.msra.mxu0 %v736
        %896 = vmatprep.subr.bf16.mxu0 0
        %897 = vmatpush1.bf16.msra.mxu0 %v739
        %898 = vmatprep.subr.bf16.mxu0 0
        %899 = vmatpush1.bf16.msra.mxu0 %v742
        %900 = vmatprep.subr.bf16.mxu0 0
        %901 = vmatpush1.bf16.msra.mxu0 %v745
        %902 = vmatprep.subr.bf16.mxu0 0
        %903 = vmatpush1.bf16.msra.mxu0 %v748
        %904 = vmatprep.subr.bf16.mxu0 0
        %905 = vmatpush1.bf16.msra.mxu0 %v751
        %906 = vmatprep.subr.bf16.mxu0 0
        %907 = vmatpush1.bf16.msra.mxu0 %v754
        %908 = vmatprep.subr.bf16.mxu0 0
        %909 = vmatpush1.bf16.msra.mxu0 0
        %910 = vmatprep.subr.bf16.mxu0 0
        %911 = vmatpush1.bf16.msra.mxu0 0
        %912 = vmatprep.subr.bf16.mxu0 0
        %913 = vmatpush1.bf16.msra.mxu0 0
        %914 = vmatprep.subr.bf16.mxu0 0
        %915 = vmatpush1.bf16.msra.mxu0 0
        %916 = vmatprep.subr.bf16.mxu0 0
        %917 = vmatpush1.bf16.msra.mxu0 0
        %918 = vmatprep.subr.bf16.mxu0 0
        %919 = vmatpush1.bf16.msra.mxu0 0
        %920 = vmatprep.subr.bf16.mxu0 0
        %921 = vmatpush1.bf16.msra.mxu0 0
        %922 = vmatprep.subr.bf16.mxu0 0
        %923 = vmatpush1.bf16.msra.mxu0 0
        %924 = vmatprep.mubr.bf16.mxu0 0
        %925 = vmatmul.mubr.bf16.gmra.mrb[0].mxu0 %v611
        %v926 = vpop.f32.mrb[0].mxu0
        %v927 = vadd.f32 0.0, %v926
        %v928 = vpop.f32.mrb[0].mxu0
        %v929 = vpop.f32.mrb[0].mxu0
        %v930 = vadd.f32 0.0, %v929
        %v931 = vpop.f32.mrb[0].mxu0
        %932 = vmatprep.mubr.bf16.mxu0 0
        %933 = vmatmul.mubr.bf16.gmra.mrb[0].mxu0 %v612
        %v934 = vpop.f32.mrb[0].mxu0
        %v935 = vadd.f32 0.0, %v934
        %v936 = vpop.f32.mrb[0].mxu0
        %v937 = vpop.f32.mrb[0].mxu0
        %v938 = vadd.f32 0.0, %v937
        %v939 = vpop.f32.mrb[0].mxu0
        %940 = vmatprep.mubr.bf16.mxu0 0
        %941 = vmatmul.mubr.bf16.gmra.mrb[0].mxu0 %v613
        %v942 = vpop.f32.mrb[0].mxu0
        %v943 = vadd.f32 0.0, %v942
        %v944 = vpop.f32.mrb[0].mxu0
        %v945 = vpop.f32.mrb[0].mxu0
        %v946 = vadd.f32 0.0, %v945
        %v947 = vpop.f32.mrb[0].mxu0
        %948 = vmatprep.mubr.bf16.mxu0 0
        %949 = vmatmul.mubr.bf16.gmra.mrb[0].mxu0 %v614
        %v950 = vpop.f32.mrb[0].mxu0
        %v951 = vadd.f32 0.0, %v950
        %v952 = vpop.f32.mrb[0].mxu0
        %v953 = vpop.f32.mrb[0].mxu0
        %v954 = vadd.f32 0.0, %v953
        %v955 = vpop.f32.mrb[0].mxu0
        %956 = vmatprep.mubr.bf16.mxu0 0
        %957 = vmatmul.mubr.bf16.gmra.mrb[0].mxu0 %v615
        %v958 = vpop.f32.mrb[0].mxu0
        %v959 = vadd.f32 0.0, %v958
        %v960 = vpop.f32.mrb[0].mxu0
        %v961 = vpop.f32.mrb[0].mxu0
        %v962 = vadd.f32 0.0, %v961
        %v963 = vpop.f32.mrb[0].mxu0
        %964 = vmatprep.mubr.bf16.mxu0 0
        %965 = vmatmul.mubr.bf16.gmra.mrb[0].mxu0 %v616
        %v966 = vpop.f32.mrb[0].mxu0
        %v967 = vadd.f32 0.0, %v966
        %v968 = vpop.f32.mrb[0].mxu0
        %v969 = vpop.f32.mrb[0].mxu0
        %v970 = vadd.f32 0.0, %v969
        %v971 = vpop.f32.mrb[0].mxu0
        %972 = vmatprep.mubr.bf16.mxu0 0
        %973 = vmatmul.mubr.bf16.gmra.mrb[0].mxu0 %v617
        %v974 = vpop.f32.mrb[0].mxu0
        %v975 = vadd.f32 0.0, %v974
        %v976 = vpop.f32.mrb[0].mxu0
        %v977 = vpop.f32.mrb[0].mxu0
        %v978 = vadd.f32 0.0, %v977
        %v979 = vpop.f32.mrb[0].mxu0
        %980 = vmatprep.mubr.bf16.mxu0 0
        %981 = vmatmul.mubr.bf16.gmra.mrb[0].mxu0 %v618
        %v982 = vpop.f32.mrb[0].mxu0
        %v983 = vadd.f32 0.0, %v982
        %v984 = vpop.f32.mrb[0].mxu0
        %v985 = vpop.f32.mrb[0].mxu0
        %v986 = vadd.f32 0.0, %v985
        %v987 = vpop.f32.mrb[0].mxu0
        %988 = vdwg.mxu0
        %v989 = vpack.c.bf16 %v818, %v814
        %v990 = vpack.c.bf16 %v820, %v816
        %v991 = vpack.c.bf16 %v930, %v927
        %v992 = vpack.c.bf16 %v828, %v824
        %v993 = vpack.c.bf16 %v830, %v826
        %v994 = vpack.c.bf16 %v938, %v935
        %v995 = vpack.c.bf16 %v838, %v834
        %v996 = vpack.c.bf16 %v840, %v836
        %v997 = vpack.c.bf16 %v946, %v943
        %v998 = vpack.c.bf16 %v848, %v844
        %v999 = vpack.c.bf16 %v850, %v846
        %v1000 = vpack.c.bf16 %v954, %v951
        %v1001 = vpack.c.bf16 %v858, %v854
        %v1002 = vpack.c.bf16 %v860, %v856
        %v1003 = vpack.c.bf16 %v962, %v959
        %v1004 = vpack.c.bf16 %v868, %v864
        %v1005 = vpack.c.bf16 %v870, %v866
        %v1006 = vpack.c.bf16 %v970, %v967
        %v1007 = vpack.c.bf16 %v878, %v874
        %v1008 = vpack.c.bf16 %v880, %v876
        %v1009 = vpack.c.bf16 %v978, %v975
        %v1010 = vpack.c.bf16 %v888, %v884
        %v1011 = vpack.c.bf16 %v890, %v886
        %v1012 = vpack.c.bf16 %v986, %v983
        %v1013 = vlaneseq
        %v1014 = vshrl.u32 %v1013, 7
        %v1015 = vadd.s32 %v1014, 8
        %v1016 = vadd.s32 %v1014, 16
        %v1017 = vadd.s32 %v1014, 24
        %v1018 = vadd.s32 %v1014, 32
        %v1019 = vadd.s32 %v1014, 40
        %v1020 = vadd.s32 %v1014, 48
        %v1021 = vadd.s32 %v1014, 56
        %v1022 = vadd.s32 %v1014, 64
        %v1023 = vadd.s32 %v1014, 72
        %v1024 = vadd.s32 %v1014, 80
        %v1025 = vadd.s32 %v1014, 88
        %v1026 = vadd.s32 %v1014, 96
        %v1027 = vadd.s32 %v1014, 104
        %v1028 = vadd.s32 %v1014, 112
        %v1029 = vadd.s32 %v1014, 120
        %v1030 = vlaneseq
        %v1031 = vand.u32 %v1030, 127
        %vm1032 = vcmp.ge.s32.totalorder %v1014, %v1031
        %vm1033 = vcmp.ge.s32.totalorder %v1015, %v1031
        %vm1034 = vcmp.ge.s32.totalorder %v1016, %v1031
        %vm1035 = vcmp.ge.s32.totalorder %v1017, %v1031
        %vm1036 = vcmp.ge.s32.totalorder %v1018, %v1031
        %vm1037 = vcmp.ge.s32.totalorder %v1019, %v1031
        %vm1038 = vcmp.ge.s32.totalorder %v1020, %v1031
        %vm1039 = vcmp.ge.s32.totalorder %v1021, %v1031
        %vm1040 = vcmp.ge.s32.totalorder %v1022, %v1031
        %vm1041 = vcmp.ge.s32.totalorder %v1023, %v1031
        %vm1042 = vcmp.ge.s32.totalorder %v1024, %v1031
        %vm1043 = vcmp.ge.s32.totalorder %v1025, %v1031
        %vm1044 = vcmp.ge.s32.totalorder %v1026, %v1031
        %vm1045 = vcmp.ge.s32.totalorder %v1027, %v1031
        %vm1046 = vcmp.ge.s32.totalorder %v1028, %v1031
        %vm1047 = vcmp.ge.s32.totalorder %v1029, %v1031
        %vm1048 = vcmask 261120
        %v1050 = vsel %vm1048, %v989, 0
        %v1053 = vsel %vm1048, %v992, 0
        %v1056 = vsel %vm1048, %v995, 0
        %v1059 = vsel %vm1048, %v998, 0
        %v1062 = vsel %vm1048, %v1001, 0
        %v1065 = vsel %vm1048, %v1004, 0
        %v1068 = vsel %vm1048, %v1007, 0
        %v1071 = vsel %vm1048, %v1010, 0
        %v1074 = vsel %vm1048, %v990, 0
        %v1077 = vsel %vm1048, %v993, 0
        %v1080 = vsel %vm1048, %v996, 0
        %v1083 = vsel %vm1048, %v999, 0
        %v1086 = vsel %vm1048, %v1002, 0
        %v1089 = vsel %vm1048, %v1005, 0
        %v1092 = vsel %vm1048, %v1008, 0
        %v1095 = vsel %vm1048, %v1011, 0
        %1097 = vmatprep.subr.bf16.mxu0 0
        %1098 = vmatpush1.bf16.xpose.msra.mxu0 %v1074
        %1099 = vmatprep.subr.bf16.mxu0 0
        %1100 = vmatpush1.bf16.xpose.msra.mxu0 %v1077
        %1101 = vmatprep.subr.bf16.mxu0 0
        %1102 = vmatpush1.bf16.xpose.msra.mxu0 %v1080
        %1103 = vmatprep.subr.bf16.mxu0 0
        %1104 = vmatpush1.bf16.xpose.msra.mxu0 %v1083
        %1105 = vmatprep.subr.bf16.mxu0 0
        %1106 = vmatpush1.bf16.xpose.msra.mxu0 %v1086
        %1107 = vmatprep.subr.bf16.mxu0 0
        %1108 = vmatpush1.bf16.xpose.msra.mxu0 %v1089
        %1109 = vmatprep.subr.bf16.mxu0 0
        %1110 = vmatpush1.bf16.xpose.msra.mxu0 %v1092
        %1111 = vmatprep.subr.bf16.mxu0 0
        %1112 = vmatpush1.bf16.xpose.msra.mxu0 %v1095
        %1113 = vmatprep.subr.bf16.mxu0 0
        %1114 = vmatpush1.bf16.xpose.msra.mxu0 0
        %1115 = vmatprep.subr.bf16.mxu0 0
        %1116 = vmatpush1.bf16.xpose.msra.mxu0 0
        %1117 = vmatprep.subr.bf16.mxu0 0
        %1118 = vmatpush1.bf16.xpose.msra.mxu0 0
        %1119 = vmatprep.subr.bf16.mxu0 0
        %1120 = vmatpush1.bf16.xpose.msra.mxu0 0
        %1121 = vmatprep.subr.bf16.mxu0 0
        %1122 = vmatpush1.bf16.xpose.msra.mxu0 0
        %1123 = vmatprep.subr.bf16.mxu0 0
        %1124 = vmatpush1.bf16.xpose.msra.mxu0 0
        %1125 = vmatprep.subr.bf16.mxu0 0
        %1126 = vmatpush1.bf16.xpose.msra.mxu0 0
        %1127 = vmatprep.subr.bf16.mxu0 0
        %1128 = vmatpush1.bf16.xpose.msra.mxu0 0
        %1129 = vmatprep.mubr.bf16.mxu0 0
        %1130 = vmatmul.mubr.bf16.gmra.mrb[0].mxu0 %v1050
        %v1131 = vpop.f32.mrb[0].mxu0
        %v1132 = vadd.f32 0.0, %v1131
        %v1133 = vpop.f32.mrb[0].mxu0
        %v1134 = vpop.f32.mrb[0].mxu0
        %v1135 = vadd.f32 0.0, %v1134
        %v1136 = vpop.f32.mrb[0].mxu0
        %1137 = vmatprep.mubr.bf16.mxu0 0
        %1138 = vmatmul.mubr.bf16.gmra.mrb[0].mxu0 %v1053
        %v1139 = vpop.f32.mrb[0].mxu0
        %v1140 = vadd.f32 0.0, %v1139
        %v1141 = vpop.f32.mrb[0].mxu0
        %v1142 = vpop.f32.mrb[0].mxu0
        %v1143 = vadd.f32 0.0, %v1142
        %v1144 = vpop.f32.mrb[0].mxu0
        %1145 = vmatprep.mubr.bf16.mxu0 0
        %1146 = vmatmul.mubr.bf16.gmra.mrb[0].mxu0 %v1056
        %v1147 = vpop.f32.mrb[0].mxu0
        %v1148 = vadd.f32 0.0, %v1147
        %v1149 = vpop.f32.mrb[0].mxu0
        %v1150 = vpop.f32.mrb[0].mxu0
        %v1151 = vadd.f32 0.0, %v1150
        %v1152 = vpop.f32.mrb[0].mxu0
        %1153 = vmatprep.mubr.bf16.mxu0 0
        %1154 = vmatmul.mubr.bf16.gmra.mrb[0].mxu0 %v1059
        %v1155 = vpop.f32.mrb[0].mxu0
        %v1156 = vadd.f32 0.0, %v1155
        %v1157 = vpop.f32.mrb[0].mxu0
        %v1158 = vpop.f32.mrb[0].mxu0
        %v1159 = vadd.f32 0.0, %v1158
        %v1160 = vpop.f32.mrb[0].mxu0
        %1161 = vmatprep.mubr.bf16.mxu0 0
        %1162 = vmatmul.mubr.bf16.gmra.mrb[0].mxu0 %v1062
        %v1163 = vpop.f32.mrb[0].mxu0
        %v1164 = vadd.f32 0.0, %v1163
        %v1165 = vpop.f32.mrb[0].mxu0
        %v1166 = vpop.f32.mrb[0].mxu0
        %v1167 = vadd.f32 0.0, %v1166
        %v1168 = vpop.f32.mrb[0].mxu0
        %1169 = vmatprep.mubr.bf16.mxu0 0
        %1170 = vmatmul.mubr.bf16.gmra.mrb[0].mxu0 %v1065
        %v1171 = vpop.f32.mrb[0].mxu0
        %v1172 = vadd.f32 0.0, %v1171
        %v1173 = vpop.f32.mrb[0].mxu0
        %v1174 = vpop.f32.mrb[0].mxu0
        %v1175 = vadd.f32 0.0, %v1174
        %v1176 = vpop.f32.mrb[0].mxu0
        %1177 = vmatprep.mubr.bf16.mxu0 0
        %1178 = vmatmul.mubr.bf16.gmra.mrb[0].mxu0 %v1068
        %v1179 = vpop.f32.mrb[0].mxu0
        %v1180 = vadd.f32 0.0, %v1179
        %v1181 = vpop.f32.mrb[0].mxu0
        %v1182 = vpop.f32.mrb[0].mxu0
        %v1183 = vadd.f32 0.0, %v1182
        %v1184 = vpop.f32.mrb[0].mxu0
        %1185 = vmatprep.mubr.bf16.mxu0 0
        %1186 = vmatmul.mubr.bf16.gmra.mrb[0].mxu0 %v1071
        %v1187 = vpop.f32.mrb[0].mxu0
        %v1188 = vadd.f32 0.0, %v1187
        %v1189 = vpop.f32.mrb[0].mxu0
        %v1190 = vpop.f32.mrb[0].mxu0
        %v1191 = vadd.f32 0.0, %v1190
        %v1192 = vpop.f32.mrb[0].mxu0
        %1193 = vdwg.mxu0
        %v1194 = vsel %vm1032, %v1132, -1e+30
        %v1195 = vsel %vm1033, %v1135, -1e+30
        %v1196 = vsel %vm1034, %v1140, -1e+30
        %v1197 = vsel %vm1035, %v1143, -1e+30
        %v1198 = vsel %vm1036, %v1148, -1e+30
        %v1199 = vsel %vm1037, %v1151, -1e+30
        %v1200 = vsel %vm1038, %v1156, -1e+30
        %v1201 = vsel %vm1039, %v1159, -1e+30
        %v1202 = vsel %vm1040, %v1164, -1e+30
        %v1203 = vsel %vm1041, %v1167, -1e+30
        %v1204 = vsel %vm1042, %v1172, -1e+30
        %v1205 = vsel %vm1043, %v1175, -1e+30
        %v1206 = vsel %vm1044, %v1180, -1e+30
        %v1207 = vsel %vm1045, %v1183, -1e+30
        %v1208 = vsel %vm1046, %v1188, -1e+30
        %v1209 = vsel %vm1047, %v1191, -1e+30
        %1210 = vmax.xlane.f32.xlu0 %v1194
        %v1211 = vpop.xlane.xlu0 %1210
        %1212 = vmax.xlane.f32.xlu0 %v1195
        %v1213 = vpop.xlane.xlu0 %1212
        %1214 = vmax.xlane.f32.xlu0 %v1196
        %v1215 = vpop.xlane.xlu0 %1214
        %1216 = vmax.xlane.f32.xlu0 %v1197
        %v1217 = vpop.xlane.xlu0 %1216
        %1218 = vmax.xlane.f32.xlu0 %v1198
        %v1219 = vpop.xlane.xlu0 %1218
        %1220 = vmax.xlane.f32.xlu0 %v1199
        %v1221 = vpop.xlane.xlu0 %1220
        %1222 = vmax.xlane.f32.xlu0 %v1200
        %v1223 = vpop.xlane.xlu0 %1222
        %1224 = vmax.xlane.f32.xlu0 %v1201
        %v1225 = vpop.xlane.xlu0 %1224
        %1226 = vmax.xlane.f32.xlu0 %v1202
        %v1227 = vpop.xlane.xlu0 %1226
        %1228 = vmax.xlane.f32.xlu0 %v1203
        %v1229 = vpop.xlane.xlu0 %1228
        %1230 = vmax.xlane.f32.xlu0 %v1204
        %v1231 = vpop.xlane.xlu0 %1230
        %1232 = vmax.xlane.f32.xlu0 %v1205
        %v1233 = vpop.xlane.xlu0 %1232
        %1234 = vmax.xlane.f32.xlu0 %v1206
        %v1235 = vpop.xlane.xlu0 %1234
        %1236 = vmax.xlane.f32.xlu0 %v1207
        %v1237 = vpop.xlane.xlu0 %1236
        %1238 = vmax.xlane.f32.xlu0 %v1208
        %v1239 = vpop.xlane.xlu0 %1238
        %1240 = vmax.xlane.f32.xlu0 %v1209
        %v1241 = vpop.xlane.xlu0 %1240
        %v1242 = vsub.f32 %v1194, %v1211
        %v1243 = vsub.f32 %v1195, %v1213
        %v1244 = vsub.f32 %v1196, %v1215
        %v1245 = vsub.f32 %v1197, %v1217
        %v1246 = vsub.f32 %v1198, %v1219
        %v1247 = vsub.f32 %v1199, %v1221
        %v1248 = vsub.f32 %v1200, %v1223
        %v1249 = vsub.f32 %v1201, %v1225
        %v1250 = vsub.f32 %v1202, %v1227
        %v1251 = vsub.f32 %v1203, %v1229
        %v1252 = vsub.f32 %v1204, %v1231
        %v1253 = vsub.f32 %v1205, %v1233
        %v1254 = vsub.f32 %v1206, %v1235
        %v1255 = vsub.f32 %v1207, %v1237
        %v1256 = vsub.f32 %v1208, %v1239
        %v1257 = vsub.f32 %v1209, %v1241
        %v1258 = vmul.f32 %v1242, 1.442695
        %v1259 = vpow.pop %v1258
        %v1260 = vmul.f32 %v1243, 1.442695
        %v1261 = vpow.pop %v1260
        %v1262 = vmul.f32 %v1244, 1.442695
        %v1263 = vpow.pop %v1262
        %v1264 = vmul.f32 %v1245, 1.442695
        %v1265 = vpow.pop %v1264
        %v1266 = vmul.f32 %v1246, 1.442695
        %v1267 = vpow.pop %v1266
        %v1268 = vmul.f32 %v1247, 1.442695
        %v1269 = vpow.pop %v1268
        %v1270 = vmul.f32 %v1248, 1.442695
        %v1271 = vpow.pop %v1270
        %v1272 = vmul.f32 %v1249, 1.442695
        %v1273 = vpow.pop %v1272
        %v1274 = vmul.f32 %v1250, 1.442695
        %v1275 = vpow.pop %v1274
        %v1276 = vmul.f32 %v1251, 1.442695
        %v1277 = vpow.pop %v1276
        %v1278 = vmul.f32 %v1252, 1.442695
        %v1279 = vpow.pop %v1278
        %v1280 = vmul.f32 %v1253, 1.442695
        %v1281 = vpow.pop %v1280
        %v1282 = vmul.f32 %v1254, 1.442695
        %v1283 = vpow.pop %v1282
        %v1284 = vmul.f32 %v1255, 1.442695
        %v1285 = vpow.pop %v1284
        %v1286 = vmul.f32 %v1256, 1.442695
        %v1287 = vpow.pop %v1286
        %v1288 = vmul.f32 %v1257, 1.442695
        %v1289 = vpow.pop %v1288
        %1290 = vadd.xlane.f32.xlu0 %v1259
        %v1291 = vpop.xlane.xlu0 %1290
        %1292 = vadd.xlane.f32.xlu0 %v1261
        %v1293 = vpop.xlane.xlu0 %1292
        %1294 = vadd.xlane.f32.xlu0 %v1263
        %v1295 = vpop.xlane.xlu0 %1294
        %1296 = vadd.xlane.f32.xlu0 %v1265
        %v1297 = vpop.xlane.xlu0 %1296
        %1298 = vadd.xlane.f32.xlu0 %v1267
        %v1299 = vpop.xlane.xlu0 %1298
        %1300 = vadd.xlane.f32.xlu0 %v1269
        %v1301 = vpop.xlane.xlu0 %1300
        %1302 = vadd.xlane.f32.xlu0 %v1271
        %v1303 = vpop.xlane.xlu0 %1302
        %1304 = vadd.xlane.f32.xlu0 %v1273
        %v1305 = vpop.xlane.xlu0 %1304
        %1306 = vadd.xlane.f32.xlu0 %v1275
        %v1307 = vpop.xlane.xlu0 %1306
        %1308 = vadd.xlane.f32.xlu0 %v1277
        %v1309 = vpop.xlane.xlu0 %1308
        %1310 = vadd.xlane.f32.xlu0 %v1279
        %v1311 = vpop.xlane.xlu0 %1310
        %1312 = vadd.xlane.f32.xlu0 %v1281
        %v1313 = vpop.xlane.xlu0 %1312
        %1314 = vadd.xlane.f32.xlu0 %v1283
        %v1315 = vpop.xlane.xlu0 %1314
        %1316 = vadd.xlane.f32.xlu0 %v1285
        %v1317 = vpop.xlane.xlu0 %1316
        %1318 = vadd.xlane.f32.xlu0 %v1287
        %v1319 = vpop.xlane.xlu0 %1318
        %1320 = vadd.xlane.f32.xlu0 %v1289
        %v1321 = vpop.xlane.xlu0 %1320
        %v1322 = vpack.c.bf16 %v1261, %v1259
        %v1323 = vpack.c.bf16 %v1265, %v1263
        %v1324 = vpack.c.bf16 %v1269, %v1267
        %v1325 = vpack.c.bf16 %v1273, %v1271
        %v1326 = vpack.c.bf16 %v1277, %v1275
        %v1327 = vpack.c.bf16 %v1281, %v1279
        %v1328 = vpack.c.bf16 %v1285, %v1283
        %v1329 = vpack.c.bf16 %v1289, %v1287
        %1330 = vmatprep.subr.bf16.mxu0 0
        %1331 = vmatpush1.bf16.msra.mxu0 %v991
        %1332 = vmatprep.subr.bf16.mxu0 0
        %1333 = vmatpush1.bf16.msra.mxu0 %v994
        %1334 = vmatprep.subr.bf16.mxu0 0
        %1335 = vmatpush1.bf16.msra.mxu0 %v997
        %1336 = vmatprep.subr.bf16.mxu0 0
        %1337 = vmatpush1.bf16.msra.mxu0 %v1000
        %1338 = vmatprep.subr.bf16.mxu0 0
        %1339 = vmatpush1.bf16.msra.mxu0 %v1003
        %1340 = vmatprep.subr.bf16.mxu0 0
        %1341 = vmatpush1.bf16.msra.mxu0 %v1006
        %1342 = vmatprep.subr.bf16.mxu0 0
        %1343 = vmatpush1.bf16.msra.mxu0 %v1009
        %1344 = vmatprep.subr.bf16.mxu0 0
        %1345 = vmatpush1.bf16.msra.mxu0 %v1012
        %1346 = vmatprep.subr.bf16.mxu0 0
        %1347 = vmatpush1.bf16.msra.mxu0 0
        %1348 = vmatprep.subr.bf16.mxu0 0
        %1349 = vmatpush1.bf16.msra.mxu0 0
        %1350 = vmatprep.subr.bf16.mxu0 0
        %1351 = vmatpush1.bf16.msra.mxu0 0
        %1352 = vmatprep.subr.bf16.mxu0 0
        %1353 = vmatpush1.bf16.msra.mxu0 0
        %1354 = vmatprep.subr.bf16.mxu0 0
        %1355 = vmatpush1.bf16.msra.mxu0 0
        %1356 = vmatprep.subr.bf16.mxu0 0
        %1357 = vmatpush1.bf16.msra.mxu0 0
        %1358 = vmatprep.subr.bf16.mxu0 0
        %1359 = vmatpush1.bf16.msra.mxu0 0
        %1360 = vmatprep.subr.bf16.mxu0 0
        %1361 = vmatpush1.bf16.msra.mxu0 0
        %1362 = vmatprep.mubr.bf16.mxu0 0
        %1363 = vmatmul.mubr.bf16.gmra.mrb[0].mxu0 %v1322
        %v1364 = vpop.f32.mrb[0].mxu0
        %v1365 = vadd.f32 0.0, %v1364
        %v1366 = vpop.f32.mrb[0].mxu0
        %v1367 = vpop.f32.mrb[0].mxu0
        %v1368 = vadd.f32 0.0, %v1367
        %v1369 = vpop.f32.mrb[0].mxu0
        %1370 = vmatprep.mubr.bf16.mxu0 0
        %1371 = vmatmul.mubr.bf16.gmra.mrb[0].mxu0 %v1323
        %v1372 = vpop.f32.mrb[0].mxu0
        %v1373 = vadd.f32 0.0, %v1372
        %v1374 = vpop.f32.mrb[0].mxu0
        %v1375 = vpop.f32.mrb[0].mxu0
        %v1376 = vadd.f32 0.0, %v1375
        %v1377 = vpop.f32.mrb[0].mxu0
        %1378 = vmatprep.mubr.bf16.mxu0 0
        %1379 = vmatmul.mubr.bf16.gmra.mrb[0].mxu0 %v1324
        %v1380 = vpop.f32.mrb[0].mxu0
        %v1381 = vadd.f32 0.0, %v1380
        %v1382 = vpop.f32.mrb[0].mxu0
        %v1383 = vpop.f32.mrb[0].mxu0
        %v1384 = vadd.f32 0.0, %v1383
        %v1385 = vpop.f32.mrb[0].mxu0
        %1386 = vmatprep.mubr.bf16.mxu0 0
        %1387 = vmatmul.mubr.bf16.gmra.mrb[0].mxu0 %v1325
        %v1388 = vpop.f32.mrb[0].mxu0
        %v1389 = vadd.f32 0.0, %v1388
        %v1390 = vpop.f32.mrb[0].mxu0
        %v1391 = vpop.f32.mrb[0].mxu0
        %v1392 = vadd.f32 0.0, %v1391
        %v1393 = vpop.f32.mrb[0].mxu0
        %1394 = vmatprep.mubr.bf16.mxu0 0
        %1395 = vmatmul.mubr.bf16.gmra.mrb[0].mxu0 %v1326
        %v1396 = vpop.f32.mrb[0].mxu0
        %v1397 = vadd.f32 0.0, %v1396
        %v1398 = vpop.f32.mrb[0].mxu0
        %v1399 = vpop.f32.mrb[0].mxu0
        %v1400 = vadd.f32 0.0, %v1399
        %v1401 = vpop.f32.mrb[0].mxu0
        %1402 = vmatprep.mubr.bf16.mxu0 0
        %1403 = vmatmul.mubr.bf16.gmra.mrb[0].mxu0 %v1327
        %v1404 = vpop.f32.mrb[0].mxu0
        %v1405 = vadd.f32 0.0, %v1404
        %v1406 = vpop.f32.mrb[0].mxu0
        %v1407 = vpop.f32.mrb[0].mxu0
        %v1408 = vadd.f32 0.0, %v1407
        %v1409 = vpop.f32.mrb[0].mxu0
        %1410 = vmatprep.mubr.bf16.mxu0 0
        %1411 = vmatmul.mubr.bf16.gmra.mrb[0].mxu0 %v1328
        %v1412 = vpop.f32.mrb[0].mxu0
        %v1413 = vadd.f32 0.0, %v1412
        %v1414 = vpop.f32.mrb[0].mxu0
        %v1415 = vpop.f32.mrb[0].mxu0
        %v1416 = vadd.f32 0.0, %v1415
        %v1417 = vpop.f32.mrb[0].mxu0
        %1418 = vmatprep.mubr.bf16.mxu0 0
        %1419 = vmatmul.mubr.bf16.gmra.mrb[0].mxu0 %v1329
        %v1420 = vpop.f32.mrb[0].mxu0
        %v1421 = vadd.f32 0.0, %v1420
        %v1422 = vpop.f32.mrb[0].mxu0
        %v1423 = vpop.f32.mrb[0].mxu0
        %v1424 = vadd.f32 0.0, %v1423
        %v1425 = vpop.f32.mrb[0].mxu0
        %1426 = vdwg.mxu0
        %v1427 = vrcp.pop %v1291
        %v1428 = vrcp.pop %v1293
        %v1429 = vrcp.pop %v1295
        %v1430 = vrcp.pop %v1297
        %v1431 = vrcp.pop %v1299
        %v1432 = vrcp.pop %v1301
        %v1433 = vrcp.pop %v1303
        %v1434 = vrcp.pop %v1305
        %v1435 = vrcp.pop %v1307
        %v1436 = vrcp.pop %v1309
        %v1437 = vrcp.pop %v1311
        %v1438 = vrcp.pop %v1313
        %v1439 = vrcp.pop %v1315
        %v1440 = vrcp.pop %v1317
        %v1441 = vrcp.pop %v1319
        %v1442 = vrcp.pop %v1321
        %v1443 = vmul.f32 %v1365, %v1427
        %v1444 = vmul.f32 %v1368, %v1428
        %v1445 = vmul.f32 %v1373, %v1429
        %v1446 = vmul.f32 %v1376, %v1430
        %v1447 = vmul.f32 %v1381, %v1431
        %v1448 = vmul.f32 %v1384, %v1432
        %v1449 = vmul.f32 %v1389, %v1433
        %v1450 = vmul.f32 %v1392, %v1434
        %v1451 = vmul.f32 %v1397, %v1435
        %v1452 = vmul.f32 %v1400, %v1436
        %v1453 = vmul.f32 %v1405, %v1437
        %v1454 = vmul.f32 %v1408, %v1438
        %v1455 = vmul.f32 %v1413, %v1439
        %v1456 = vmul.f32 %v1416, %v1440
        %v1457 = vmul.f32 %v1421, %v1441
        %v1458 = vmul.f32 %v1424, %v1442
        %1467 = vrot.lane.b32.xlu0 %v989, 96
        %v1468 = vpop.permute.xlu0 %1467
        %1469 = vrot.lane.b32.xlu0 %v992, 96
        %v1470 = vpop.permute.xlu0 %1469
        %1471 = vrot.lane.b32.xlu0 %v995, 96
        %v1472 = vpop.permute.xlu0 %1471
        %1473 = vrot.lane.b32.xlu0 %v998, 96
        %v1474 = vpop.permute.xlu0 %1473
        %1475 = vrot.lane.b32.xlu0 %v1001, 96
        %v1476 = vpop.permute.xlu0 %1475
        %1477 = vrot.lane.b32.xlu0 %v1004, 96
        %v1478 = vpop.permute.xlu0 %1477
        %1479 = vrot.lane.b32.xlu0 %v1007, 96
        %v1480 = vpop.permute.xlu0 %1479
        %1481 = vrot.lane.b32.xlu0 %v1010, 96
        %v1482 = vpop.permute.xlu0 %1481
        %1491 = vrot.lane.b32.xlu0 %v990, 96
        %v1492 = vpop.permute.xlu0 %1491
        %1493 = vrot.lane.b32.xlu0 %v993, 96
        %v1494 = vpop.permute.xlu0 %1493
        %1495 = vrot.lane.b32.xlu0 %v996, 96
        %v1496 = vpop.permute.xlu0 %1495
        %1497 = vrot.lane.b32.xlu0 %v999, 96
        %v1498 = vpop.permute.xlu0 %1497
        %1499 = vrot.lane.b32.xlu0 %v1002, 96
        %v1500 = vpop.permute.xlu0 %1499
        %1501 = vrot.lane.b32.xlu0 %v1005, 96
        %v1502 = vpop.permute.xlu0 %1501
        %1503 = vrot.lane.b32.xlu0 %v1008, 96
        %v1504 = vpop.permute.xlu0 %1503
        %1505 = vrot.lane.b32.xlu0 %v1011, 96
        %v1506 = vpop.permute.xlu0 %1505
        %v1508 = vsel %vm1048, %v1468, 0
        %v1511 = vsel %vm1048, %v1470, 0
        %v1514 = vsel %vm1048, %v1472, 0
        %v1517 = vsel %vm1048, %v1474, 0
        %v1520 = vsel %vm1048, %v1476, 0
        %v1523 = vsel %vm1048, %v1478, 0
        %v1526 = vsel %vm1048, %v1480, 0
        %v1529 = vsel %vm1048, %v1482, 0
        %v1532 = vsel %vm1048, %v1492, 0
        %v1535 = vsel %vm1048, %v1494, 0
        %v1538 = vsel %vm1048, %v1496, 0
        %v1541 = vsel %vm1048, %v1498, 0
        %v1544 = vsel %vm1048, %v1500, 0
        %v1547 = vsel %vm1048, %v1502, 0
        %v1550 = vsel %vm1048, %v1504, 0
        %v1553 = vsel %vm1048, %v1506, 0
        %1555 = vmatprep.subr.bf16.mxu0 0
        %1556 = vmatpush1.bf16.xpose.msra.mxu0 %v1532
        %1557 = vmatprep.subr.bf16.mxu0 0
        %1558 = vmatpush1.bf16.xpose.msra.mxu0 %v1535
        %1559 = vmatprep.subr.bf16.mxu0 0
        %1560 = vmatpush1.bf16.xpose.msra.mxu0 %v1538
        %1561 = vmatprep.subr.bf16.mxu0 0
        %1562 = vmatpush1.bf16.xpose.msra.mxu0 %v1541
        %1563 = vmatprep.subr.bf16.mxu0 0
        %1564 = vmatpush1.bf16.xpose.msra.mxu0 %v1544
        %1565 = vmatprep.subr.bf16.mxu0 0
        %1566 = vmatpush1.bf16.xpose.msra.mxu0 %v1547
        %1567 = vmatprep.subr.bf16.mxu0 0
        %1568 = vmatpush1.bf16.xpose.msra.mxu0 %v1550
        %1569 = vmatprep.subr.bf16.mxu0 0
        %1570 = vmatpush1.bf16.xpose.msra.mxu0 %v1553
        %1571 = vmatprep.subr.bf16.mxu0 0
        %1572 = vmatpush1.bf16.xpose.msra.mxu0 0
        %1573 = vmatprep.subr.bf16.mxu0 0
        %1574 = vmatpush1.bf16.xpose.msra.mxu0 0
        %1575 = vmatprep.subr.bf16.mxu0 0
        %1576 = vmatpush1.bf16.xpose.msra.mxu0 0
        %1577 = vmatprep.subr.bf16.mxu0 0
        %1578 = vmatpush1.bf16.xpose.msra.mxu0 0
        %1579 = vmatprep.subr.bf16.mxu0 0
        %1580 = vmatpush1.bf16.xpose.msra.mxu0 0
        %1581 = vmatprep.subr.bf16.mxu0 0
        %1582 = vmatpush1.bf16.xpose.msra.mxu0 0
        %1583 = vmatprep.subr.bf16.mxu0 0
        %1584 = vmatpush1.bf16.xpose.msra.mxu0 0
        %1585 = vmatprep.subr.bf16.mxu0 0
        %1586 = vmatpush1.bf16.xpose.msra.mxu0 0
        %1587 = vmatprep.mubr.bf16.mxu0 0
        %1588 = vmatmul.mubr.bf16.gmra.mrb[0].mxu0 %v1508
        %v1589 = vpop.f32.mrb[0].mxu0
        %v1590 = vadd.f32 0.0, %v1589
        %v1591 = vpop.f32.mrb[0].mxu0
        %v1592 = vpop.f32.mrb[0].mxu0
        %v1593 = vadd.f32 0.0, %v1592
        %v1594 = vpop.f32.mrb[0].mxu0
        %1595 = vmatprep.mubr.bf16.mxu0 0
        %1596 = vmatmul.mubr.bf16.gmra.mrb[0].mxu0 %v1511
        %v1597 = vpop.f32.mrb[0].mxu0
        %v1598 = vadd.f32 0.0, %v1597
        %v1599 = vpop.f32.mrb[0].mxu0
        %v1600 = vpop.f32.mrb[0].mxu0
        %v1601 = vadd.f32 0.0, %v1600
        %v1602 = vpop.f32.mrb[0].mxu0
        %1603 = vmatprep.mubr.bf16.mxu0 0
        %1604 = vmatmul.mubr.bf16.gmra.mrb[0].mxu0 %v1514
        %v1605 = vpop.f32.mrb[0].mxu0
        %v1606 = vadd.f32 0.0, %v1605
        %v1607 = vpop.f32.mrb[0].mxu0
        %v1608 = vpop.f32.mrb[0].mxu0
        %v1609 = vadd.f32 0.0, %v1608
        %v1610 = vpop.f32.mrb[0].mxu0
        %1611 = vmatprep.mubr.bf16.mxu0 0
        %1612 = vmatmul.mubr.bf16.gmra.mrb[0].mxu0 %v1517
        %v1613 = vpop.f32.mrb[0].mxu0
        %v1614 = vadd.f32 0.0, %v1613
        %v1615 = vpop.f32.mrb[0].mxu0
        %v1616 = vpop.f32.mrb[0].mxu0
        %v1617 = vadd.f32 0.0, %v1616
        %v1618 = vpop.f32.mrb[0].mxu0
        %1619 = vmatprep.mubr.bf16.mxu0 0
        %1620 = vmatmul.mubr.bf16.gmra.mrb[0].mxu0 %v1520
        %v1621 = vpop.f32.mrb[0].mxu0
        %v1622 = vadd.f32 0.0, %v1621
        %v1623 = vpop.f32.mrb[0].mxu0
        %v1624 = vpop.f32.mrb[0].mxu0
        %v1625 = vadd.f32 0.0, %v1624
        %v1626 = vpop.f32.mrb[0].mxu0
        %1627 = vmatprep.mubr.bf16.mxu0 0
        %1628 = vmatmul.mubr.bf16.gmra.mrb[0].mxu0 %v1523
        %v1629 = vpop.f32.mrb[0].mxu0
        %v1630 = vadd.f32 0.0, %v1629
        %v1631 = vpop.f32.mrb[0].mxu0
        %v1632 = vpop.f32.mrb[0].mxu0
        %v1633 = vadd.f32 0.0, %v1632
        %v1634 = vpop.f32.mrb[0].mxu0
        %1635 = vmatprep.mubr.bf16.mxu0 0
        %1636 = vmatmul.mubr.bf16.gmra.mrb[0].mxu0 %v1526
        %v1637 = vpop.f32.mrb[0].mxu0
        %v1638 = vadd.f32 0.0, %v1637
        %v1639 = vpop.f32.mrb[0].mxu0
        %v1640 = vpop.f32.mrb[0].mxu0
        %v1641 = vadd.f32 0.0, %v1640
        %v1642 = vpop.f32.mrb[0].mxu0
        %1643 = vmatprep.mubr.bf16.mxu0 0
        %1644 = vmatmul.mubr.bf16.gmra.mrb[0].mxu0 %v1529
        %v1645 = vpop.f32.mrb[0].mxu0
        %v1646 = vadd.f32 0.0, %v1645
        %v1647 = vpop.f32.mrb[0].mxu0
        %v1648 = vpop.f32.mrb[0].mxu0
        %v1649 = vadd.f32 0.0, %v1648
        %v1650 = vpop.f32.mrb[0].mxu0
        %1651 = vdwg.mxu0
        %v1652 = vsel %vm1032, %v1590, -1e+30
        %v1653 = vsel %vm1033, %v1593, -1e+30
        %v1654 = vsel %vm1034, %v1598, -1e+30
        %v1655 = vsel %vm1035, %v1601, -1e+30
        %v1656 = vsel %vm1036, %v1606, -1e+30
        %v1657 = vsel %vm1037, %v1609, -1e+30
        %v1658 = vsel %vm1038, %v1614, -1e+30
        %v1659 = vsel %vm1039, %v1617, -1e+30
        %v1660 = vsel %vm1040, %v1622, -1e+30
        %v1661 = vsel %vm1041, %v1625, -1e+30
        %v1662 = vsel %vm1042, %v1630, -1e+30
        %v1663 = vsel %vm1043, %v1633, -1e+30
        %v1664 = vsel %vm1044, %v1638, -1e+30
        %v1665 = vsel %vm1045, %v1641, -1e+30
        %v1666 = vsel %vm1046, %v1646, -1e+30
        %v1667 = vsel %vm1047, %v1649, -1e+30
        %1668 = vmax.xlane.f32.xlu0 %v1652
        %v1669 = vpop.xlane.xlu0 %1668
        %1670 = vmax.xlane.f32.xlu0 %v1653
        %v1671 = vpop.xlane.xlu0 %1670
        %1672 = vmax.xlane.f32.xlu0 %v1654
        %v1673 = vpop.xlane.xlu0 %1672
        %1674 = vmax.xlane.f32.xlu0 %v1655
        %v1675 = vpop.xlane.xlu0 %1674
        %1676 = vmax.xlane.f32.xlu0 %v1656
        %v1677 = vpop.xlane.xlu0 %1676
        %1678 = vmax.xlane.f32.xlu0 %v1657
        %v1679 = vpop.xlane.xlu0 %1678
        %1680 = vmax.xlane.f32.xlu0 %v1658
        %v1681 = vpop.xlane.xlu0 %1680
        %1682 = vmax.xlane.f32.xlu0 %v1659
        %v1683 = vpop.xlane.xlu0 %1682
        %1684 = vmax.xlane.f32.xlu0 %v1660
        %v1685 = vpop.xlane.xlu0 %1684
        %1686 = vmax.xlane.f32.xlu0 %v1661
        %v1687 = vpop.xlane.xlu0 %1686
        %1688 = vmax.xlane.f32.xlu0 %v1662
        %v1689 = vpop.xlane.xlu0 %1688
        %1690 = vmax.xlane.f32.xlu0 %v1663
        %v1691 = vpop.xlane.xlu0 %1690
        %1692 = vmax.xlane.f32.xlu0 %v1664
        %v1693 = vpop.xlane.xlu0 %1692
        %1694 = vmax.xlane.f32.xlu0 %v1665
        %v1695 = vpop.xlane.xlu0 %1694
        %1696 = vmax.xlane.f32.xlu0 %v1666
        %v1697 = vpop.xlane.xlu0 %1696
        %1698 = vmax.xlane.f32.xlu0 %v1667
        %v1699 = vpop.xlane.xlu0 %1698
        %v1700 = vsub.f32 %v1652, %v1669
        %v1701 = vsub.f32 %v1653, %v1671
        %v1702 = vsub.f32 %v1654, %v1673
        %v1703 = vsub.f32 %v1655, %v1675
        %v1704 = vsub.f32 %v1656, %v1677
        %v1705 = vsub.f32 %v1657, %v1679
        %v1706 = vsub.f32 %v1658, %v1681
        %v1707 = vsub.f32 %v1659, %v1683
        %v1708 = vsub.f32 %v1660, %v1685
        %v1709 = vsub.f32 %v1661, %v1687
        %v1710 = vsub.f32 %v1662, %v1689
        %v1711 = vsub.f32 %v1663, %v1691
        %v1712 = vsub.f32 %v1664, %v1693
        %v1713 = vsub.f32 %v1665, %v1695
        %v1714 = vsub.f32 %v1666, %v1697
        %v1715 = vsub.f32 %v1667, %v1699
        %v1716 = vmul.f32 %v1700, 1.442695
        %v1717 = vpow.pop %v1716
        %v1718 = vmul.f32 %v1701, 1.442695
        %v1719 = vpow.pop %v1718
        %v1720 = vmul.f32 %v1702, 1.442695
        %v1721 = vpow.pop %v1720
        %v1722 = vmul.f32 %v1703, 1.442695
        %v1723 = vpow.pop %v1722
        %v1724 = vmul.f32 %v1704, 1.442695
        %v1725 = vpow.pop %v1724
        %v1726 = vmul.f32 %v1705, 1.442695
        %v1727 = vpow.pop %v1726
        %v1728 = vmul.f32 %v1706, 1.442695
        %v1729 = vpow.pop %v1728
        %v1730 = vmul.f32 %v1707, 1.442695
        %v1731 = vpow.pop %v1730
        %v1732 = vmul.f32 %v1708, 1.442695
        %v1733 = vpow.pop %v1732
        %v1734 = vmul.f32 %v1709, 1.442695
        %v1735 = vpow.pop %v1734
        %v1736 = vmul.f32 %v1710, 1.442695
        %v1737 = vpow.pop %v1736
        %v1738 = vmul.f32 %v1711, 1.442695
        %v1739 = vpow.pop %v1738
        %v1740 = vmul.f32 %v1712, 1.442695
        %v1741 = vpow.pop %v1740
        %v1742 = vmul.f32 %v1713, 1.442695
        %v1743 = vpow.pop %v1742
        %v1744 = vmul.f32 %v1714, 1.442695
        %v1745 = vpow.pop %v1744
        %v1746 = vmul.f32 %v1715, 1.442695
        %v1747 = vpow.pop %v1746
        %1748 = vadd.xlane.f32.xlu0 %v1717
        %v1749 = vpop.xlane.xlu0 %1748
        %1750 = vadd.xlane.f32.xlu0 %v1719
        %v1751 = vpop.xlane.xlu0 %1750
        %1752 = vadd.xlane.f32.xlu0 %v1721
        %v1753 = vpop.xlane.xlu0 %1752
        %1754 = vadd.xlane.f32.xlu0 %v1723
        %v1755 = vpop.xlane.xlu0 %1754
        %1756 = vadd.xlane.f32.xlu0 %v1725
        %v1757 = vpop.xlane.xlu0 %1756
        %1758 = vadd.xlane.f32.xlu0 %v1727
        %v1759 = vpop.xlane.xlu0 %1758
        %1760 = vadd.xlane.f32.xlu0 %v1729
        %v1761 = vpop.xlane.xlu0 %1760
        %1762 = vadd.xlane.f32.xlu0 %v1731
        %v1763 = vpop.xlane.xlu0 %1762
        %1764 = vadd.xlane.f32.xlu0 %v1733
        %v1765 = vpop.xlane.xlu0 %1764
        %1766 = vadd.xlane.f32.xlu0 %v1735
        %v1767 = vpop.xlane.xlu0 %1766
        %1768 = vadd.xlane.f32.xlu0 %v1737
        %v1769 = vpop.xlane.xlu0 %1768
        %1770 = vadd.xlane.f32.xlu0 %v1739
        %v1771 = vpop.xlane.xlu0 %1770
        %1772 = vadd.xlane.f32.xlu0 %v1741
        %v1773 = vpop.xlane.xlu0 %1772
        %1774 = vadd.xlane.f32.xlu0 %v1743
        %v1775 = vpop.xlane.xlu0 %1774
        %1776 = vadd.xlane.f32.xlu0 %v1745
        %v1777 = vpop.xlane.xlu0 %1776
        %1778 = vadd.xlane.f32.xlu0 %v1747
        %v1779 = vpop.xlane.xlu0 %1778
        %v1780 = vpack.c.bf16 %v1719, %v1717
        %v1781 = vpack.c.bf16 %v1723, %v1721
        %v1782 = vpack.c.bf16 %v1727, %v1725
        %v1783 = vpack.c.bf16 %v1731, %v1729
        %v1784 = vpack.c.bf16 %v1735, %v1733
        %v1785 = vpack.c.bf16 %v1739, %v1737
        %v1786 = vpack.c.bf16 %v1743, %v1741
        %v1787 = vpack.c.bf16 %v1747, %v1745
        %1796 = vrot.lane.b32.xlu0 %v991, 96
        %v1797 = vpop.permute.xlu0 %1796
        %1798 = vrot.lane.b32.xlu0 %v994, 96
        %v1799 = vpop.permute.xlu0 %1798
        %1800 = vrot.lane.b32.xlu0 %v997, 96
        %v1801 = vpop.permute.xlu0 %1800
        %1802 = vrot.lane.b32.xlu0 %v1000, 96
        %v1803 = vpop.permute.xlu0 %1802
        %1804 = vrot.lane.b32.xlu0 %v1003, 96
        %v1805 = vpop.permute.xlu0 %1804
        %1806 = vrot.lane.b32.xlu0 %v1006, 96
        %v1807 = vpop.permute.xlu0 %1806
        %1808 = vrot.lane.b32.xlu0 %v1009, 96
        %v1809 = vpop.permute.xlu0 %1808
        %1810 = vrot.lane.b32.xlu0 %v1012, 96
        %v1811 = vpop.permute.xlu0 %1810
        %1820 = vmatprep.subr.bf16.mxu0 0
        %1821 = vmatpush1.bf16.msra.mxu0 %v1797
        %1822 = vmatprep.subr.bf16.mxu0 0
        %1823 = vmatpush1.bf16.msra.mxu0 %v1799
        %1824 = vmatprep.subr.bf16.mxu0 0
        %1825 = vmatpush1.bf16.msra.mxu0 %v1801
        %1826 = vmatprep.subr.bf16.mxu0 0
        %1827 = vmatpush1.bf16.msra.mxu0 %v1803
        %1828 = vmatprep.subr.bf16.mxu0 0
        %1829 = vmatpush1.bf16.msra.mxu0 %v1805
        %1830 = vmatprep.subr.bf16.mxu0 0
        %1831 = vmatpush1.bf16.msra.mxu0 %v1807
        %1832 = vmatprep.subr.bf16.mxu0 0
        %1833 = vmatpush1.bf16.msra.mxu0 %v1809
        %1834 = vmatprep.subr.bf16.mxu0 0
        %1835 = vmatpush1.bf16.msra.mxu0 %v1811
        %1836 = vmatprep.subr.bf16.mxu0 0
        %1837 = vmatpush1.bf16.msra.mxu0 0
        %1838 = vmatprep.subr.bf16.mxu0 0
        %1839 = vmatpush1.bf16.msra.mxu0 0
        %1840 = vmatprep.subr.bf16.mxu0 0
        %1841 = vmatpush1.bf16.msra.mxu0 0
        %1842 = vmatprep.subr.bf16.mxu0 0
        %1843 = vmatpush1.bf16.msra.mxu0 0
        %1844 = vmatprep.subr.bf16.mxu0 0
        %1845 = vmatpush1.bf16.msra.mxu0 0
        %1846 = vmatprep.subr.bf16.mxu0 0
        %1847 = vmatpush1.bf16.msra.mxu0 0
        %1848 = vmatprep.subr.bf16.mxu0 0
        %1849 = vmatpush1.bf16.msra.mxu0 0
        %1850 = vmatprep.subr.bf16.mxu0 0
        %1851 = vmatpush1.bf16.msra.mxu0 0
        %1852 = vmatprep.mubr.bf16.mxu0 0
        %1853 = vmatmul.mubr.bf16.gmra.mrb[0].mxu0 %v1780
        %v1854 = vpop.f32.mrb[0].mxu0
        %v1855 = vadd.f32 0.0, %v1854
        %v1856 = vpop.f32.mrb[0].mxu0
        %v1857 = vpop.f32.mrb[0].mxu0
        %v1858 = vadd.f32 0.0, %v1857
        %v1859 = vpop.f32.mrb[0].mxu0
        %1860 = vmatprep.mubr.bf16.mxu0 0
        %1861 = vmatmul.mubr.bf16.gmra.mrb[0].mxu0 %v1781
        %v1862 = vpop.f32.mrb[0].mxu0
        %v1863 = vadd.f32 0.0, %v1862
        %v1864 = vpop.f32.mrb[0].mxu0
        %v1865 = vpop.f32.mrb[0].mxu0
        %v1866 = vadd.f32 0.0, %v1865
        %v1867 = vpop.f32.mrb[0].mxu0
        %1868 = vmatprep.mubr.bf16.mxu0 0
        %1869 = vmatmul.mubr.bf16.gmra.mrb[0].mxu0 %v1782
        %v1870 = vpop.f32.mrb[0].mxu0
        %v1871 = vadd.f32 0.0, %v1870
        %v1872 = vpop.f32.mrb[0].mxu0
        %v1873 = vpop.f32.mrb[0].mxu0
        %v1874 = vadd.f32 0.0, %v1873
        %v1875 = vpop.f32.mrb[0].mxu0
        %1876 = vmatprep.mubr.bf16.mxu0 0
        %1877 = vmatmul.mubr.bf16.gmra.mrb[0].mxu0 %v1783
        %v1878 = vpop.f32.mrb[0].mxu0
        %v1879 = vadd.f32 0.0, %v1878
        %v1880 = vpop.f32.mrb[0].mxu0
        %v1881 = vpop.f32.mrb[0].mxu0
        %v1882 = vadd.f32 0.0, %v1881
        %v1883 = vpop.f32.mrb[0].mxu0
        %1884 = vmatprep.mubr.bf16.mxu0 0
        %1885 = vmatmul.mubr.bf16.gmra.mrb[0].mxu0 %v1784
        %v1886 = vpop.f32.mrb[0].mxu0
        %v1887 = vadd.f32 0.0, %v1886
        %v1888 = vpop.f32.mrb[0].mxu0
        %v1889 = vpop.f32.mrb[0].mxu0
        %v1890 = vadd.f32 0.0, %v1889
        %v1891 = vpop.f32.mrb[0].mxu0
        %1892 = vmatprep.mubr.bf16.mxu0 0
        %1893 = vmatmul.mubr.bf16.gmra.mrb[0].mxu0 %v1785
        %v1894 = vpop.f32.mrb[0].mxu0
        %v1895 = vadd.f32 0.0, %v1894
        %v1896 = vpop.f32.mrb[0].mxu0
        %v1897 = vpop.f32.mrb[0].mxu0
        %v1898 = vadd.f32 0.0, %v1897
        %v1899 = vpop.f32.mrb[0].mxu0
        %1900 = vmatprep.mubr.bf16.mxu0 0
        %1901 = vmatmul.mubr.bf16.gmra.mrb[0].mxu0 %v1786
        %v1902 = vpop.f32.mrb[0].mxu0
        %v1903 = vadd.f32 0.0, %v1902
        %v1904 = vpop.f32.mrb[0].mxu0
        %v1905 = vpop.f32.mrb[0].mxu0
        %v1906 = vadd.f32 0.0, %v1905
        %v1907 = vpop.f32.mrb[0].mxu0
        %1908 = vmatprep.mubr.bf16.mxu0 0
        %1909 = vmatmul.mubr.bf16.gmra.mrb[0].mxu0 %v1787
        %v1910 = vpop.f32.mrb[0].mxu0
        %v1911 = vadd.f32 0.0, %v1910
        %v1912 = vpop.f32.mrb[0].mxu0
        %v1913 = vpop.f32.mrb[0].mxu0
        %v1914 = vadd.f32 0.0, %v1913
        %v1915 = vpop.f32.mrb[0].mxu0
        %1916 = vdwg.mxu0
        %v1917 = vrcp.pop %v1749
        %v1918 = vrcp.pop %v1751
        %v1919 = vrcp.pop %v1753
        %v1920 = vrcp.pop %v1755
        %v1921 = vrcp.pop %v1757
        %v1922 = vrcp.pop %v1759
        %v1923 = vrcp.pop %v1761
        %v1924 = vrcp.pop %v1763
        %v1925 = vrcp.pop %v1765
        %v1926 = vrcp.pop %v1767
        %v1927 = vrcp.pop %v1769
        %v1928 = vrcp.pop %v1771
        %v1929 = vrcp.pop %v1773
        %v1930 = vrcp.pop %v1775
        %v1931 = vrcp.pop %v1777
        %v1932 = vrcp.pop %v1779
        %v1933 = vmul.f32 %v1855, %v1917
        %v1934 = vmul.f32 %v1858, %v1918
        %v1935 = vmul.f32 %v1863, %v1919
        %v1936 = vmul.f32 %v1866, %v1920
        %v1937 = vmul.f32 %v1871, %v1921
        %v1938 = vmul.f32 %v1874, %v1922
        %v1939 = vmul.f32 %v1879, %v1923
        %v1940 = vmul.f32 %v1882, %v1924
        %v1941 = vmul.f32 %v1887, %v1925
        %v1942 = vmul.f32 %v1890, %v1926
        %v1943 = vmul.f32 %v1895, %v1927
        %v1944 = vmul.f32 %v1898, %v1928
        %v1945 = vmul.f32 %v1903, %v1929
        %v1946 = vmul.f32 %v1906, %v1930
        %v1947 = vmul.f32 %v1911, %v1931
        %v1948 = vmul.f32 %v1914, %v1932
        %1949 = vrot.lane.b32.xlu0 %v989, 64
        %v1950 = vpop.permute.xlu0 %1949
        %1951 = vrot.lane.b32.xlu0 %v992, 64
        %v1952 = vpop.permute.xlu0 %1951
        %1953 = vrot.lane.b32.xlu0 %v995, 64
        %v1954 = vpop.permute.xlu0 %1953
        %1955 = vrot.lane.b32.xlu0 %v998, 64
        %v1956 = vpop.permute.xlu0 %1955
        %1957 = vrot.lane.b32.xlu0 %v1001, 64
        %v1958 = vpop.permute.xlu0 %1957
        %1959 = vrot.lane.b32.xlu0 %v1004, 64
        %v1960 = vpop.permute.xlu0 %1959
        %1961 = vrot.lane.b32.xlu0 %v1007, 64
        %v1962 = vpop.permute.xlu0 %1961
        %1963 = vrot.lane.b32.xlu0 %v1010, 64
        %v1964 = vpop.permute.xlu0 %1963
        %1965 = vrot.lane.b32.xlu0 %v990, 64
        %v1966 = vpop.permute.xlu0 %1965
        %1967 = vrot.lane.b32.xlu0 %v993, 64
        %v1968 = vpop.permute.xlu0 %1967
        %1969 = vrot.lane.b32.xlu0 %v996, 64
        %v1970 = vpop.permute.xlu0 %1969
        %1971 = vrot.lane.b32.xlu0 %v999, 64
        %v1972 = vpop.permute.xlu0 %1971
        %1973 = vrot.lane.b32.xlu0 %v1002, 64
        %v1974 = vpop.permute.xlu0 %1973
        %1975 = vrot.lane.b32.xlu0 %v1005, 64
        %v1976 = vpop.permute.xlu0 %1975
        %1977 = vrot.lane.b32.xlu0 %v1008, 64
        %v1978 = vpop.permute.xlu0 %1977
        %1979 = vrot.lane.b32.xlu0 %v1011, 64
        %v1980 = vpop.permute.xlu0 %1979
        %v1982 = vsel %vm1048, %v1950, 0
        %v1985 = vsel %vm1048, %v1952, 0
        %v1988 = vsel %vm1048, %v1954, 0
        %v1991 = vsel %vm1048, %v1956, 0
        %v1994 = vsel %vm1048, %v1958, 0
        %v1997 = vsel %vm1048, %v1960, 0
        %v2000 = vsel %vm1048, %v1962, 0
        %v2003 = vsel %vm1048, %v1964, 0
        %v2006 = vsel %vm1048, %v1966, 0
        %v2009 = vsel %vm1048, %v1968, 0
        %v2012 = vsel %vm1048, %v1970, 0
        %v2015 = vsel %vm1048, %v1972, 0
        %v2018 = vsel %vm1048, %v1974, 0
        %v2021 = vsel %vm1048, %v1976, 0
        %v2024 = vsel %vm1048, %v1978, 0
        %v2027 = vsel %vm1048, %v1980, 0
        %2029 = vmatprep.subr.bf16.mxu0 0
        %2030 = vmatpush1.bf16.xpose.msra.mxu0 %v2006
        %2031 = vmatprep.subr.bf16.mxu0 0
        %2032 = vmatpush1.bf16.xpose.msra.mxu0 %v2009
        %2033 = vmatprep.subr.bf16.mxu0 0
        %2034 = vmatpush1.bf16.xpose.msra.mxu0 %v2012
        %2035 = vmatprep.subr.bf16.mxu0 0
        %2036 = vmatpush1.bf16.xpose.msra.mxu0 %v2015
        %2037 = vmatprep.subr.bf16.mxu0 0
        %2038 = vmatpush1.bf16.xpose.msra.mxu0 %v2018
        %2039 = vmatprep.subr.bf16.mxu0 0
        %2040 = vmatpush1.bf16.xpose.msra.mxu0 %v2021
        %2041 = vmatprep.subr.bf16.mxu0 0
        %2042 = vmatpush1.bf16.xpose.msra.mxu0 %v2024
        %2043 = vmatprep.subr.bf16.mxu0 0
        %2044 = vmatpush1.bf16.xpose.msra.mxu0 %v2027
        %2045 = vmatprep.subr.bf16.mxu0 0
        %2046 = vmatpush1.bf16.xpose.msra.mxu0 0
        %2047 = vmatprep.subr.bf16.mxu0 0
        %2048 = vmatpush1.bf16.xpose.msra.mxu0 0
        %2049 = vmatprep.subr.bf16.mxu0 0
        %2050 = vmatpush1.bf16.xpose.msra.mxu0 0
        %2051 = vmatprep.subr.bf16.mxu0 0
        %2052 = vmatpush1.bf16.xpose.msra.mxu0 0
        %2053 = vmatprep.subr.bf16.mxu0 0
        %2054 = vmatpush1.bf16.xpose.msra.mxu0 0
        %2055 = vmatprep.subr.bf16.mxu0 0
        %2056 = vmatpush1.bf16.xpose.msra.mxu0 0
        %2057 = vmatprep.subr.bf16.mxu0 0
        %2058 = vmatpush1.bf16.xpose.msra.mxu0 0
        %2059 = vmatprep.subr.bf16.mxu0 0
        %2060 = vmatpush1.bf16.xpose.msra.mxu0 0
        %2061 = vmatprep.mubr.bf16.mxu0 0
        %2062 = vmatmul.mubr.bf16.gmra.mrb[0].mxu0 %v1982
        %v2063 = vpop.f32.mrb[0].mxu0
        %v2064 = vadd.f32 0.0, %v2063
        %v2065 = vpop.f32.mrb[0].mxu0
        %v2066 = vpop.f32.mrb[0].mxu0
        %v2067 = vadd.f32 0.0, %v2066
        %v2068 = vpop.f32.mrb[0].mxu0
        %2069 = vmatprep.mubr.bf16.mxu0 0
        %2070 = vmatmul.mubr.bf16.gmra.mrb[0].mxu0 %v1985
        %v2071 = vpop.f32.mrb[0].mxu0
        %v2072 = vadd.f32 0.0, %v2071
        %v2073 = vpop.f32.mrb[0].mxu0
        %v2074 = vpop.f32.mrb[0].mxu0
        %v2075 = vadd.f32 0.0, %v2074
        %v2076 = vpop.f32.mrb[0].mxu0
        %2077 = vmatprep.mubr.bf16.mxu0 0
        %2078 = vmatmul.mubr.bf16.gmra.mrb[0].mxu0 %v1988
        %v2079 = vpop.f32.mrb[0].mxu0
        %v2080 = vadd.f32 0.0, %v2079
        %v2081 = vpop.f32.mrb[0].mxu0
        %v2082 = vpop.f32.mrb[0].mxu0
        %v2083 = vadd.f32 0.0, %v2082
        %v2084 = vpop.f32.mrb[0].mxu0
        %2085 = vmatprep.mubr.bf16.mxu0 0
        %2086 = vmatmul.mubr.bf16.gmra.mrb[0].mxu0 %v1991
        %v2087 = vpop.f32.mrb[0].mxu0
        %v2088 = vadd.f32 0.0, %v2087
        %v2089 = vpop.f32.mrb[0].mxu0
        %v2090 = vpop.f32.mrb[0].mxu0
        %v2091 = vadd.f32 0.0, %v2090
        %v2092 = vpop.f32.mrb[0].mxu0
        %2093 = vmatprep.mubr.bf16.mxu0 0
        %2094 = vmatmul.mubr.bf16.gmra.mrb[0].mxu0 %v1994
        %v2095 = vpop.f32.mrb[0].mxu0
        %v2096 = vadd.f32 0.0, %v2095
        %v2097 = vpop.f32.mrb[0].mxu0
        %v2098 = vpop.f32.mrb[0].mxu0
        %v2099 = vadd.f32 0.0, %v2098
        %v2100 = vpop.f32.mrb[0].mxu0
        %2101 = vmatprep.mubr.bf16.mxu0 0
        %2102 = vmatmul.mubr.bf16.gmra.mrb[0].mxu0 %v1997
        %v2103 = vpop.f32.mrb[0].mxu0
        %v2104 = vadd.f32 0.0, %v2103
        %v2105 = vpop.f32.mrb[0].mxu0
        %v2106 = vpop.f32.mrb[0].mxu0
        %v2107 = vadd.f32 0.0, %v2106
        %v2108 = vpop.f32.mrb[0].mxu0
        %2109 = vmatprep.mubr.bf16.mxu0 0
        %2110 = vmatmul.mubr.bf16.gmra.mrb[0].mxu0 %v2000
        %v2111 = vpop.f32.mrb[0].mxu0
        %v2112 = vadd.f32 0.0, %v2111
        %v2113 = vpop.f32.mrb[0].mxu0
        %v2114 = vpop.f32.mrb[0].mxu0
        %v2115 = vadd.f32 0.0, %v2114
        %v2116 = vpop.f32.mrb[0].mxu0
        %2117 = vmatprep.mubr.bf16.mxu0 0
        %2118 = vmatmul.mubr.bf16.gmra.mrb[0].mxu0 %v2003
        %v2119 = vpop.f32.mrb[0].mxu0
        %v2120 = vadd.f32 0.0, %v2119
        %v2121 = vpop.f32.mrb[0].mxu0
        %v2122 = vpop.f32.mrb[0].mxu0
        %v2123 = vadd.f32 0.0, %v2122
        %v2124 = vpop.f32.mrb[0].mxu0
        %2125 = vdwg.mxu0
        %v2126 = vsel %vm1032, %v2064, -1e+30
        %v2127 = vsel %vm1033, %v2067, -1e+30
        %v2128 = vsel %vm1034, %v2072, -1e+30
        %v2129 = vsel %vm1035, %v2075, -1e+30
        %v2130 = vsel %vm1036, %v2080, -1e+30
        %v2131 = vsel %vm1037, %v2083, -1e+30
        %v2132 = vsel %vm1038, %v2088, -1e+30
        %v2133 = vsel %vm1039, %v2091, -1e+30
        %v2134 = vsel %vm1040, %v2096, -1e+30
        %v2135 = vsel %vm1041, %v2099, -1e+30
        %v2136 = vsel %vm1042, %v2104, -1e+30
        %v2137 = vsel %vm1043, %v2107, -1e+30
        %v2138 = vsel %vm1044, %v2112, -1e+30
        %v2139 = vsel %vm1045, %v2115, -1e+30
        %v2140 = vsel %vm1046, %v2120, -1e+30
        %v2141 = vsel %vm1047, %v2123, -1e+30
        %2142 = vmax.xlane.f32.xlu0 %v2126
        %v2143 = vpop.xlane.xlu0 %2142
        %2144 = vmax.xlane.f32.xlu0 %v2127
        %v2145 = vpop.xlane.xlu0 %2144
        %2146 = vmax.xlane.f32.xlu0 %v2128
        %v2147 = vpop.xlane.xlu0 %2146
        %2148 = vmax.xlane.f32.xlu0 %v2129
        %v2149 = vpop.xlane.xlu0 %2148
        %2150 = vmax.xlane.f32.xlu0 %v2130
        %v2151 = vpop.xlane.xlu0 %2150
        %2152 = vmax.xlane.f32.xlu0 %v2131
        %v2153 = vpop.xlane.xlu0 %2152
        %2154 = vmax.xlane.f32.xlu0 %v2132
        %v2155 = vpop.xlane.xlu0 %2154
        %2156 = vmax.xlane.f32.xlu0 %v2133
        %v2157 = vpop.xlane.xlu0 %2156
        %2158 = vmax.xlane.f32.xlu0 %v2134
        %v2159 = vpop.xlane.xlu0 %2158
        %2160 = vmax.xlane.f32.xlu0 %v2135
        %v2161 = vpop.xlane.xlu0 %2160
        %2162 = vmax.xlane.f32.xlu0 %v2136
        %v2163 = vpop.xlane.xlu0 %2162
        %2164 = vmax.xlane.f32.xlu0 %v2137
        %v2165 = vpop.xlane.xlu0 %2164
        %2166 = vmax.xlane.f32.xlu0 %v2138
        %v2167 = vpop.xlane.xlu0 %2166
        %2168 = vmax.xlane.f32.xlu0 %v2139
        %v2169 = vpop.xlane.xlu0 %2168
        %2170 = vmax.xlane.f32.xlu0 %v2140
        %v2171 = vpop.xlane.xlu0 %2170
        %2172 = vmax.xlane.f32.xlu0 %v2141
        %v2173 = vpop.xlane.xlu0 %2172
        %v2174 = vsub.f32 %v2126, %v2143
        %v2175 = vsub.f32 %v2127, %v2145
        %v2176 = vsub.f32 %v2128, %v2147
        %v2177 = vsub.f32 %v2129, %v2149
        %v2178 = vsub.f32 %v2130, %v2151
        %v2179 = vsub.f32 %v2131, %v2153
        %v2180 = vsub.f32 %v2132, %v2155
        %v2181 = vsub.f32 %v2133, %v2157
        %v2182 = vsub.f32 %v2134, %v2159
        %v2183 = vsub.f32 %v2135, %v2161
        %v2184 = vsub.f32 %v2136, %v2163
        %v2185 = vsub.f32 %v2137, %v2165
        %v2186 = vsub.f32 %v2138, %v2167
        %v2187 = vsub.f32 %v2139, %v2169
        %v2188 = vsub.f32 %v2140, %v2171
        %v2189 = vsub.f32 %v2141, %v2173
        %v2190 = vmul.f32 %v2174, 1.442695
        %v2191 = vpow.pop %v2190
        %v2192 = vmul.f32 %v2175, 1.442695
        %v2193 = vpow.pop %v2192
        %v2194 = vmul.f32 %v2176, 1.442695
        %v2195 = vpow.pop %v2194
        %v2196 = vmul.f32 %v2177, 1.442695
        %v2197 = vpow.pop %v2196
        %v2198 = vmul.f32 %v2178, 1.442695
        %v2199 = vpow.pop %v2198
        %v2200 = vmul.f32 %v2179, 1.442695
        %v2201 = vpow.pop %v2200
        %v2202 = vmul.f32 %v2180, 1.442695
        %v2203 = vpow.pop %v2202
        %v2204 = vmul.f32 %v2181, 1.442695
        %v2205 = vpow.pop %v2204
        %v2206 = vmul.f32 %v2182, 1.442695
        %v2207 = vpow.pop %v2206
        %v2208 = vmul.f32 %v2183, 1.442695
        %v2209 = vpow.pop %v2208
        %v2210 = vmul.f32 %v2184, 1.442695
        %v2211 = vpow.pop %v2210
        %v2212 = vmul.f32 %v2185, 1.442695
        %v2213 = vpow.pop %v2212
        %v2214 = vmul.f32 %v2186, 1.442695
        %v2215 = vpow.pop %v2214
        %v2216 = vmul.f32 %v2187, 1.442695
        %v2217 = vpow.pop %v2216
        %v2218 = vmul.f32 %v2188, 1.442695
        %v2219 = vpow.pop %v2218
        %v2220 = vmul.f32 %v2189, 1.442695
        %v2221 = vpow.pop %v2220
        %2222 = vadd.xlane.f32.xlu0 %v2191
        %v2223 = vpop.xlane.xlu0 %2222
        %2224 = vadd.xlane.f32.xlu0 %v2193
        %v2225 = vpop.xlane.xlu0 %2224
        %2226 = vadd.xlane.f32.xlu0 %v2195
        %v2227 = vpop.xlane.xlu0 %2226
        %2228 = vadd.xlane.f32.xlu0 %v2197
        %v2229 = vpop.xlane.xlu0 %2228
        %2230 = vadd.xlane.f32.xlu0 %v2199
        %v2231 = vpop.xlane.xlu0 %2230
        %2232 = vadd.xlane.f32.xlu0 %v2201
        %v2233 = vpop.xlane.xlu0 %2232
        %2234 = vadd.xlane.f32.xlu0 %v2203
        %v2235 = vpop.xlane.xlu0 %2234
        %2236 = vadd.xlane.f32.xlu0 %v2205
        %v2237 = vpop.xlane.xlu0 %2236
        %2238 = vadd.xlane.f32.xlu0 %v2207
        %v2239 = vpop.xlane.xlu0 %2238
        %2240 = vadd.xlane.f32.xlu0 %v2209
        %v2241 = vpop.xlane.xlu0 %2240
        %2242 = vadd.xlane.f32.xlu0 %v2211
        %v2243 = vpop.xlane.xlu0 %2242
        %2244 = vadd.xlane.f32.xlu0 %v2213
        %v2245 = vpop.xlane.xlu0 %2244
        %2246 = vadd.xlane.f32.xlu0 %v2215
        %v2247 = vpop.xlane.xlu0 %2246
        %2248 = vadd.xlane.f32.xlu0 %v2217
        %v2249 = vpop.xlane.xlu0 %2248
        %2250 = vadd.xlane.f32.xlu0 %v2219
        %v2251 = vpop.xlane.xlu0 %2250
        %2252 = vadd.xlane.f32.xlu0 %v2221
        %v2253 = vpop.xlane.xlu0 %2252
        %v2254 = vpack.c.bf16 %v2193, %v2191
        %v2255 = vpack.c.bf16 %v2197, %v2195
        %v2256 = vpack.c.bf16 %v2201, %v2199
        %v2257 = vpack.c.bf16 %v2205, %v2203
        %v2258 = vpack.c.bf16 %v2209, %v2207
        %v2259 = vpack.c.bf16 %v2213, %v2211
        %v2260 = vpack.c.bf16 %v2217, %v2215
        %v2261 = vpack.c.bf16 %v2221, %v2219
        %2262 = vrot.lane.b32.xlu0 %v991, 64
        %v2263 = vpop.permute.xlu0 %2262
        %2264 = vrot.lane.b32.xlu0 %v994, 64
        %v2265 = vpop.permute.xlu0 %2264
        %2266 = vrot.lane.b32.xlu0 %v997, 64
        %v2267 = vpop.permute.xlu0 %2266
        %2268 = vrot.lane.b32.xlu0 %v1000, 64
        %v2269 = vpop.permute.xlu0 %2268
        %2270 = vrot.lane.b32.xlu0 %v1003, 64
        %v2271 = vpop.permute.xlu0 %2270
        %2272 = vrot.lane.b32.xlu0 %v1006, 64
        %v2273 = vpop.permute.xlu0 %2272
        %2274 = vrot.lane.b32.xlu0 %v1009, 64
        %v2275 = vpop.permute.xlu0 %2274
        %2276 = vrot.lane.b32.xlu0 %v1012, 64
        %v2277 = vpop.permute.xlu0 %2276
        %2286 = vmatprep.subr.bf16.mxu0 0
        %2287 = vmatpush1.bf16.msra.mxu0 %v2263
        %2288 = vmatprep.subr.bf16.mxu0 0
        %2289 = vmatpush1.bf16.msra.mxu0 %v2265
        %2290 = vmatprep.subr.bf16.mxu0 0
        %2291 = vmatpush1.bf16.msra.mxu0 %v2267
        %2292 = vmatprep.subr.bf16.mxu0 0
        %2293 = vmatpush1.bf16.msra.mxu0 %v2269
        %2294 = vmatprep.subr.bf16.mxu0 0
        %2295 = vmatpush1.bf16.msra.mxu0 %v2271
        %2296 = vmatprep.subr.bf16.mxu0 0
        %2297 = vmatpush1.bf16.msra.mxu0 %v2273
        %2298 = vmatprep.subr.bf16.mxu0 0
        %2299 = vmatpush1.bf16.msra.mxu0 %v2275
        %2300 = vmatprep.subr.bf16.mxu0 0
        %2301 = vmatpush1.bf16.msra.mxu0 %v2277
        %2302 = vmatprep.subr.bf16.mxu0 0
        %2303 = vmatpush1.bf16.msra.mxu0 0
        %2304 = vmatprep.subr.bf16.mxu0 0
        %2305 = vmatpush1.bf16.msra.mxu0 0
        %2306 = vmatprep.subr.bf16.mxu0 0
        %2307 = vmatpush1.bf16.msra.mxu0 0
        %2308 = vmatprep.subr.bf16.mxu0 0
        %2309 = vmatpush1.bf16.msra.mxu0 0
        %2310 = vmatprep.subr.bf16.mxu0 0
        %2311 = vmatpush1.bf16.msra.mxu0 0
        %2312 = vmatprep.subr.bf16.mxu0 0
        %2313 = vmatpush1.bf16.msra.mxu0 0
        %2314 = vmatprep.subr.bf16.mxu0 0
        %2315 = vmatpush1.bf16.msra.mxu0 0
        %2316 = vmatprep.subr.bf16.mxu0 0
        %2317 = vmatpush1.bf16.msra.mxu0 0
        %2318 = vmatprep.mubr.bf16.mxu0 0
        %2319 = vmatmul.mubr.bf16.gmra.mrb[0].mxu0 %v2254
        %v2320 = vpop.f32.mrb[0].mxu0
        %v2321 = vadd.f32 0.0, %v2320
        %v2322 = vpop.f32.mrb[0].mxu0
        %v2323 = vpop.f32.mrb[0].mxu0
        %v2324 = vadd.f32 0.0, %v2323
        %v2325 = vpop.f32.mrb[0].mxu0
        %2326 = vmatprep.mubr.bf16.mxu0 0
        %2327 = vmatmul.mubr.bf16.gmra.mrb[0].mxu0 %v2255
        %v2328 = vpop.f32.mrb[0].mxu0
        %v2329 = vadd.f32 0.0, %v2328
        %v2330 = vpop.f32.mrb[0].mxu0
        %v2331 = vpop.f32.mrb[0].mxu0
        %v2332 = vadd.f32 0.0, %v2331
        %v2333 = vpop.f32.mrb[0].mxu0
        %2334 = vmatprep.mubr.bf16.mxu0 0
        %2335 = vmatmul.mubr.bf16.gmra.mrb[0].mxu0 %v2256
        %v2336 = vpop.f32.mrb[0].mxu0
        %v2337 = vadd.f32 0.0, %v2336
        %v2338 = vpop.f32.mrb[0].mxu0
        %v2339 = vpop.f32.mrb[0].mxu0
        %v2340 = vadd.f32 0.0, %v2339
        %v2341 = vpop.f32.mrb[0].mxu0
        %2342 = vmatprep.mubr.bf16.mxu0 0
        %2343 = vmatmul.mubr.bf16.gmra.mrb[0].mxu0 %v2257
        %v2344 = vpop.f32.mrb[0].mxu0
        %v2345 = vadd.f32 0.0, %v2344
        %v2346 = vpop.f32.mrb[0].mxu0
        %v2347 = vpop.f32.mrb[0].mxu0
        %v2348 = vadd.f32 0.0, %v2347
        %v2349 = vpop.f32.mrb[0].mxu0
        %2350 = vmatprep.mubr.bf16.mxu0 0
        %2351 = vmatmul.mubr.bf16.gmra.mrb[0].mxu0 %v2258
        %v2352 = vpop.f32.mrb[0].mxu0
        %v2353 = vadd.f32 0.0, %v2352
        %v2354 = vpop.f32.mrb[0].mxu0
        %v2355 = vpop.f32.mrb[0].mxu0
        %v2356 = vadd.f32 0.0, %v2355
        %v2357 = vpop.f32.mrb[0].mxu0
        %2358 = vmatprep.mubr.bf16.mxu0 0
        %2359 = vmatmul.mubr.bf16.gmra.mrb[0].mxu0 %v2259
        %v2360 = vpop.f32.mrb[0].mxu0
        %v2361 = vadd.f32 0.0, %v2360
        %v2362 = vpop.f32.mrb[0].mxu0
        %v2363 = vpop.f32.mrb[0].mxu0
        %v2364 = vadd.f32 0.0, %v2363
        %v2365 = vpop.f32.mrb[0].mxu0
        %2366 = vmatprep.mubr.bf16.mxu0 0
        %2367 = vmatmul.mubr.bf16.gmra.mrb[0].mxu0 %v2260
        %v2368 = vpop.f32.mrb[0].mxu0
        %v2369 = vadd.f32 0.0, %v2368
        %v2370 = vpop.f32.mrb[0].mxu0
        %v2371 = vpop.f32.mrb[0].mxu0
        %v2372 = vadd.f32 0.0, %v2371
        %v2373 = vpop.f32.mrb[0].mxu0
        %2374 = vmatprep.mubr.bf16.mxu0 0
        %2375 = vmatmul.mubr.bf16.gmra.mrb[0].mxu0 %v2261
        %v2376 = vpop.f32.mrb[0].mxu0
        %v2377 = vadd.f32 0.0, %v2376
        %v2378 = vpop.f32.mrb[0].mxu0
        %v2379 = vpop.f32.mrb[0].mxu0
        %v2380 = vadd.f32 0.0, %v2379
        %v2381 = vpop.f32.mrb[0].mxu0
        %2382 = vdwg.mxu0
        %v2383 = vrcp.pop %v2223
        %v2384 = vrcp.pop %v2225
        %v2385 = vrcp.pop %v2227
        %v2386 = vrcp.pop %v2229
        %v2387 = vrcp.pop %v2231
        %v2388 = vrcp.pop %v2233
        %v2389 = vrcp.pop %v2235
        %v2390 = vrcp.pop %v2237
        %v2391 = vrcp.pop %v2239
        %v2392 = vrcp.pop %v2241
        %v2393 = vrcp.pop %v2243
        %v2394 = vrcp.pop %v2245
        %v2395 = vrcp.pop %v2247
        %v2396 = vrcp.pop %v2249
        %v2397 = vrcp.pop %v2251
        %v2398 = vrcp.pop %v2253
        %v2399 = vmul.f32 %v2321, %v2383
        %v2400 = vmul.f32 %v2324, %v2384
        %v2401 = vmul.f32 %v2329, %v2385
        %v2402 = vmul.f32 %v2332, %v2386
        %v2403 = vmul.f32 %v2337, %v2387
        %v2404 = vmul.f32 %v2340, %v2388
        %v2405 = vmul.f32 %v2345, %v2389
        %v2406 = vmul.f32 %v2348, %v2390
        %v2407 = vmul.f32 %v2353, %v2391
        %v2408 = vmul.f32 %v2356, %v2392
        %v2409 = vmul.f32 %v2361, %v2393
        %v2410 = vmul.f32 %v2364, %v2394
        %v2411 = vmul.f32 %v2369, %v2395
        %v2412 = vmul.f32 %v2372, %v2396
        %v2413 = vmul.f32 %v2377, %v2397
        %v2414 = vmul.f32 %v2380, %v2398
        %2415 = vrot.lane.b32.xlu0 %v989, 32
        %v2416 = vpop.permute.xlu0 %2415
        %2417 = vrot.lane.b32.xlu0 %v992, 32
        %v2418 = vpop.permute.xlu0 %2417
        %2419 = vrot.lane.b32.xlu0 %v995, 32
        %v2420 = vpop.permute.xlu0 %2419
        %2421 = vrot.lane.b32.xlu0 %v998, 32
        %v2422 = vpop.permute.xlu0 %2421
        %2423 = vrot.lane.b32.xlu0 %v1001, 32
        %v2424 = vpop.permute.xlu0 %2423
        %2425 = vrot.lane.b32.xlu0 %v1004, 32
        %v2426 = vpop.permute.xlu0 %2425
        %2427 = vrot.lane.b32.xlu0 %v1007, 32
        %v2428 = vpop.permute.xlu0 %2427
        %2429 = vrot.lane.b32.xlu0 %v1010, 32
        %v2430 = vpop.permute.xlu0 %2429
        %2431 = vrot.lane.b32.xlu0 %v990, 32
        %v2432 = vpop.permute.xlu0 %2431
        %2433 = vrot.lane.b32.xlu0 %v993, 32
        %v2434 = vpop.permute.xlu0 %2433
        %2435 = vrot.lane.b32.xlu0 %v996, 32
        %v2436 = vpop.permute.xlu0 %2435
        %2437 = vrot.lane.b32.xlu0 %v999, 32
        %v2438 = vpop.permute.xlu0 %2437
        %2439 = vrot.lane.b32.xlu0 %v1002, 32
        %v2440 = vpop.permute.xlu0 %2439
        %2441 = vrot.lane.b32.xlu0 %v1005, 32
        %v2442 = vpop.permute.xlu0 %2441
        %2443 = vrot.lane.b32.xlu0 %v1008, 32
        %v2444 = vpop.permute.xlu0 %2443
        %2445 = vrot.lane.b32.xlu0 %v1011, 32
        %v2446 = vpop.permute.xlu0 %2445
        %v2448 = vsel %vm1048, %v2416, 0
        %v2451 = vsel %vm1048, %v2418, 0
        %v2454 = vsel %vm1048, %v2420, 0
        %v2457 = vsel %vm1048, %v2422, 0
        %v2460 = vsel %vm1048, %v2424, 0
        %v2463 = vsel %vm1048, %v2426, 0
        %v2466 = vsel %vm1048, %v2428, 0
        %v2469 = vsel %vm1048, %v2430, 0
        %v2472 = vsel %vm1048, %v2432, 0
        %v2475 = vsel %vm1048, %v2434, 0
        %v2478 = vsel %vm1048, %v2436, 0
        %v2481 = vsel %vm1048, %v2438, 0
        %v2484 = vsel %vm1048, %v2440, 0
        %v2487 = vsel %vm1048, %v2442, 0
        %v2490 = vsel %vm1048, %v2444, 0
        %v2493 = vsel %vm1048, %v2446, 0
        %2495 = vmatprep.subr.bf16.mxu0 0
        %2496 = vmatpush1.bf16.xpose.msra.mxu0 %v2472
        %2497 = vmatprep.subr.bf16.mxu0 0
        %2498 = vmatpush1.bf16.xpose.msra.mxu0 %v2475
        %2499 = vmatprep.subr.bf16.mxu0 0
        %2500 = vmatpush1.bf16.xpose.msra.mxu0 %v2478
        %2501 = vmatprep.subr.bf16.mxu0 0
        %2502 = vmatpush1.bf16.xpose.msra.mxu0 %v2481
        %2503 = vmatprep.subr.bf16.mxu0 0
        %2504 = vmatpush1.bf16.xpose.msra.mxu0 %v2484
        %2505 = vmatprep.subr.bf16.mxu0 0
        %2506 = vmatpush1.bf16.xpose.msra.mxu0 %v2487
        %2507 = vmatprep.subr.bf16.mxu0 0
        %2508 = vmatpush1.bf16.xpose.msra.mxu0 %v2490
        %2509 = vmatprep.subr.bf16.mxu0 0
        %2510 = vmatpush1.bf16.xpose.msra.mxu0 %v2493
        %2511 = vmatprep.subr.bf16.mxu0 0
        %2512 = vmatpush1.bf16.xpose.msra.mxu0 0
        %2513 = vmatprep.subr.bf16.mxu0 0
        %2514 = vmatpush1.bf16.xpose.msra.mxu0 0
        %2515 = vmatprep.subr.bf16.mxu0 0
        %2516 = vmatpush1.bf16.xpose.msra.mxu0 0
        %2517 = vmatprep.subr.bf16.mxu0 0
        %2518 = vmatpush1.bf16.xpose.msra.mxu0 0
        %2519 = vmatprep.subr.bf16.mxu0 0
        %2520 = vmatpush1.bf16.xpose.msra.mxu0 0
        %2521 = vmatprep.subr.bf16.mxu0 0
        %2522 = vmatpush1.bf16.xpose.msra.mxu0 0
        %2523 = vmatprep.subr.bf16.mxu0 0
        %2524 = vmatpush1.bf16.xpose.msra.mxu0 0
        %2525 = vmatprep.subr.bf16.mxu0 0
        %2526 = vmatpush1.bf16.xpose.msra.mxu0 0
        %2527 = vmatprep.mubr.bf16.mxu0 0
        %2528 = vmatmul.mubr.bf16.gmra.mrb[0].mxu0 %v2448
        %v2529 = vpop.f32.mrb[0].mxu0
        %v2530 = vadd.f32 0.0, %v2529
        %v2531 = vpop.f32.mrb[0].mxu0
        %v2532 = vpop.f32.mrb[0].mxu0
        %v2533 = vadd.f32 0.0, %v2532
        %v2534 = vpop.f32.mrb[0].mxu0
        %2535 = vmatprep.mubr.bf16.mxu0 0
        %2536 = vmatmul.mubr.bf16.gmra.mrb[0].mxu0 %v2451
        %v2537 = vpop.f32.mrb[0].mxu0
        %v2538 = vadd.f32 0.0, %v2537
        %v2539 = vpop.f32.mrb[0].mxu0
        %v2540 = vpop.f32.mrb[0].mxu0
        %v2541 = vadd.f32 0.0, %v2540
        %v2542 = vpop.f32.mrb[0].mxu0
        %2543 = vmatprep.mubr.bf16.mxu0 0
        %2544 = vmatmul.mubr.bf16.gmra.mrb[0].mxu0 %v2454
        %v2545 = vpop.f32.mrb[0].mxu0
        %v2546 = vadd.f32 0.0, %v2545
        %v2547 = vpop.f32.mrb[0].mxu0
        %v2548 = vpop.f32.mrb[0].mxu0
        %v2549 = vadd.f32 0.0, %v2548
        %v2550 = vpop.f32.mrb[0].mxu0
        %2551 = vmatprep.mubr.bf16.mxu0 0
        %2552 = vmatmul.mubr.bf16.gmra.mrb[0].mxu0 %v2457
        %v2553 = vpop.f32.mrb[0].mxu0
        %v2554 = vadd.f32 0.0, %v2553
        %v2555 = vpop.f32.mrb[0].mxu0
        %v2556 = vpop.f32.mrb[0].mxu0
        %v2557 = vadd.f32 0.0, %v2556
        %v2558 = vpop.f32.mrb[0].mxu0
        %2559 = vmatprep.mubr.bf16.mxu0 0
        %2560 = vmatmul.mubr.bf16.gmra.mrb[0].mxu0 %v2460
        %v2561 = vpop.f32.mrb[0].mxu0
        %v2562 = vadd.f32 0.0, %v2561
        %v2563 = vpop.f32.mrb[0].mxu0
        %v2564 = vpop.f32.mrb[0].mxu0
        %v2565 = vadd.f32 0.0, %v2564
        %v2566 = vpop.f32.mrb[0].mxu0
        %2567 = vmatprep.mubr.bf16.mxu0 0
        %2568 = vmatmul.mubr.bf16.gmra.mrb[0].mxu0 %v2463
        %v2569 = vpop.f32.mrb[0].mxu0
        %v2570 = vadd.f32 0.0, %v2569
        %v2571 = vpop.f32.mrb[0].mxu0
        %v2572 = vpop.f32.mrb[0].mxu0
        %v2573 = vadd.f32 0.0, %v2572
        %v2574 = vpop.f32.mrb[0].mxu0
        %2575 = vmatprep.mubr.bf16.mxu0 0
        %2576 = vmatmul.mubr.bf16.gmra.mrb[0].mxu0 %v2466
        %v2577 = vpop.f32.mrb[0].mxu0
        %v2578 = vadd.f32 0.0, %v2577
        %v2579 = vpop.f32.mrb[0].mxu0
        %v2580 = vpop.f32.mrb[0].mxu0
        %v2581 = vadd.f32 0.0, %v2580
        %v2582 = vpop.f32.mrb[0].mxu0
        %2583 = vmatprep.mubr.bf16.mxu0 0
        %2584 = vmatmul.mubr.bf16.gmra.mrb[0].mxu0 %v2469
        %v2585 = vpop.f32.mrb[0].mxu0
        %v2586 = vadd.f32 0.0, %v2585
        %v2587 = vpop.f32.mrb[0].mxu0
        %v2588 = vpop.f32.mrb[0].mxu0
        %v2589 = vadd.f32 0.0, %v2588
        %v2590 = vpop.f32.mrb[0].mxu0
        %2591 = vdwg.mxu0
        %v2592 = vsel %vm1032, %v2530, -1e+30
        %v2593 = vsel %vm1033, %v2533, -1e+30
        %v2594 = vsel %vm1034, %v2538, -1e+30
        %v2595 = vsel %vm1035, %v2541, -1e+30
        %v2596 = vsel %vm1036, %v2546, -1e+30
        %v2597 = vsel %vm1037, %v2549, -1e+30
        %v2598 = vsel %vm1038, %v2554, -1e+30
        %v2599 = vsel %vm1039, %v2557, -1e+30
        %v2600 = vsel %vm1040, %v2562, -1e+30
        %v2601 = vsel %vm1041, %v2565, -1e+30
        %v2602 = vsel %vm1042, %v2570, -1e+30
        %v2603 = vsel %vm1043, %v2573, -1e+30
        %v2604 = vsel %vm1044, %v2578, -1e+30
        %v2605 = vsel %vm1045, %v2581, -1e+30
        %v2606 = vsel %vm1046, %v2586, -1e+30
        %v2607 = vsel %vm1047, %v2589, -1e+30
        %2608 = vmax.xlane.f32.xlu0 %v2592
        %v2609 = vpop.xlane.xlu0 %2608
        %2610 = vmax.xlane.f32.xlu0 %v2593
        %v2611 = vpop.xlane.xlu0 %2610
        %2612 = vmax.xlane.f32.xlu0 %v2594
        %v2613 = vpop.xlane.xlu0 %2612
        %2614 = vmax.xlane.f32.xlu0 %v2595
        %v2615 = vpop.xlane.xlu0 %2614
        %2616 = vmax.xlane.f32.xlu0 %v2596
        %v2617 = vpop.xlane.xlu0 %2616
        %2618 = vmax.xlane.f32.xlu0 %v2597
        %v2619 = vpop.xlane.xlu0 %2618
        %2620 = vmax.xlane.f32.xlu0 %v2598
        %v2621 = vpop.xlane.xlu0 %2620
        %2622 = vmax.xlane.f32.xlu0 %v2599
        %v2623 = vpop.xlane.xlu0 %2622
        %2624 = vmax.xlane.f32.xlu0 %v2600
        %v2625 = vpop.xlane.xlu0 %2624
        %2626 = vmax.xlane.f32.xlu0 %v2601
        %v2627 = vpop.xlane.xlu0 %2626
        %2628 = vmax.xlane.f32.xlu0 %v2602
        %v2629 = vpop.xlane.xlu0 %2628
        %2630 = vmax.xlane.f32.xlu0 %v2603
        %v2631 = vpop.xlane.xlu0 %2630
        %2632 = vmax.xlane.f32.xlu0 %v2604
        %v2633 = vpop.xlane.xlu0 %2632
        %2634 = vmax.xlane.f32.xlu0 %v2605
        %v2635 = vpop.xlane.xlu0 %2634
        %2636 = vmax.xlane.f32.xlu0 %v2606
        %v2637 = vpop.xlane.xlu0 %2636
        %2638 = vmax.xlane.f32.xlu0 %v2607
        %v2639 = vpop.xlane.xlu0 %2638
        %v2640 = vsub.f32 %v2592, %v2609
        %v2641 = vsub.f32 %v2593, %v2611
        %v2642 = vsub.f32 %v2594, %v2613
        %v2643 = vsub.f32 %v2595, %v2615
        %v2644 = vsub.f32 %v2596, %v2617
        %v2645 = vsub.f32 %v2597, %v2619
        %v2646 = vsub.f32 %v2598, %v2621
        %v2647 = vsub.f32 %v2599, %v2623
        %v2648 = vsub.f32 %v2600, %v2625
        %v2649 = vsub.f32 %v2601, %v2627
        %v2650 = vsub.f32 %v2602, %v2629
        %v2651 = vsub.f32 %v2603, %v2631
        %v2652 = vsub.f32 %v2604, %v2633
        %v2653 = vsub.f32 %v2605, %v2635
        %v2654 = vsub.f32 %v2606, %v2637
        %v2655 = vsub.f32 %v2607, %v2639
        %v2656 = vmul.f32 %v2640, 1.442695
        %v2657 = vpow.pop %v2656
        %v2658 = vmul.f32 %v2641, 1.442695
        %v2659 = vpow.pop %v2658
        %v2660 = vmul.f32 %v2642, 1.442695
        %v2661 = vpow.pop %v2660
        %v2662 = vmul.f32 %v2643, 1.442695
        %v2663 = vpow.pop %v2662
        %v2664 = vmul.f32 %v2644, 1.442695
        %v2665 = vpow.pop %v2664
        %v2666 = vmul.f32 %v2645, 1.442695
        %v2667 = vpow.pop %v2666
        %v2668 = vmul.f32 %v2646, 1.442695
        %v2669 = vpow.pop %v2668
        %v2670 = vmul.f32 %v2647, 1.442695
        %v2671 = vpow.pop %v2670
        %v2672 = vmul.f32 %v2648, 1.442695
        %v2673 = vpow.pop %v2672
        %v2674 = vmul.f32 %v2649, 1.442695
        %v2675 = vpow.pop %v2674
        %v2676 = vmul.f32 %v2650, 1.442695
        %v2677 = vpow.pop %v2676
        %v2678 = vmul.f32 %v2651, 1.442695
        %v2679 = vpow.pop %v2678
        %v2680 = vmul.f32 %v2652, 1.442695
        %v2681 = vpow.pop %v2680
        %v2682 = vmul.f32 %v2653, 1.442695
        %v2683 = vpow.pop %v2682
        %v2684 = vmul.f32 %v2654, 1.442695
        %v2685 = vpow.pop %v2684
        %v2686 = vmul.f32 %v2655, 1.442695
        %v2687 = vpow.pop %v2686
        %2688 = vadd.xlane.f32.xlu0 %v2657
        %v2689 = vpop.xlane.xlu0 %2688
        %2690 = vadd.xlane.f32.xlu0 %v2659
        %v2691 = vpop.xlane.xlu0 %2690
        %2692 = vadd.xlane.f32.xlu0 %v2661
        %v2693 = vpop.xlane.xlu0 %2692
        %2694 = vadd.xlane.f32.xlu0 %v2663
        %v2695 = vpop.xlane.xlu0 %2694
        %2696 = vadd.xlane.f32.xlu0 %v2665
        %v2697 = vpop.xlane.xlu0 %2696
        %2698 = vadd.xlane.f32.xlu0 %v2667
        %v2699 = vpop.xlane.xlu0 %2698
        %2700 = vadd.xlane.f32.xlu0 %v2669
        %v2701 = vpop.xlane.xlu0 %2700
        %2702 = vadd.xlane.f32.xlu0 %v2671
        %v2703 = vpop.xlane.xlu0 %2702
        %2704 = vadd.xlane.f32.xlu0 %v2673
        %v2705 = vpop.xlane.xlu0 %2704
        %2706 = vadd.xlane.f32.xlu0 %v2675
        %v2707 = vpop.xlane.xlu0 %2706
        %2708 = vadd.xlane.f32.xlu0 %v2677
        %v2709 = vpop.xlane.xlu0 %2708
        %2710 = vadd.xlane.f32.xlu0 %v2679
        %v2711 = vpop.xlane.xlu0 %2710
        %2712 = vadd.xlane.f32.xlu0 %v2681
        %v2713 = vpop.xlane.xlu0 %2712
        %2714 = vadd.xlane.f32.xlu0 %v2683
        %v2715 = vpop.xlane.xlu0 %2714
        %2716 = vadd.xlane.f32.xlu0 %v2685
        %v2717 = vpop.xlane.xlu0 %2716
        %2718 = vadd.xlane.f32.xlu0 %v2687
        %v2719 = vpop.xlane.xlu0 %2718
        %v2720 = vpack.c.bf16 %v2659, %v2657
        %v2721 = vpack.c.bf16 %v2663, %v2661
        %v2722 = vpack.c.bf16 %v2667, %v2665
        %v2723 = vpack.c.bf16 %v2671, %v2669
        %v2724 = vpack.c.bf16 %v2675, %v2673
        %v2725 = vpack.c.bf16 %v2679, %v2677
        %v2726 = vpack.c.bf16 %v2683, %v2681
        %v2727 = vpack.c.bf16 %v2687, %v2685
        %2728 = vrot.lane.b32.xlu0 %v991, 32
        %v2729 = vpop.permute.xlu0 %2728
        %2730 = vrot.lane.b32.xlu0 %v994, 32
        %v2731 = vpop.permute.xlu0 %2730
        %2732 = vrot.lane.b32.xlu0 %v997, 32
        %v2733 = vpop.permute.xlu0 %2732
        %2734 = vrot.lane.b32.xlu0 %v1000, 32
        %v2735 = vpop.permute.xlu0 %2734
        %2736 = vrot.lane.b32.xlu0 %v1003, 32
        %v2737 = vpop.permute.xlu0 %2736
        %2738 = vrot.lane.b32.xlu0 %v1006, 32
        %v2739 = vpop.permute.xlu0 %2738
        %2740 = vrot.lane.b32.xlu0 %v1009, 32
        %v2741 = vpop.permute.xlu0 %2740
        %2742 = vrot.lane.b32.xlu0 %v1012, 32
        %v2743 = vpop.permute.xlu0 %2742
        %2752 = vmatprep.subr.bf16.mxu0 0
        %2753 = vmatpush1.bf16.msra.mxu0 %v2729
        %2754 = vmatprep.subr.bf16.mxu0 0
        %2755 = vmatpush1.bf16.msra.mxu0 %v2731
        %2756 = vmatprep.subr.bf16.mxu0 0
        %2757 = vmatpush1.bf16.msra.mxu0 %v2733
        %2758 = vmatprep.subr.bf16.mxu0 0
        %2759 = vmatpush1.bf16.msra.mxu0 %v2735
        %2760 = vmatprep.subr.bf16.mxu0 0
        %2761 = vmatpush1.bf16.msra.mxu0 %v2737
        %2762 = vmatprep.subr.bf16.mxu0 0
        %2763 = vmatpush1.bf16.msra.mxu0 %v2739
        %2764 = vmatprep.subr.bf16.mxu0 0
        %2765 = vmatpush1.bf16.msra.mxu0 %v2741
        %2766 = vmatprep.subr.bf16.mxu0 0
        %2767 = vmatpush1.bf16.msra.mxu0 %v2743
        %2768 = vmatprep.subr.bf16.mxu0 0
        %2769 = vmatpush1.bf16.msra.mxu0 0
        %2770 = vmatprep.subr.bf16.mxu0 0
        %2771 = vmatpush1.bf16.msra.mxu0 0
        %2772 = vmatprep.subr.bf16.mxu0 0
        %2773 = vmatpush1.bf16.msra.mxu0 0
        %2774 = vmatprep.subr.bf16.mxu0 0
        %2775 = vmatpush1.bf16.msra.mxu0 0
        %2776 = vmatprep.subr.bf16.mxu0 0
        %2777 = vmatpush1.bf16.msra.mxu0 0
        %2778 = vmatprep.subr.bf16.mxu0 0
        %2779 = vmatpush1.bf16.msra.mxu0 0
        %2780 = vmatprep.subr.bf16.mxu0 0
        %2781 = vmatpush1.bf16.msra.mxu0 0
        %2782 = vmatprep.subr.bf16.mxu0 0
        %2783 = vmatpush1.bf16.msra.mxu0 0
        %2784 = vmatprep.mubr.bf16.mxu0 0
        %2785 = vmatmul.mubr.bf16.gmra.mrb[0].mxu0 %v2720
        %v2786 = vpop.f32.mrb[0].mxu0
        %v2787 = vadd.f32 0.0, %v2786
        %v2788 = vpop.f32.mrb[0].mxu0
        %v2789 = vpop.f32.mrb[0].mxu0
        %v2790 = vadd.f32 0.0, %v2789
        %v2791 = vpop.f32.mrb[0].mxu0
        %2792 = vmatprep.mubr.bf16.mxu0 0
        %2793 = vmatmul.mubr.bf16.gmra.mrb[0].mxu0 %v2721
        %v2794 = vpop.f32.mrb[0].mxu0
        %v2795 = vadd.f32 0.0, %v2794
        %v2796 = vpop.f32.mrb[0].mxu0
        %v2797 = vpop.f32.mrb[0].mxu0
        %v2798 = vadd.f32 0.0, %v2797
        %v2799 = vpop.f32.mrb[0].mxu0
        %2800 = vmatprep.mubr.bf16.mxu0 0
        %2801 = vmatmul.mubr.bf16.gmra.mrb[0].mxu0 %v2722
        %v2802 = vpop.f32.mrb[0].mxu0
        %v2803 = vadd.f32 0.0, %v2802
        %v2804 = vpop.f32.mrb[0].mxu0
        %v2805 = vpop.f32.mrb[0].mxu0
        %v2806 = vadd.f32 0.0, %v2805
        %v2807 = vpop.f32.mrb[0].mxu0
        %2808 = vmatprep.mubr.bf16.mxu0 0
        %2809 = vmatmul.mubr.bf16.gmra.mrb[0].mxu0 %v2723
        %v2810 = vpop.f32.mrb[0].mxu0
        %v2811 = vadd.f32 0.0, %v2810
        %v2812 = vpop.f32.mrb[0].mxu0
        %v2813 = vpop.f32.mrb[0].mxu0
        %v2814 = vadd.f32 0.0, %v2813
        %v2815 = vpop.f32.mrb[0].mxu0
        %2816 = vmatprep.mubr.bf16.mxu0 0
        %2817 = vmatmul.mubr.bf16.gmra.mrb[0].mxu0 %v2724
        %v2818 = vpop.f32.mrb[0].mxu0
        %v2819 = vadd.f32 0.0, %v2818
        %v2820 = vpop.f32.mrb[0].mxu0
        %v2821 = vpop.f32.mrb[0].mxu0
        %v2822 = vadd.f32 0.0, %v2821
        %v2823 = vpop.f32.mrb[0].mxu0
        %2824 = vmatprep.mubr.bf16.mxu0 0
        %2825 = vmatmul.mubr.bf16.gmra.mrb[0].mxu0 %v2725
        %v2826 = vpop.f32.mrb[0].mxu0
        %v2827 = vadd.f32 0.0, %v2826
        %v2828 = vpop.f32.mrb[0].mxu0
        %v2829 = vpop.f32.mrb[0].mxu0
        %v2830 = vadd.f32 0.0, %v2829
        %v2831 = vpop.f32.mrb[0].mxu0
        %2832 = vmatprep.mubr.bf16.mxu0 0
        %2833 = vmatmul.mubr.bf16.gmra.mrb[0].mxu0 %v2726
        %v2834 = vpop.f32.mrb[0].mxu0
        %v2835 = vadd.f32 0.0, %v2834
        %v2836 = vpop.f32.mrb[0].mxu0
        %v2837 = vpop.f32.mrb[0].mxu0
        %v2838 = vadd.f32 0.0, %v2837
        %v2839 = vpop.f32.mrb[0].mxu0
        %2840 = vmatprep.mubr.bf16.mxu0 0
        %2841 = vmatmul.mubr.bf16.gmra.mrb[0].mxu0 %v2727
        %v2842 = vpop.f32.mrb[0].mxu0
        %v2843 = vadd.f32 0.0, %v2842
        %v2844 = vpop.f32.mrb[0].mxu0
        %v2845 = vpop.f32.mrb[0].mxu0
        %v2846 = vadd.f32 0.0, %v2845
        %v2847 = vpop.f32.mrb[0].mxu0
        %2848 = vdwg.mxu0
        %v2849 = vrcp.pop %v2689
        %v2850 = vrcp.pop %v2691
        %v2851 = vrcp.pop %v2693
        %v2852 = vrcp.pop %v2695
        %v2853 = vrcp.pop %v2697
        %v2854 = vrcp.pop %v2699
        %v2855 = vrcp.pop %v2701
        %v2856 = vrcp.pop %v2703
        %v2857 = vrcp.pop %v2705
        %v2858 = vrcp.pop %v2707
        %v2859 = vrcp.pop %v2709
        %v2860 = vrcp.pop %v2711
        %v2861 = vrcp.pop %v2713
        %v2862 = vrcp.pop %v2715
        %v2863 = vrcp.pop %v2717
        %v2864 = vrcp.pop %v2719
        %v2865 = vmul.f32 %v2787, %v2849
        %v2866 = vmul.f32 %v2790, %v2850
        %v2867 = vmul.f32 %v2795, %v2851
        %v2868 = vmul.f32 %v2798, %v2852
        %v2869 = vmul.f32 %v2803, %v2853
        %v2870 = vmul.f32 %v2806, %v2854
        %v2871 = vmul.f32 %v2811, %v2855
        %v2872 = vmul.f32 %v2814, %v2856
        %v2873 = vmul.f32 %v2819, %v2857
        %v2874 = vmul.f32 %v2822, %v2858
        %v2875 = vmul.f32 %v2827, %v2859
        %v2876 = vmul.f32 %v2830, %v2860
        %v2877 = vmul.f32 %v2835, %v2861
        %v2878 = vmul.f32 %v2838, %v2862
        %v2879 = vmul.f32 %v2843, %v2863
        %v2880 = vmul.f32 %v2846, %v2864
        %2897 = vrot.lane.b32.xlu0 %v1933, 32
        %v2898 = vpop.permute.xlu0 %2897
        %2899 = vrot.lane.b32.xlu0 %v1934, 32
        %v2900 = vpop.permute.xlu0 %2899
        %2901 = vrot.lane.b32.xlu0 %v1935, 32
        %v2902 = vpop.permute.xlu0 %2901
        %2903 = vrot.lane.b32.xlu0 %v1936, 32
        %v2904 = vpop.permute.xlu0 %2903
        %2905 = vrot.lane.b32.xlu0 %v1937, 32
        %v2906 = vpop.permute.xlu0 %2905
        %2907 = vrot.lane.b32.xlu0 %v1938, 32
        %v2908 = vpop.permute.xlu0 %2907
        %2909 = vrot.lane.b32.xlu0 %v1939, 32
        %v2910 = vpop.permute.xlu0 %2909
        %2911 = vrot.lane.b32.xlu0 %v1940, 32
        %v2912 = vpop.permute.xlu0 %2911
        %2913 = vrot.lane.b32.xlu0 %v1941, 32
        %v2914 = vpop.permute.xlu0 %2913
        %2915 = vrot.lane.b32.xlu0 %v1942, 32
        %v2916 = vpop.permute.xlu0 %2915
        %2917 = vrot.lane.b32.xlu0 %v1943, 32
        %v2918 = vpop.permute.xlu0 %2917
        %2919 = vrot.lane.b32.xlu0 %v1944, 32
        %v2920 = vpop.permute.xlu0 %2919
        %2921 = vrot.lane.b32.xlu0 %v1945, 32
        %v2922 = vpop.permute.xlu0 %2921
        %2923 = vrot.lane.b32.xlu0 %v1946, 32
        %v2924 = vpop.permute.xlu0 %2923
        %2925 = vrot.lane.b32.xlu0 %v1947, 32
        %v2926 = vpop.permute.xlu0 %2925
        %2927 = vrot.lane.b32.xlu0 %v1948, 32
        %v2928 = vpop.permute.xlu0 %2927
        %2961 = vrot.lane.b32.xlu0 %v2399, 64
        %v2962 = vpop.permute.xlu0 %2961
        %2963 = vrot.lane.b32.xlu0 %v2400, 64
        %v2964 = vpop.permute.xlu0 %2963
        %2965 = vrot.lane.b32.xlu0 %v2401, 64
        %v2966 = vpop.permute.xlu0 %2965
        %2967 = vrot.lane.b32.xlu0 %v2402, 64
        %v2968 = vpop.permute.xlu0 %2967
        %2969 = vrot.lane.b32.xlu0 %v2403, 64
        %v2970 = vpop.permute.xlu0 %2969
        %2971 = vrot.lane.b32.xlu0 %v2404, 64
        %v2972 = vpop.permute.xlu0 %2971
        %2973 = vrot.lane.b32.xlu0 %v2405, 64
        %v2974 = vpop.permute.xlu0 %2973
        %2975 = vrot.lane.b32.xlu0 %v2406, 64
        %v2976 = vpop.permute.xlu0 %2975
        %2977 = vrot.lane.b32.xlu0 %v2407, 64
        %v2978 = vpop.permute.xlu0 %2977
        %2979 = vrot.lane.b32.xlu0 %v2408, 64
        %v2980 = vpop.permute.xlu0 %2979
        %2981 = vrot.lane.b32.xlu0 %v2409, 64
        %v2982 = vpop.permute.xlu0 %2981
        %2983 = vrot.lane.b32.xlu0 %v2410, 64
        %v2984 = vpop.permute.xlu0 %2983
        %2985 = vrot.lane.b32.xlu0 %v2411, 64
        %v2986 = vpop.permute.xlu0 %2985
        %2987 = vrot.lane.b32.xlu0 %v2412, 64
        %v2988 = vpop.permute.xlu0 %2987
        %2989 = vrot.lane.b32.xlu0 %v2413, 64
        %v2990 = vpop.permute.xlu0 %2989
        %2991 = vrot.lane.b32.xlu0 %v2414, 64
        %v2992 = vpop.permute.xlu0 %2991
        %3025 = vrot.lane.b32.xlu0 %v2865, 96
        %v3026 = vpop.permute.xlu0 %3025
        %3027 = vrot.lane.b32.xlu0 %v2866, 96
        %v3028 = vpop.permute.xlu0 %3027
        %3029 = vrot.lane.b32.xlu0 %v2867, 96
        %v3030 = vpop.permute.xlu0 %3029
        %3031 = vrot.lane.b32.xlu0 %v2868, 96
        %v3032 = vpop.permute.xlu0 %3031
        %3033 = vrot.lane.b32.xlu0 %v2869, 96
        %v3034 = vpop.permute.xlu0 %3033
        %3035 = vrot.lane.b32.xlu0 %v2870, 96
        %v3036 = vpop.permute.xlu0 %3035
        %3037 = vrot.lane.b32.xlu0 %v2871, 96
        %v3038 = vpop.permute.xlu0 %3037
        %3039 = vrot.lane.b32.xlu0 %v2872, 96
        %v3040 = vpop.permute.xlu0 %3039
        %3041 = vrot.lane.b32.xlu0 %v2873, 96
        %v3042 = vpop.permute.xlu0 %3041
        %3043 = vrot.lane.b32.xlu0 %v2874, 96
        %v3044 = vpop.permute.xlu0 %3043
        %3045 = vrot.lane.b32.xlu0 %v2875, 96
        %v3046 = vpop.permute.xlu0 %3045
        %3047 = vrot.lane.b32.xlu0 %v2876, 96
        %v3048 = vpop.permute.xlu0 %3047
        %3049 = vrot.lane.b32.xlu0 %v2877, 96
        %v3050 = vpop.permute.xlu0 %3049
        %3051 = vrot.lane.b32.xlu0 %v2878, 96
        %v3052 = vpop.permute.xlu0 %3051
        %3053 = vrot.lane.b32.xlu0 %v2879, 96
        %v3054 = vpop.permute.xlu0 %3053
        %3055 = vrot.lane.b32.xlu0 %v2880, 96
        %v3056 = vpop.permute.xlu0 %3055
        %v3073 = vsel %vm1048, %v1443, %v2898
        %v3074 = vsel %vm1048, %v1444, %v2900
        %v3075 = vsel %vm1048, %v1445, %v2902
        %v3076 = vsel %vm1048, %v1446, %v2904
        %v3077 = vsel %vm1048, %v1447, %v2906
        %v3078 = vsel %vm1048, %v1448, %v2908
        %v3079 = vsel %vm1048, %v1449, %v2910
        %v3080 = vsel %vm1048, %v1450, %v2912
        %v3081 = vsel %vm1048, %v1451, %v2914
        %v3082 = vsel %vm1048, %v1452, %v2916
        %v3083 = vsel %vm1048, %v1453, %v2918
        %v3084 = vsel %vm1048, %v1454, %v2920
        %v3085 = vsel %vm1048, %v1455, %v2922
        %v3086 = vsel %vm1048, %v1456, %v2924
        %v3087 = vsel %vm1048, %v1457, %v2926
        %v3088 = vsel %vm1048, %v1458, %v2928
        %vm3089 = vcmask 523264
        %v3090 = vsel %vm3089, %v3073, %v2962
        %v3091 = vsel %vm3089, %v3074, %v2964
        %v3092 = vsel %vm3089, %v3075, %v2966
        %v3093 = vsel %vm3089, %v3076, %v2968
        %v3094 = vsel %vm3089, %v3077, %v2970
        %v3095 = vsel %vm3089, %v3078, %v2972
        %v3096 = vsel %vm3089, %v3079, %v2974
        %v3097 = vsel %vm3089, %v3080, %v2976
        %v3098 = vsel %vm3089, %v3081, %v2978
        %v3099 = vsel %vm3089, %v3082, %v2980
        %v3100 = vsel %vm3089, %v3083, %v2982
        %v3101 = vsel %vm3089, %v3084, %v2984
        %v3102 = vsel %vm3089, %v3085, %v2986
        %v3103 = vsel %vm3089, %v3086, %v2988
        %v3104 = vsel %vm3089, %v3087, %v2990
        %v3105 = vsel %vm3089, %v3088, %v2992
        %vm3106 = vcmask 785408
        %v3107 = vsel %vm3106, %v3090, %v3026
        %v3108 = vsel %vm3106, %v3091, %v3028
        %v3109 = vsel %vm3106, %v3092, %v3030
        %v3110 = vsel %vm3106, %v3093, %v3032
        %v3111 = vsel %vm3106, %v3094, %v3034
        %v3112 = vsel %vm3106, %v3095, %v3036
        %v3113 = vsel %vm3106, %v3096, %v3038
        %v3114 = vsel %vm3106, %v3097, %v3040
        %v3115 = vsel %vm3106, %v3098, %v3042
        %v3116 = vsel %vm3106, %v3099, %v3044
        %v3117 = vsel %vm3106, %v3100, %v3046
        %v3118 = vsel %vm3106, %v3101, %v3048
        %v3119 = vsel %vm3106, %v3102, %v3050
        %v3120 = vsel %vm3106, %v3103, %v3052
        %v3121 = vsel %vm3106, %v3104, %v3054
        %v3122 = vsel %vm3106, %v3105, %v3056
        %v3123 = vpack.c.bf16 %v3108, %v3107
        %v3124 = vpack.c.bf16 %v3110, %v3109
        %v3125 = vpack.c.bf16 %v3112, %v3111
        %v3126 = vpack.c.bf16 %v3114, %v3113
        %v3127 = vpack.c.bf16 %v3116, %v3115
        %v3128 = vpack.c.bf16 %v3118, %v3117
        %v3129 = vpack.c.bf16 %v3120, %v3119
        %v3130 = vpack.c.bf16 %v3122, %v3121
        %v3131 = vld [vmem:[#allocation8] sm:$0xf]
        %v3132 = vld [vmem:[#allocation8 + $0x4] sm:$0xf]
        %v3133 = vld [vmem:[#allocation8 + $0x8] sm:$0xf]
        %v3134 = vld [vmem:[#allocation8 + $0xc] sm:$0xf]
        %v3135 = vld [vmem:[#allocation8 + $0x10] sm:$0xf]
        %v3136 = vld [vmem:[#allocation8 + $0x14] sm:$0xf]
        %v3137 = vld [vmem:[#allocation8 + $0x18] sm:$0xf]
        %v3138 = vld [vmem:[#allocation8 + $0x1c] sm:$0xf]
        %v3139 = vld [vmem:[#allocation8 + $0x20] sm:$0xf]
        %v3140 = vld [vmem:[#allocation8 + $0x24] sm:$0xf]
        %v3141 = vld [vmem:[#allocation8 + $0x28] sm:$0xf]
        %v3142 = vld [vmem:[#allocation8 + $0x2c] sm:$0xf]
        %v3143 = vld [vmem:[#allocation8 + $0x30] sm:$0xf]
        %v3144 = vld [vmem:[#allocation8 + $0x34] sm:$0xf]
        %v3145 = vld [vmem:[#allocation8 + $0x38] sm:$0xf]
        %v3146 = vld [vmem:[#allocation8 + $0x3c] sm:$0xf]
        %v3147 = vlaneseq
        %v3148 = vshrl.u32 %v3147, 7
        %v3149 = vsub.s32 0, %v3148
        %v3150 = vrot.slane %v389, %v3149
        %v3167 = vunpack.c.l.b16 %v3131
        %v3168 = vunpack.c.l.b16 %v3132
        %v3169 = vunpack.c.l.b16 %v3133
        %v3170 = vunpack.c.l.b16 %v3134
        %v3171 = vunpack.c.l.b16 %v3135
        %v3172 = vunpack.c.l.b16 %v3136
        %v3173 = vunpack.c.l.b16 %v3137
        %v3174 = vunpack.c.l.b16 %v3138
        %v3175 = vunpack.c.l.b16 %v3139
        %v3176 = vunpack.c.l.b16 %v3140
        %v3177 = vunpack.c.l.b16 %v3141
        %v3178 = vunpack.c.l.b16 %v3142
        %v3179 = vunpack.c.l.b16 %v3143
        %v3180 = vunpack.c.l.b16 %v3144
        %v3181 = vunpack.c.l.b16 %v3145
        %v3182 = vunpack.c.l.b16 %v3146
        %v3183 = vpack.c.b16 %v3168, %v3167
        %v3184 = vpack.c.b16 %v3170, %v3169
        %v3185 = vpack.c.b16 %v3172, %v3171
        %v3186 = vpack.c.b16 %v3174, %v3173
        %v3187 = vpack.c.b16 %v3176, %v3175
        %v3188 = vpack.c.b16 %v3178, %v3177
        %v3189 = vpack.c.b16 %v3180, %v3179
        %v3190 = vpack.c.b16 %v3182, %v3181
        %3199 = vmatprep.subr.bf16.mxu0 0
        %3200 = vmatpush1.bf16.msra.mxu0 %v3183
        %3201 = vmatprep.subr.bf16.mxu0 0
        %3202 = vmatpush1.bf16.msra.mxu0 %v3184
        %3203 = vmatprep.subr.bf16.mxu0 0
        %3204 = vmatpush1.bf16.msra.mxu0 %v3185
        %3205 = vmatprep.subr.bf16.mxu0 0
        %3206 = vmatpush1.bf16.msra.mxu0 %v3186
        %3207 = vmatprep.subr.bf16.mxu0 0
        %3208 = vmatpush1.bf16.msra.mxu0 %v3187
        %3209 = vmatprep.subr.bf16.mxu0 0
        %3210 = vmatpush1.bf16.msra.mxu0 %v3188
        %3211 = vmatprep.subr.bf16.mxu0 0
        %3212 = vmatpush1.bf16.msra.mxu0 %v3189
        %3213 = vmatprep.subr.bf16.mxu0 0
        %3214 = vmatpush1.bf16.msra.mxu0 %v3190
        %3215 = vmatprep.subr.bf16.mxu0 0
        %3216 = vmatpush1.bf16.msra.mxu0 0
        %3217 = vmatprep.subr.bf16.mxu0 0
        %3218 = vmatpush1.bf16.msra.mxu0 0
        %3219 = vmatprep.subr.bf16.mxu0 0
        %3220 = vmatpush1.bf16.msra.mxu0 0
        %3221 = vmatprep.subr.bf16.mxu0 0
        %3222 = vmatpush1.bf16.msra.mxu0 0
        %3223 = vmatprep.subr.bf16.mxu0 0
        %3224 = vmatpush1.bf16.msra.mxu0 0
        %3225 = vmatprep.subr.bf16.mxu0 0
        %3226 = vmatpush1.bf16.msra.mxu0 0
        %3227 = vmatprep.subr.bf16.mxu0 0
        %3228 = vmatpush1.bf16.msra.mxu0 0
        %3229 = vmatprep.subr.bf16.mxu0 0
        %3230 = vmatpush1.bf16.msra.mxu0 0
        %3231 = vmatprep.mubr.bf16.mxu0 0
        %3232 = vmatmul.mubr.bf16.gmra.mrb[0].mxu0 %v3123
        %v3233 = vpop.f32.mrb[0].mxu0
        %v3234 = vadd.f32 %v3150, %v3233
        %v3235 = vpop.f32.mrb[0].mxu0
        %v3236 = vpop.f32.mrb[0].mxu0
        %v3237 = vadd.f32 %v3150, %v3236
        %v3238 = vpop.f32.mrb[0].mxu0
        %3239 = vmatprep.mubr.bf16.mxu0 0
        %3240 = vmatmul.mubr.bf16.gmra.mrb[0].mxu0 %v3124
        %v3241 = vpop.f32.mrb[0].mxu0
        %v3242 = vadd.f32 %v3150, %v3241
        %v3243 = vpop.f32.mrb[0].mxu0
        %v3244 = vpop.f32.mrb[0].mxu0
        %v3245 = vadd.f32 %v3150, %v3244
        %v3246 = vpop.f32.mrb[0].mxu0
        %3247 = vmatprep.mubr.bf16.mxu0 0
        %3248 = vmatmul.mubr.bf16.gmra.mrb[0].mxu0 %v3125
        %v3249 = vpop.f32.mrb[0].mxu0
        %v3250 = vadd.f32 %v3150, %v3249
        %v3251 = vpop.f32.mrb[0].mxu0
        %v3252 = vpop.f32.mrb[0].mxu0
        %v3253 = vadd.f32 %v3150, %v3252
        %v3254 = vpop.f32.mrb[0].mxu0
        %3255 = vmatprep.mubr.bf16.mxu0 0
        %3256 = vmatmul.mubr.bf16.gmra.mrb[0].mxu0 %v3126
        %v3257 = vpop.f32.mrb[0].mxu0
        %v3258 = vadd.f32 %v3150, %v3257
        %v3259 = vpop.f32.mrb[0].mxu0
        %v3260 = vpop.f32.mrb[0].mxu0
        %v3261 = vadd.f32 %v3150, %v3260
        %v3262 = vpop.f32.mrb[0].mxu0
        %3263 = vmatprep.mubr.bf16.mxu0 0
        %3264 = vmatmul.mubr.bf16.gmra.mrb[0].mxu0 %v3127
        %v3265 = vpop.f32.mrb[0].mxu0
        %v3266 = vadd.f32 %v3150, %v3265
        %v3267 = vpop.f32.mrb[0].mxu0
        %v3268 = vpop.f32.mrb[0].mxu0
        %v3269 = vadd.f32 %v3150, %v3268
        %v3270 = vpop.f32.mrb[0].mxu0
        %3271 = vmatprep.mubr.bf16.mxu0 0
        %3272 = vmatmul.mubr.bf16.gmra.mrb[0].mxu0 %v3128
        %v3273 = vpop.f32.mrb[0].mxu0
        %v3274 = vadd.f32 %v3150, %v3273
        %v3275 = vpop.f32.mrb[0].mxu0
        %v3276 = vpop.f32.mrb[0].mxu0
        %v3277 = vadd.f32 %v3150, %v3276
        %v3278 = vpop.f32.mrb[0].mxu0
        %3279 = vmatprep.mubr.bf16.mxu0 0
        %3280 = vmatmul.mubr.bf16.gmra.mrb[0].mxu0 %v3129
        %v3281 = vpop.f32.mrb[0].mxu0
        %v3282 = vadd.f32 %v3150, %v3281
        %v3283 = vpop.f32.mrb[0].mxu0
        %v3284 = vpop.f32.mrb[0].mxu0
        %v3285 = vadd.f32 %v3150, %v3284
        %v3286 = vpop.f32.mrb[0].mxu0
        %3287 = vmatprep.mubr.bf16.mxu0 0
        %3288 = vmatmul.mubr.bf16.gmra.mrb[0].mxu0 %v3130
        %v3289 = vpop.f32.mrb[0].mxu0
        %v3290 = vadd.f32 %v3150, %v3289
        %v3291 = vpop.f32.mrb[0].mxu0
        %v3292 = vpop.f32.mrb[0].mxu0
        %v3293 = vadd.f32 %v3150, %v3292
        %v3294 = vpop.f32.mrb[0].mxu0
        %3295 = vdwg.mxu0
        %v3296 = vadd.f32 %v371, %v3234
        %v3297 = vadd.f32 %v372, %v3237
        %v3298 = vadd.f32 %v373, %v3242
        %v3299 = vadd.f32 %v374, %v3245
        %v3300 = vadd.f32 %v375, %v3250
        %v3301 = vadd.f32 %v376, %v3253
        %v3302 = vadd.f32 %v377, %v3258
        %v3303 = vadd.f32 %v378, %v3261
        %v3304 = vadd.f32 %v379, %v3266
        %v3305 = vadd.f32 %v380, %v3269
        %v3306 = vadd.f32 %v381, %v3274
        %v3307 = vadd.f32 %v382, %v3277
        %v3308 = vadd.f32 %v383, %v3282
        %v3309 = vadd.f32 %v384, %v3285
        %v3310 = vadd.f32 %v385, %v3290
        %v3311 = vadd.f32 %v386, %v3293
        %3312 = vadd.xlane.f32.xlu0 %v3296
        %v3313 = vpop.xlane.xlu0 %3312
        %3314 = vadd.xlane.f32.xlu0 %v3297
        %v3315 = vpop.xlane.xlu0 %3314
        %3316 = vadd.xlane.f32.xlu0 %v3298
        %v3317 = vpop.xlane.xlu0 %3316
        %3318 = vadd.xlane.f32.xlu0 %v3299
        %v3319 = vpop.xlane.xlu0 %3318
        %3320 = vadd.xlane.f32.xlu0 %v3300
        %v3321 = vpop.xlane.xlu0 %3320
        %3322 = vadd.xlane.f32.xlu0 %v3301
        %v3323 = vpop.xlane.xlu0 %3322
        %3324 = vadd.xlane.f32.xlu0 %v3302
        %v3325 = vpop.xlane.xlu0 %3324
        %3326 = vadd.xlane.f32.xlu0 %v3303
        %v3327 = vpop.xlane.xlu0 %3326
        %3328 = vadd.xlane.f32.xlu0 %v3304
        %v3329 = vpop.xlane.xlu0 %3328
        %3330 = vadd.xlane.f32.xlu0 %v3305
        %v3331 = vpop.xlane.xlu0 %3330
        %3332 = vadd.xlane.f32.xlu0 %v3306
        %v3333 = vpop.xlane.xlu0 %3332
        %3334 = vadd.xlane.f32.xlu0 %v3307
        %v3335 = vpop.xlane.xlu0 %3334
        %3336 = vadd.xlane.f32.xlu0 %v3308
        %v3337 = vpop.xlane.xlu0 %3336
        %3338 = vadd.xlane.f32.xlu0 %v3309
        %v3339 = vpop.xlane.xlu0 %3338
        %3340 = vadd.xlane.f32.xlu0 %v3310
        %v3341 = vpop.xlane.xlu0 %3340
        %3342 = vadd.xlane.f32.xlu0 %v3311
        %v3343 = vpop.xlane.xlu0 %3342
        %v3344 = vmul.f32 %v3313, %v426
        %v3345 = vmul.f32 %v3315, %v426
        %v3346 = vmul.f32 %v3317, %v426
        %v3347 = vmul.f32 %v3319, %v426
        %v3348 = vmul.f32 %v3321, %v426
        %v3349 = vmul.f32 %v3323, %v426
        %v3350 = vmul.f32 %v3325, %v426
        %v3351 = vmul.f32 %v3327, %v426
        %v3352 = vmul.f32 %v3329, %v426
        %v3353 = vmul.f32 %v3331, %v426
        %v3354 = vmul.f32 %v3333, %v426
        %v3355 = vmul.f32 %v3335, %v426
        %v3356 = vmul.f32 %v3337, %v426
        %v3357 = vmul.f32 %v3339, %v426
        %v3358 = vmul.f32 %v3341, %v426
        %v3359 = vmul.f32 %v3343, %v426
        %v3360 = vsub.f32 %v3296, %v3344
        %v3361 = vsub.f32 %v3297, %v3345
        %v3362 = vsub.f32 %v3298, %v3346
        %v3363 = vsub.f32 %v3299, %v3347
        %v3364 = vsub.f32 %v3300, %v3348
        %v3365 = vsub.f32 %v3301, %v3349
        %v3366 = vsub.f32 %v3302, %v3350
        %v3367 = vsub.f32 %v3303, %v3351
        %v3368 = vsub.f32 %v3304, %v3352
        %v3369 = vsub.f32 %v3305, %v3353
        %v3370 = vsub.f32 %v3306, %v3354
        %v3371 = vsub.f32 %v3307, %v3355
        %v3372 = vsub.f32 %v3308, %v3356
        %v3373 = vsub.f32 %v3309, %v3357
        %v3374 = vsub.f32 %v3310, %v3358
        %v3375 = vsub.f32 %v3311, %v3359
        %v3376 = vmul.f32 %v3360, %v3360
        %v3377 = vmul.f32 %v3361, %v3361
        %v3378 = vmul.f32 %v3362, %v3362
        %v3379 = vmul.f32 %v3363, %v3363
        %v3380 = vmul.f32 %v3364, %v3364
        %v3381 = vmul.f32 %v3365, %v3365
        %v3382 = vmul.f32 %v3366, %v3366
        %v3383 = vmul.f32 %v3367, %v3367
        %v3384 = vmul.f32 %v3368, %v3368
        %v3385 = vmul.f32 %v3369, %v3369
        %v3386 = vmul.f32 %v3370, %v3370
        %v3387 = vmul.f32 %v3371, %v3371
        %v3388 = vmul.f32 %v3372, %v3372
        %v3389 = vmul.f32 %v3373, %v3373
        %v3390 = vmul.f32 %v3374, %v3374
        %v3391 = vmul.f32 %v3375, %v3375
        %3392 = vadd.xlane.f32.xlu0 %v3376
        %v3393 = vpop.xlane.xlu0 %3392
        %3394 = vadd.xlane.f32.xlu0 %v3377
        %v3395 = vpop.xlane.xlu0 %3394
        %3396 = vadd.xlane.f32.xlu0 %v3378
        %v3397 = vpop.xlane.xlu0 %3396
        %3398 = vadd.xlane.f32.xlu0 %v3379
        %v3399 = vpop.xlane.xlu0 %3398
        %3400 = vadd.xlane.f32.xlu0 %v3380
        %v3401 = vpop.xlane.xlu0 %3400
        %3402 = vadd.xlane.f32.xlu0 %v3381
        %v3403 = vpop.xlane.xlu0 %3402
        %3404 = vadd.xlane.f32.xlu0 %v3382
        %v3405 = vpop.xlane.xlu0 %3404
        %3406 = vadd.xlane.f32.xlu0 %v3383
        %v3407 = vpop.xlane.xlu0 %3406
        %3408 = vadd.xlane.f32.xlu0 %v3384
        %v3409 = vpop.xlane.xlu0 %3408
        %3410 = vadd.xlane.f32.xlu0 %v3385
        %v3411 = vpop.xlane.xlu0 %3410
        %3412 = vadd.xlane.f32.xlu0 %v3386
        %v3413 = vpop.xlane.xlu0 %3412
        %3414 = vadd.xlane.f32.xlu0 %v3387
        %v3415 = vpop.xlane.xlu0 %3414
        %3416 = vadd.xlane.f32.xlu0 %v3388
        %v3417 = vpop.xlane.xlu0 %3416
        %3418 = vadd.xlane.f32.xlu0 %v3389
        %v3419 = vpop.xlane.xlu0 %3418
        %3420 = vadd.xlane.f32.xlu0 %v3390
        %v3421 = vpop.xlane.xlu0 %3420
        %3422 = vadd.xlane.f32.xlu0 %v3391
        %v3423 = vpop.xlane.xlu0 %3422
        %v3424 = vmul.f32 %v3393, %v426
        %v3425 = vmul.f32 %v3395, %v426
        %v3426 = vmul.f32 %v3397, %v426
        %v3427 = vmul.f32 %v3399, %v426
        %v3428 = vmul.f32 %v3401, %v426
        %v3429 = vmul.f32 %v3403, %v426
        %v3430 = vmul.f32 %v3405, %v426
        %v3431 = vmul.f32 %v3407, %v426
        %v3432 = vmul.f32 %v3409, %v426
        %v3433 = vmul.f32 %v3411, %v426
        %v3434 = vmul.f32 %v3413, %v426
        %v3435 = vmul.f32 %v3415, %v426
        %v3436 = vmul.f32 %v3417, %v426
        %v3437 = vmul.f32 %v3419, %v426
        %v3438 = vmul.f32 %v3421, %v426
        %v3439 = vmul.f32 %v3423, %v426
        %v3440 = vadd.f32 %v3424, 1e-05
        %v3441 = vadd.f32 %v3425, 1e-05
        %v3442 = vadd.f32 %v3426, 1e-05
        %v3443 = vadd.f32 %v3427, 1e-05
        %v3444 = vadd.f32 %v3428, 1e-05
        %v3445 = vadd.f32 %v3429, 1e-05
        %v3446 = vadd.f32 %v3430, 1e-05
        %v3447 = vadd.f32 %v3431, 1e-05
        %v3448 = vadd.f32 %v3432, 1e-05
        %v3449 = vadd.f32 %v3433, 1e-05
        %v3450 = vadd.f32 %v3434, 1e-05
        %v3451 = vadd.f32 %v3435, 1e-05
        %v3452 = vadd.f32 %v3436, 1e-05
        %v3453 = vadd.f32 %v3437, 1e-05
        %v3454 = vadd.f32 %v3438, 1e-05
        %v3455 = vadd.f32 %v3439, 1e-05
        %v3456 = vrsqrt.pop %v3440
        %v3457 = vrsqrt.pop %v3441
        %v3458 = vrsqrt.pop %v3442
        %v3459 = vrsqrt.pop %v3443
        %v3460 = vrsqrt.pop %v3444
        %v3461 = vrsqrt.pop %v3445
        %v3462 = vrsqrt.pop %v3446
        %v3463 = vrsqrt.pop %v3447
        %v3464 = vrsqrt.pop %v3448
        %v3465 = vrsqrt.pop %v3449
        %v3466 = vrsqrt.pop %v3450
        %v3467 = vrsqrt.pop %v3451
        %v3468 = vrsqrt.pop %v3452
        %v3469 = vrsqrt.pop %v3453
        %v3470 = vrsqrt.pop %v3454
        %v3471 = vrsqrt.pop %v3455
        %v3472 = vmul.f32 %v3360, %v3456
        %v3473 = vmul.f32 %v3361, %v3457
        %v3474 = vmul.f32 %v3362, %v3458
        %v3475 = vmul.f32 %v3363, %v3459
        %v3476 = vmul.f32 %v3364, %v3460
        %v3477 = vmul.f32 %v3365, %v3461
        %v3478 = vmul.f32 %v3366, %v3462
        %v3479 = vmul.f32 %v3367, %v3463
        %v3480 = vmul.f32 %v3368, %v3464
        %v3481 = vmul.f32 %v3369, %v3465
        %v3482 = vmul.f32 %v3370, %v3466
        %v3483 = vmul.f32 %v3371, %v3467
        %v3484 = vmul.f32 %v3372, %v3468
        %v3485 = vmul.f32 %v3373, %v3469
        %v3486 = vmul.f32 %v3374, %v3470
        %v3487 = vmul.f32 %v3375, %v3471
        %v3488 = vlaneseq
        %v3489 = vshrl.u32 %v3488, 7
        %v3490 = vsub.s32 0, %v3489
        %v3491 = vrot.slane %v390, %v3490
        %v3492 = vmul.f32 %v3472, %v3491
        %v3493 = vmul.f32 %v3473, %v3491
        %v3494 = vmul.f32 %v3474, %v3491
        %v3495 = vmul.f32 %v3475, %v3491
        %v3496 = vmul.f32 %v3476, %v3491
        %v3497 = vmul.f32 %v3477, %v3491
        %v3498 = vmul.f32 %v3478, %v3491
        %v3499 = vmul.f32 %v3479, %v3491
        %v3500 = vmul.f32 %v3480, %v3491
        %v3501 = vmul.f32 %v3481, %v3491
        %v3502 = vmul.f32 %v3482, %v3491
        %v3503 = vmul.f32 %v3483, %v3491
        %v3504 = vmul.f32 %v3484, %v3491
        %v3505 = vmul.f32 %v3485, %v3491
        %v3506 = vmul.f32 %v3486, %v3491
        %v3507 = vmul.f32 %v3487, %v3491
        %v3508 = vlaneseq
        %v3509 = vshrl.u32 %v3508, 7
        %v3510 = vsub.s32 0, %v3509
        %v3511 = vrot.slane %v391, %v3510
        %v3512 = vadd.f32 %v3492, %v3511
        %v3513 = vadd.f32 %v3493, %v3511
        %v3514 = vadd.f32 %v3494, %v3511
        %v3515 = vadd.f32 %v3495, %v3511
        %v3516 = vadd.f32 %v3496, %v3511
        %v3517 = vadd.f32 %v3497, %v3511
        %v3518 = vadd.f32 %v3498, %v3511
        %v3519 = vadd.f32 %v3499, %v3511
        %v3520 = vadd.f32 %v3500, %v3511
        %v3521 = vadd.f32 %v3501, %v3511
        %v3522 = vadd.f32 %v3502, %v3511
        %v3523 = vadd.f32 %v3503, %v3511
        %v3524 = vadd.f32 %v3504, %v3511
        %v3525 = vadd.f32 %v3505, %v3511
        %v3526 = vadd.f32 %v3506, %v3511
        %v3527 = vadd.f32 %v3507, %v3511
        %v3528 = vpack.c.bf16 %v3513, %v3512
        %v3529 = vpack.c.bf16 %v3515, %v3514
        %v3530 = vpack.c.bf16 %v3517, %v3516
        %v3531 = vpack.c.bf16 %v3519, %v3518
        %v3532 = vpack.c.bf16 %v3521, %v3520
        %v3533 = vpack.c.bf16 %v3523, %v3522
        %v3534 = vpack.c.bf16 %v3525, %v3524
        %v3535 = vpack.c.bf16 %v3527, %v3526
        %v3536 = vld [vmem:[#allocation10] sm:$0xff]
        %v3537 = vld [vmem:[#allocation10 + $0x8] sm:$0xff]
        %v3538 = vld [vmem:[#allocation10 + $0x10] sm:$0xff]
        %v3539 = vld [vmem:[#allocation10 + $0x18] sm:$0xff]
        %v3540 = vld [vmem:[#allocation10 + $0x20] sm:$0xff]
        %v3541 = vld [vmem:[#allocation10 + $0x28] sm:$0xff]
        %v3542 = vld [vmem:[#allocation10 + $0x30] sm:$0xff]
        %v3543 = vld [vmem:[#allocation10 + $0x38] sm:$0xff]
        %v3544 = vld [vmem:[#allocation10 + $0x40] sm:$0xff]
        %v3545 = vld [vmem:[#allocation10 + $0x48] sm:$0xff]
        %v3546 = vld [vmem:[#allocation10 + $0x50] sm:$0xff]
        %v3547 = vld [vmem:[#allocation10 + $0x58] sm:$0xff]
        %v3548 = vld [vmem:[#allocation10 + $0x60] sm:$0xff]
        %v3549 = vld [vmem:[#allocation10 + $0x68] sm:$0xff]
        %v3550 = vld [vmem:[#allocation10 + $0x70] sm:$0xff]
        %v3551 = vld [vmem:[#allocation10 + $0x78] sm:$0xff]
        %v3552 = vld [vmem:[#allocation10 + $0x80] sm:$0xff]
        %v3553 = vld [vmem:[#allocation10 + $0x88] sm:$0xff]
        %v3554 = vld [vmem:[#allocation10 + $0x90] sm:$0xff]
        %v3555 = vld [vmem:[#allocation10 + $0x98] sm:$0xff]
        %v3556 = vld [vmem:[#allocation10 + $0xa0] sm:$0xff]
        %v3557 = vld [vmem:[#allocation10 + $0xa8] sm:$0xff]
        %v3558 = vld [vmem:[#allocation10 + $0xb0] sm:$0xff]
        %v3559 = vld [vmem:[#allocation10 + $0xb8] sm:$0xff]
        %v3560 = vld [vmem:[#allocation10 + $0xc0] sm:$0xff]
        %v3561 = vld [vmem:[#allocation10 + $0xc8] sm:$0xff]
        %v3562 = vld [vmem:[#allocation10 + $0xd0] sm:$0xff]
        %v3563 = vld [vmem:[#allocation10 + $0xd8] sm:$0xff]
        %v3564 = vld [vmem:[#allocation10 + $0xe0] sm:$0xff]
        %v3565 = vld [vmem:[#allocation10 + $0xe8] sm:$0xff]
        %v3566 = vld [vmem:[#allocation10 + $0xf0] sm:$0xff]
        %v3567 = vld [vmem:[#allocation10 + $0xf8] sm:$0xff]
        %v3569 = vlaneseq
        %v3570 = vshrl.u32 %v3569, 7
        %v3571 = vsub.s32 0, %v3570
        %v3572 = vrot.slane %v393, %v3571
        %v3573 = vlaneseq
        %v3574 = vshrl.u32 %v3573, 7
        %v3575 = vsub.s32 1, %v3574
        %v3576 = vrot.slane %v393, %v3575
        %v3577 = vlaneseq
        %v3578 = vshrl.u32 %v3577, 7
        %v3579 = vsub.s32 2, %v3578
        %v3580 = vrot.slane %v393, %v3579
        %v3581 = vlaneseq
        %v3582 = vshrl.u32 %v3581, 7
        %v3583 = vsub.s32 3, %v3582
        %v3584 = vrot.slane %v393, %v3583
        %v3621 = vunpack.c.l.b16 %v3536
        %v3622 = vunpack.c.h.b16 %v3536
        %v3623 = vunpack.c.l.b16 %v3537
        %v3624 = vunpack.c.h.b16 %v3537
        %v3625 = vunpack.c.l.b16 %v3538
        %v3626 = vunpack.c.h.b16 %v3538
        %v3627 = vunpack.c.l.b16 %v3539
        %v3628 = vunpack.c.h.b16 %v3539
        %v3629 = vunpack.c.l.b16 %v3540
        %v3630 = vunpack.c.h.b16 %v3540
        %v3631 = vunpack.c.l.b16 %v3541
        %v3632 = vunpack.c.h.b16 %v3541
        %v3633 = vunpack.c.l.b16 %v3542
        %v3634 = vunpack.c.h.b16 %v3542
        %v3635 = vunpack.c.l.b16 %v3543
        %v3636 = vunpack.c.h.b16 %v3543
        %v3637 = vunpack.c.l.b16 %v3544
        %v3638 = vunpack.c.h.b16 %v3544
        %v3639 = vunpack.c.l.b16 %v3545
        %v3640 = vunpack.c.h.b16 %v3545
        %v3641 = vunpack.c.l.b16 %v3546
        %v3642 = vunpack.c.h.b16 %v3546
        %v3643 = vunpack.c.l.b16 %v3547
        %v3644 = vunpack.c.h.b16 %v3547
        %v3645 = vunpack.c.l.b16 %v3548
        %v3646 = vunpack.c.h.b16 %v3548
        %v3647 = vunpack.c.l.b16 %v3549
        %v3648 = vunpack.c.h.b16 %v3549
        %v3649 = vunpack.c.l.b16 %v3550
        %v3650 = vunpack.c.h.b16 %v3550
        %v3651 = vunpack.c.l.b16 %v3551
        %v3652 = vunpack.c.h.b16 %v3551
        %v3653 = vunpack.c.l.b16 %v3552
        %v3654 = vunpack.c.h.b16 %v3552
        %v3655 = vunpack.c.l.b16 %v3553
        %v3656 = vunpack.c.h.b16 %v3553
        %v3657 = vunpack.c.l.b16 %v3554
        %v3658 = vunpack.c.h.b16 %v3554
        %v3659 = vunpack.c.l.b16 %v3555
        %v3660 = vunpack.c.h.b16 %v3555
        %v3661 = vunpack.c.l.b16 %v3556
        %v3662 = vunpack.c.h.b16 %v3556
        %v3663 = vunpack.c.l.b16 %v3557
        %v3664 = vunpack.c.h.b16 %v3557
        %v3665 = vunpack.c.l.b16 %v3558
        %v3666 = vunpack.c.h.b16 %v3558
        %v3667 = vunpack.c.l.b16 %v3559
        %v3668 = vunpack.c.h.b16 %v3559
        %v3669 = vunpack.c.l.b16 %v3560
        %v3670 = vunpack.c.h.b16 %v3560
        %v3671 = vunpack.c.l.b16 %v3561
        %v3672 = vunpack.c.h.b16 %v3561
        %v3673 = vunpack.c.l.b16 %v3562
        %v3674 = vunpack.c.h.b16 %v3562
        %v3675 = vunpack.c.l.b16 %v3563
        %v3676 = vunpack.c.h.b16 %v3563
        %v3677 = vunpack.c.l.b16 %v3564
        %v3678 = vunpack.c.h.b16 %v3564
        %v3679 = vunpack.c.l.b16 %v3565
        %v3680 = vunpack.c.h.b16 %v3565
        %v3681 = vunpack.c.l.b16 %v3566
        %v3682 = vunpack.c.h.b16 %v3566
        %v3683 = vunpack.c.l.b16 %v3567
        %v3684 = vunpack.c.h.b16 %v3567
        %v3685 = vpack.c.b16 %v3625, %v3621
        %v3686 = vpack.c.b16 %v3626, %v3622
        %v3687 = vpack.c.b16 %v3627, %v3623
        %v3688 = vpack.c.b16 %v3628, %v3624
        %v3689 = vpack.c.b16 %v3633, %v3629
        %v3690 = vpack.c.b16 %v3634, %v3630
        %v3691 = vpack.c.b16 %v3635, %v3631
        %v3692 = vpack.c.b16 %v3636, %v3632
        %v3693 = vpack.c.b16 %v3641, %v3637
        %v3694 = vpack.c.b16 %v3642, %v3638
        %v3695 = vpack.c.b16 %v3643, %v3639
        %v3696 = vpack.c.b16 %v3644, %v3640
        %v3697 = vpack.c.b16 %v3649, %v3645
        %v3698 = vpack.c.b16 %v3650, %v3646
        %v3699 = vpack.c.b16 %v3651, %v3647
        %v3700 = vpack.c.b16 %v3652, %v3648
        %v3701 = vpack.c.b16 %v3657, %v3653
        %v3702 = vpack.c.b16 %v3658, %v3654
        %v3703 = vpack.c.b16 %v3659, %v3655
        %v3704 = vpack.c.b16 %v3660, %v3656
        %v3705 = vpack.c.b16 %v3665, %v3661
        %v3706 = vpack.c.b16 %v3666, %v3662
        %v3707 = vpack.c.b16 %v3667, %v3663
        %v3708 = vpack.c.b16 %v3668, %v3664
        %v3709 = vpack.c.b16 %v3673, %v3669
        %v3710 = vpack.c.b16 %v3674, %v3670
        %v3711 = vpack.c.b16 %v3675, %v3671
        %v3712 = vpack.c.b16 %v3676, %v3672
        %v3713 = vpack.c.b16 %v3681, %v3677
        %v3714 = vpack.c.b16 %v3682, %v3678
        %v3715 = vpack.c.b16 %v3683, %v3679
        %v3716 = vpack.c.b16 %v3684, %v3680
        %3749 = vmatprep.subr.bf16.mxu0 %v3686
        %3750 = vmatpush1.bf16.msra.mxu0 %v3685
        %3751 = vmatprep.subr.bf16.mxu0 %v3690
        %3752 = vmatpush1.bf16.msra.mxu0 %v3689
        %3753 = vmatprep.subr.bf16.mxu0 %v3694
        %3754 = vmatpush1.bf16.msra.mxu0 %v3693
        %3755 = vmatprep.subr.bf16.mxu0 %v3698
        %3756 = vmatpush1.bf16.msra.mxu0 %v3697
        %3757 = vmatprep.subr.bf16.mxu0 %v3702
        %3758 = vmatpush1.bf16.msra.mxu0 %v3701
        %3759 = vmatprep.subr.bf16.mxu0 %v3706
        %3760 = vmatpush1.bf16.msra.mxu0 %v3705
        %3761 = vmatprep.subr.bf16.mxu0 %v3710
        %3762 = vmatpush1.bf16.msra.mxu0 %v3709
        %3763 = vmatprep.subr.bf16.mxu0 %v3714
        %3764 = vmatpush1.bf16.msra.mxu0 %v3713
        %3765 = vmatprep.subr.bf16.mxu0 0
        %3766 = vmatpush1.bf16.msra.mxu0 0
        %3767 = vmatprep.subr.bf16.mxu0 0
        %3768 = vmatpush1.bf16.msra.mxu0 0
        %3769 = vmatprep.subr.bf16.mxu0 0
        %3770 = vmatpush1.bf16.msra.mxu0 0
        %3771 = vmatprep.subr.bf16.mxu0 0
        %3772 = vmatpush1.bf16.msra.mxu0 0
        %3773 = vmatprep.subr.bf16.mxu0 0
        %3774 = vmatpush1.bf16.msra.mxu0 0
        %3775 = vmatprep.subr.bf16.mxu0 0
        %3776 = vmatpush1.bf16.msra.mxu0 0
        %3777 = vmatprep.subr.bf16.mxu0 0
        %3778 = vmatpush1.bf16.msra.mxu0 0
        %3779 = vmatprep.subr.bf16.mxu0 0
        %3780 = vmatpush1.bf16.msra.mxu0 0
        %3781 = vmatprep.mubr.bf16.mxu0 0
        %3782 = vmatmul.mubr.bf16.gmra.mrb[0].mxu0 %v3528
        %v3783 = vpop.f32.mrb[0].mxu0
        %v3784 = vadd.f32 %v3572, %v3783
        %v3785 = vpop.f32.mrb[0].mxu0
        %v3786 = vadd.f32 %v3576, %v3785
        %v3787 = vpop.f32.mrb[0].mxu0
        %v3788 = vadd.f32 %v3572, %v3787
        %v3789 = vpop.f32.mrb[0].mxu0
        %v3790 = vadd.f32 %v3576, %v3789
        %3791 = vmatprep.mubr.bf16.mxu0 0
        %3792 = vmatmul.mubr.bf16.gmra.mrb[0].mxu0 %v3529
        %v3793 = vpop.f32.mrb[0].mxu0
        %v3794 = vadd.f32 %v3572, %v3793
        %v3795 = vpop.f32.mrb[0].mxu0
        %v3796 = vadd.f32 %v3576, %v3795
        %v3797 = vpop.f32.mrb[0].mxu0
        %v3798 = vadd.f32 %v3572, %v3797
        %v3799 = vpop.f32.mrb[0].mxu0
        %v3800 = vadd.f32 %v3576, %v3799
        %3801 = vmatprep.mubr.bf16.mxu0 0
        %3802 = vmatmul.mubr.bf16.gmra.mrb[0].mxu0 %v3530
        %v3803 = vpop.f32.mrb[0].mxu0
        %v3804 = vadd.f32 %v3572, %v3803
        %v3805 = vpop.f32.mrb[0].mxu0
        %v3806 = vadd.f32 %v3576, %v3805
        %v3807 = vpop.f32.mrb[0].mxu0
        %v3808 = vadd.f32 %v3572, %v3807
        %v3809 = vpop.f32.mrb[0].mxu0
        %v3810 = vadd.f32 %v3576, %v3809
        %3811 = vmatprep.mubr.bf16.mxu0 0
        %3812 = vmatmul.mubr.bf16.gmra.mrb[0].mxu0 %v3531
        %v3813 = vpop.f32.mrb[0].mxu0
        %v3814 = vadd.f32 %v3572, %v3813
        %v3815 = vpop.f32.mrb[0].mxu0
        %v3816 = vadd.f32 %v3576, %v3815
        %v3817 = vpop.f32.mrb[0].mxu0
        %v3818 = vadd.f32 %v3572, %v3817
        %v3819 = vpop.f32.mrb[0].mxu0
        %v3820 = vadd.f32 %v3576, %v3819
        %3821 = vmatprep.mubr.bf16.mxu0 0
        %3822 = vmatmul.mubr.bf16.gmra.mrb[0].mxu0 %v3532
        %v3823 = vpop.f32.mrb[0].mxu0
        %v3824 = vadd.f32 %v3572, %v3823
        %v3825 = vpop.f32.mrb[0].mxu0
        %v3826 = vadd.f32 %v3576, %v3825
        %v3827 = vpop.f32.mrb[0].mxu0
        %v3828 = vadd.f32 %v3572, %v3827
        %v3829 = vpop.f32.mrb[0].mxu0
        %v3830 = vadd.f32 %v3576, %v3829
        %3831 = vmatprep.mubr.bf16.mxu0 0
        %3832 = vmatmul.mubr.bf16.gmra.mrb[0].mxu0 %v3533
        %v3833 = vpop.f32.mrb[0].mxu0
        %v3834 = vadd.f32 %v3572, %v3833
        %v3835 = vpop.f32.mrb[0].mxu0
        %v3836 = vadd.f32 %v3576, %v3835
        %v3837 = vpop.f32.mrb[0].mxu0
        %v3838 = vadd.f32 %v3572, %v3837
        %v3839 = vpop.f32.mrb[0].mxu0
        %v3840 = vadd.f32 %v3576, %v3839
        %3841 = vmatprep.mubr.bf16.mxu0 0
        %3842 = vmatmul.mubr.bf16.gmra.mrb[0].mxu0 %v3534
        %v3843 = vpop.f32.mrb[0].mxu0
        %v3844 = vadd.f32 %v3572, %v3843
        %v3845 = vpop.f32.mrb[0].mxu0
        %v3846 = vadd.f32 %v3576, %v3845
        %v3847 = vpop.f32.mrb[0].mxu0
        %v3848 = vadd.f32 %v3572, %v3847
        %v3849 = vpop.f32.mrb[0].mxu0
        %v3850 = vadd.f32 %v3576, %v3849
        %3851 = vmatprep.mubr.bf16.mxu0 0
        %3852 = vmatmul.mubr.bf16.gmra.mrb[0].mxu0 %v3535
        %v3853 = vpop.f32.mrb[0].mxu0
        %v3854 = vadd.f32 %v3572, %v3853
        %v3855 = vpop.f32.mrb[0].mxu0
        %v3856 = vadd.f32 %v3576, %v3855
        %v3857 = vpop.f32.mrb[0].mxu0
        %v3858 = vadd.f32 %v3572, %v3857
        %v3859 = vpop.f32.mrb[0].mxu0
        %v3860 = vadd.f32 %v3576, %v3859
        %3861 = vdwg.mxu0
        %3862 = vmatprep.subr.bf16.mxu0 %v3688
        %3863 = vmatpush1.bf16.msra.mxu0 %v3687
        %3864 = vmatprep.subr.bf16.mxu0 %v3692
        %3865 = vmatpush1.bf16.msra.mxu0 %v3691
        %3866 = vmatprep.subr.bf16.mxu0 %v3696
        %3867 = vmatpush1.bf16.msra.mxu0 %v3695
        %3868 = vmatprep.subr.bf16.mxu0 %v3700
        %3869 = vmatpush1.bf16.msra.mxu0 %v3699
        %3870 = vmatprep.subr.bf16.mxu0 %v3704
        %3871 = vmatpush1.bf16.msra.mxu0 %v3703
        %3872 = vmatprep.subr.bf16.mxu0 %v3708
        %3873 = vmatpush1.bf16.msra.mxu0 %v3707
        %3874 = vmatprep.subr.bf16.mxu0 %v3712
        %3875 = vmatpush1.bf16.msra.mxu0 %v3711
        %3876 = vmatprep.subr.bf16.mxu0 %v3716
        %3877 = vmatpush1.bf16.msra.mxu0 %v3715
        %3878 = vmatprep.subr.bf16.mxu0 0
        %3879 = vmatpush1.bf16.msra.mxu0 0
        %3880 = vmatprep.subr.bf16.mxu0 0
        %3881 = vmatpush1.bf16.msra.mxu0 0
        %3882 = vmatprep.subr.bf16.mxu0 0
        %3883 = vmatpush1.bf16.msra.mxu0 0
        %3884 = vmatprep.subr.bf16.mxu0 0
        %3885 = vmatpush1.bf16.msra.mxu0 0
        %3886 = vmatprep.subr.bf16.mxu0 0
        %3887 = vmatpush1.bf16.msra.mxu0 0
        %3888 = vmatprep.subr.bf16.mxu0 0
        %3889 = vmatpush1.bf16.msra.mxu0 0
        %3890 = vmatprep.subr.bf16.mxu0 0
        %3891 = vmatpush1.bf16.msra.mxu0 0
        %3892 = vmatprep.subr.bf16.mxu0 0
        %3893 = vmatpush1.bf16.msra.mxu0 0
        %3894 = vmatprep.mubr.bf16.mxu0 0
        %3895 = vmatmul.mubr.bf16.gmra.mrb[0].mxu0 %v3528
        %v3896 = vpop.f32.mrb[0].mxu0
        %v3897 = vadd.f32 %v3580, %v3896
        %v3898 = vpop.f32.mrb[0].mxu0
        %v3899 = vadd.f32 %v3584, %v3898
        %v3900 = vpop.f32.mrb[0].mxu0
        %v3901 = vadd.f32 %v3580, %v3900
        %v3902 = vpop.f32.mrb[0].mxu0
        %v3903 = vadd.f32 %v3584, %v3902
        %3904 = vmatprep.mubr.bf16.mxu0 0
        %3905 = vmatmul.mubr.bf16.gmra.mrb[0].mxu0 %v3529
        %v3906 = vpop.f32.mrb[0].mxu0
        %v3907 = vadd.f32 %v3580, %v3906
        %v3908 = vpop.f32.mrb[0].mxu0
        %v3909 = vadd.f32 %v3584, %v3908
        %v3910 = vpop.f32.mrb[0].mxu0
        %v3911 = vadd.f32 %v3580, %v3910
        %v3912 = vpop.f32.mrb[0].mxu0
        %v3913 = vadd.f32 %v3584, %v3912
        %3914 = vmatprep.mubr.bf16.mxu0 0
        %3915 = vmatmul.mubr.bf16.gmra.mrb[0].mxu0 %v3530
        %v3916 = vpop.f32.mrb[0].mxu0
        %v3917 = vadd.f32 %v3580, %v3916
        %v3918 = vpop.f32.mrb[0].mxu0
        %v3919 = vadd.f32 %v3584, %v3918
        %v3920 = vpop.f32.mrb[0].mxu0
        %v3921 = vadd.f32 %v3580, %v3920
        %v3922 = vpop.f32.mrb[0].mxu0
        %v3923 = vadd.f32 %v3584, %v3922
        %3924 = vmatprep.mubr.bf16.mxu0 0
        %3925 = vmatmul.mubr.bf16.gmra.mrb[0].mxu0 %v3531
        %v3926 = vpop.f32.mrb[0].mxu0
        %v3927 = vadd.f32 %v3580, %v3926
        %v3928 = vpop.f32.mrb[0].mxu0
        %v3929 = vadd.f32 %v3584, %v3928
        %v3930 = vpop.f32.mrb[0].mxu0
        %v3931 = vadd.f32 %v3580, %v3930
        %v3932 = vpop.f32.mrb[0].mxu0
        %v3933 = vadd.f32 %v3584, %v3932
        %3934 = vmatprep.mubr.bf16.mxu0 0
        %3935 = vmatmul.mubr.bf16.gmra.mrb[0].mxu0 %v3532
        %v3936 = vpop.f32.mrb[0].mxu0
        %v3937 = vadd.f32 %v3580, %v3936
        %v3938 = vpop.f32.mrb[0].mxu0
        %v3939 = vadd.f32 %v3584, %v3938
        %v3940 = vpop.f32.mrb[0].mxu0
        %v3941 = vadd.f32 %v3580, %v3940
        %v3942 = vpop.f32.mrb[0].mxu0
        %v3943 = vadd.f32 %v3584, %v3942
        %3944 = vmatprep.mubr.bf16.mxu0 0
        %3945 = vmatmul.mubr.bf16.gmra.mrb[0].mxu0 %v3533
        %v3946 = vpop.f32.mrb[0].mxu0
        %v3947 = vadd.f32 %v3580, %v3946
        %v3948 = vpop.f32.mrb[0].mxu0
        %v3949 = vadd.f32 %v3584, %v3948
        %v3950 = vpop.f32.mrb[0].mxu0
        %v3951 = vadd.f32 %v3580, %v3950
        %v3952 = vpop.f32.mrb[0].mxu0
        %v3953 = vadd.f32 %v3584, %v3952
        %3954 = vmatprep.mubr.bf16.mxu0 0
        %3955 = vmatmul.mubr.bf16.gmra.mrb[0].mxu0 %v3534
        %v3956 = vpop.f32.mrb[0].mxu0
        %v3957 = vadd.f32 %v3580, %v3956
        %v3958 = vpop.f32.mrb[0].mxu0
        %v3959 = vadd.f32 %v3584, %v3958
        %v3960 = vpop.f32.mrb[0].mxu0
        %v3961 = vadd.f32 %v3580, %v3960
        %v3962 = vpop.f32.mrb[0].mxu0
        %v3963 = vadd.f32 %v3584, %v3962
        %3964 = vmatprep.mubr.bf16.mxu0 0
        %3965 = vmatmul.mubr.bf16.gmra.mrb[0].mxu0 %v3535
        %v3966 = vpop.f32.mrb[0].mxu0
        %v3967 = vadd.f32 %v3580, %v3966
        %v3968 = vpop.f32.mrb[0].mxu0
        %v3969 = vadd.f32 %v3584, %v3968
        %v3970 = vpop.f32.mrb[0].mxu0
        %v3971 = vadd.f32 %v3580, %v3970
        %v3972 = vpop.f32.mrb[0].mxu0
        %v3973 = vadd.f32 %v3584, %v3972
        %3974 = vdwg.mxu0
        %v3975 = vmax.f32 %v3784, 0.0
        %v3976 = vmax.f32 %v3786, 0.0
        %v3977 = vmax.f32 %v3897, 0.0
        %v3978 = vmax.f32 %v3899, 0.0
        %v3979 = vmax.f32 %v3788, 0.0
        %v3980 = vmax.f32 %v3790, 0.0
        %v3981 = vmax.f32 %v3901, 0.0
        %v3982 = vmax.f32 %v3903, 0.0
        %v3983 = vmax.f32 %v3794, 0.0
        %v3984 = vmax.f32 %v3796, 0.0
        %v3985 = vmax.f32 %v3907, 0.0
        %v3986 = vmax.f32 %v3909, 0.0
        %v3987 = vmax.f32 %v3798, 0.0
        %v3988 = vmax.f32 %v3800, 0.0
        %v3989 = vmax.f32 %v3911, 0.0
        %v3990 = vmax.f32 %v3913, 0.0
        %v3991 = vmax.f32 %v3804, 0.0
        %v3992 = vmax.f32 %v3806, 0.0
        %v3993 = vmax.f32 %v3917, 0.0
        %v3994 = vmax.f32 %v3919, 0.0
        %v3995 = vmax.f32 %v3808, 0.0
        %v3996 = vmax.f32 %v3810, 0.0
        %v3997 = vmax.f32 %v3921, 0.0
        %v3998 = vmax.f32 %v3923, 0.0
        %v3999 = vmax.f32 %v3814, 0.0
        %v4000 = vmax.f32 %v3816, 0.0
        %v4001 = vmax.f32 %v3927, 0.0
        %v4002 = vmax.f32 %v3929, 0.0
        %v4003 = vmax.f32 %v3818, 0.0
        %v4004 = vmax.f32 %v3820, 0.0
        %v4005 = vmax.f32 %v3931, 0.0
        %v4006 = vmax.f32 %v3933, 0.0
        %v4007 = vmax.f32 %v3824, 0.0
        %v4008 = vmax.f32 %v3826, 0.0
        %v4009 = vmax.f32 %v3937, 0.0
        %v4010 = vmax.f32 %v3939, 0.0
        %v4011 = vmax.f32 %v3828, 0.0
        %v4012 = vmax.f32 %v3830, 0.0
        %v4013 = vmax.f32 %v3941, 0.0
        %v4014 = vmax.f32 %v3943, 0.0
        %v4015 = vmax.f32 %v3834, 0.0
        %v4016 = vmax.f32 %v3836, 0.0
        %v4017 = vmax.f32 %v3947, 0.0
        %v4018 = vmax.f32 %v3949, 0.0
        %v4019 = vmax.f32 %v3838, 0.0
        %v4020 = vmax.f32 %v3840, 0.0
        %v4021 = vmax.f32 %v3951, 0.0
        %v4022 = vmax.f32 %v3953, 0.0
        %v4023 = vmax.f32 %v3844, 0.0
        %v4024 = vmax.f32 %v3846, 0.0
        %v4025 = vmax.f32 %v3957, 0.0
        %v4026 = vmax.f32 %v3959, 0.0
        %v4027 = vmax.f32 %v3848, 0.0
        %v4028 = vmax.f32 %v3850, 0.0
        %v4029 = vmax.f32 %v3961, 0.0
        %v4030 = vmax.f32 %v3963, 0.0
        %v4031 = vmax.f32 %v3854, 0.0
        %v4032 = vmax.f32 %v3856, 0.0
        %v4033 = vmax.f32 %v3967, 0.0
        %v4034 = vmax.f32 %v3969, 0.0
        %v4035 = vmax.f32 %v3858, 0.0
        %v4036 = vmax.f32 %v3860, 0.0
        %v4037 = vmax.f32 %v3971, 0.0
        %v4038 = vmax.f32 %v3973, 0.0
        %v4039 = vpack.c.bf16 %v3979, %v3975
        %v4040 = vpack.c.bf16 %v3980, %v3976
        %v4041 = vpack.c.bf16 %v3981, %v3977
        %v4042 = vpack.c.bf16 %v3982, %v3978
        %v4043 = vpack.c.bf16 %v3987, %v3983
        %v4044 = vpack.c.bf16 %v3988, %v3984
        %v4045 = vpack.c.bf16 %v3989, %v3985
        %v4046 = vpack.c.bf16 %v3990, %v3986
        %v4047 = vpack.c.bf16 %v3995, %v3991
        %v4048 = vpack.c.bf16 %v3996, %v3992
        %v4049 = vpack.c.bf16 %v3997, %v3993
        %v4050 = vpack.c.bf16 %v3998, %v3994
        %v4051 = vpack.c.bf16 %v4003, %v3999
        %v4052 = vpack.c.bf16 %v4004, %v4000
        %v4053 = vpack.c.bf16 %v4005, %v4001
        %v4054 = vpack.c.bf16 %v4006, %v4002
        %v4055 = vpack.c.bf16 %v4011, %v4007
        %v4056 = vpack.c.bf16 %v4012, %v4008
        %v4057 = vpack.c.bf16 %v4013, %v4009
        %v4058 = vpack.c.bf16 %v4014, %v4010
        %v4059 = vpack.c.bf16 %v4019, %v4015
        %v4060 = vpack.c.bf16 %v4020, %v4016
        %v4061 = vpack.c.bf16 %v4021, %v4017
        %v4062 = vpack.c.bf16 %v4022, %v4018
        %v4063 = vpack.c.bf16 %v4027, %v4023
        %v4064 = vpack.c.bf16 %v4028, %v4024
        %v4065 = vpack.c.bf16 %v4029, %v4025
        %v4066 = vpack.c.bf16 %v4030, %v4026
        %v4067 = vpack.c.bf16 %v4035, %v4031
        %v4068 = vpack.c.bf16 %v4036, %v4032
        %v4069 = vpack.c.bf16 %v4037, %v4033
        %v4070 = vpack.c.bf16 %v4038, %v4034
        %v4071 = vld [vmem:[#allocation11] sm:$0xf]
        %v4072 = vld [vmem:[#allocation11 + $0x4] sm:$0xf]
        %v4073 = vld [vmem:[#allocation11 + $0x8] sm:$0xf]
        %v4074 = vld [vmem:[#allocation11 + $0xc] sm:$0xf]
        %v4075 = vld [vmem:[#allocation11 + $0x10] sm:$0xf]
        %v4076 = vld [vmem:[#allocation11 + $0x14] sm:$0xf]
        %v4077 = vld [vmem:[#allocation11 + $0x18] sm:$0xf]
        %v4078 = vld [vmem:[#allocation11 + $0x1c] sm:$0xf]
        %v4079 = vld [vmem:[#allocation11 + $0x20] sm:$0xf]
        %v4080 = vld [vmem:[#allocation11 + $0x24] sm:$0xf]
        %v4081 = vld [vmem:[#allocation11 + $0x28] sm:$0xf]
        %v4082 = vld [vmem:[#allocation11 + $0x2c] sm:$0xf]
        %v4083 = vld [vmem:[#allocation11 + $0x30] sm:$0xf]
        %v4084 = vld [vmem:[#allocation11 + $0x34] sm:$0xf]
        %v4085 = vld [vmem:[#allocation11 + $0x38] sm:$0xf]
        %v4086 = vld [vmem:[#allocation11 + $0x3c] sm:$0xf]
        %v4087 = vld [vmem:[#allocation11 + $0x40] sm:$0xf]
        %v4088 = vld [vmem:[#allocation11 + $0x44] sm:$0xf]
        %v4089 = vld [vmem:[#allocation11 + $0x48] sm:$0xf]
        %v4090 = vld [vmem:[#allocation11 + $0x4c] sm:$0xf]
        %v4091 = vld [vmem:[#allocation11 + $0x50] sm:$0xf]
        %v4092 = vld [vmem:[#allocation11 + $0x54] sm:$0xf]
        %v4093 = vld [vmem:[#allocation11 + $0x58] sm:$0xf]
        %v4094 = vld [vmem:[#allocation11 + $0x5c] sm:$0xf]
        %v4095 = vld [vmem:[#allocation11 + $0x60] sm:$0xf]
        %v4096 = vld [vmem:[#allocation11 + $0x64] sm:$0xf]
        %v4097 = vld [vmem:[#allocation11 + $0x68] sm:$0xf]
        %v4098 = vld [vmem:[#allocation11 + $0x6c] sm:$0xf]
        %v4099 = vld [vmem:[#allocation11 + $0x70] sm:$0xf]
        %v4100 = vld [vmem:[#allocation11 + $0x74] sm:$0xf]
        %v4101 = vld [vmem:[#allocation11 + $0x78] sm:$0xf]
        %v4102 = vld [vmem:[#allocation11 + $0x7c] sm:$0xf]
        %v4103 = vld [vmem:[#allocation11 + $0x80] sm:$0xf]
        %v4104 = vld [vmem:[#allocation11 + $0x84] sm:$0xf]
        %v4105 = vld [vmem:[#allocation11 + $0x88] sm:$0xf]
        %v4106 = vld [vmem:[#allocation11 + $0x8c] sm:$0xf]
        %v4107 = vld [vmem:[#allocation11 + $0x90] sm:$0xf]
        %v4108 = vld [vmem:[#allocation11 + $0x94] sm:$0xf]
        %v4109 = vld [vmem:[#allocation11 + $0x98] sm:$0xf]
        %v4110 = vld [vmem:[#allocation11 + $0x9c] sm:$0xf]
        %v4111 = vld [vmem:[#allocation11 + $0xa0] sm:$0xf]
        %v4112 = vld [vmem:[#allocation11 + $0xa4] sm:$0xf]
        %v4113 = vld [vmem:[#allocation11 + $0xa8] sm:$0xf]
        %v4114 = vld [vmem:[#allocation11 + $0xac] sm:$0xf]
        %v4115 = vld [vmem:[#allocation11 + $0xb0] sm:$0xf]
        %v4116 = vld [vmem:[#allocation11 + $0xb4] sm:$0xf]
        %v4117 = vld [vmem:[#allocation11 + $0xb8] sm:$0xf]
        %v4118 = vld [vmem:[#allocation11 + $0xbc] sm:$0xf]
        %v4119 = vld [vmem:[#allocation11 + $0xc0] sm:$0xf]
        %v4120 = vld [vmem:[#allocation11 + $0xc4] sm:$0xf]
        %v4121 = vld [vmem:[#allocation11 + $0xc8] sm:$0xf]
        %v4122 = vld [vmem:[#allocation11 + $0xcc] sm:$0xf]
        %v4123 = vld [vmem:[#allocation11 + $0xd0] sm:$0xf]
        %v4124 = vld [vmem:[#allocation11 + $0xd4] sm:$0xf]
        %v4125 = vld [vmem:[#allocation11 + $0xd8] sm:$0xf]
        %v4126 = vld [vmem:[#allocation11 + $0xdc] sm:$0xf]
        %v4127 = vld [vmem:[#allocation11 + $0xe0] sm:$0xf]
        %v4128 = vld [vmem:[#allocation11 + $0xe4] sm:$0xf]
        %v4129 = vld [vmem:[#allocation11 + $0xe8] sm:$0xf]
        %v4130 = vld [vmem:[#allocation11 + $0xec] sm:$0xf]
        %v4131 = vld [vmem:[#allocation11 + $0xf0] sm:$0xf]
        %v4132 = vld [vmem:[#allocation11 + $0xf4] sm:$0xf]
        %v4133 = vld [vmem:[#allocation11 + $0xf8] sm:$0xf]
        %v4134 = vld [vmem:[#allocation11 + $0xfc] sm:$0xf]
        %v4135 = vlaneseq
        %v4136 = vshrl.u32 %v4135, 7
        %v4137 = vsub.s32 0, %v4136
        %v4138 = vrot.slane %v392, %v4137
        %v4203 = vunpack.c.l.b16 %v4071
        %v4204 = vunpack.c.l.b16 %v4072
        %v4205 = vunpack.c.l.b16 %v4073
        %v4206 = vunpack.c.l.b16 %v4074
        %v4207 = vunpack.c.l.b16 %v4075
        %v4208 = vunpack.c.l.b16 %v4076
        %v4209 = vunpack.c.l.b16 %v4077
        %v4210 = vunpack.c.l.b16 %v4078
        %v4211 = vunpack.c.l.b16 %v4079
        %v4212 = vunpack.c.l.b16 %v4080
        %v4213 = vunpack.c.l.b16 %v4081
        %v4214 = vunpack.c.l.b16 %v4082
        %v4215 = vunpack.c.l.b16 %v4083
        %v4216 = vunpack.c.l.b16 %v4084
        %v4217 = vunpack.c.l.b16 %v4085
        %v4218 = vunpack.c.l.b16 %v4086
        %v4219 = vunpack.c.l.b16 %v4087
        %v4220 = vunpack.c.l.b16 %v4088
        %v4221 = vunpack.c.l.b16 %v4089
        %v4222 = vunpack.c.l.b16 %v4090
        %v4223 = vunpack.c.l.b16 %v4091
        %v4224 = vunpack.c.l.b16 %v4092
        %v4225 = vunpack.c.l.b16 %v4093
        %v4226 = vunpack.c.l.b16 %v4094
        %v4227 = vunpack.c.l.b16 %v4095
        %v4228 = vunpack.c.l.b16 %v4096
        %v4229 = vunpack.c.l.b16 %v4097
        %v4230 = vunpack.c.l.b16 %v4098
        %v4231 = vunpack.c.l.b16 %v4099
        %v4232 = vunpack.c.l.b16 %v4100
        %v4233 = vunpack.c.l.b16 %v4101
        %v4234 = vunpack.c.l.b16 %v4102
        %v4235 = vunpack.c.l.b16 %v4103
        %v4236 = vunpack.c.l.b16 %v4104
        %v4237 = vunpack.c.l.b16 %v4105
        %v4238 = vunpack.c.l.b16 %v4106
        %v4239 = vunpack.c.l.b16 %v4107
        %v4240 = vunpack.c.l.b16 %v4108
        %v4241 = vunpack.c.l.b16 %v4109
        %v4242 = vunpack.c.l.b16 %v4110
        %v4243 = vunpack.c.l.b16 %v4111
        %v4244 = vunpack.c.l.b16 %v4112
        %v4245 = vunpack.c.l.b16 %v4113
        %v4246 = vunpack.c.l.b16 %v4114
        %v4247 = vunpack.c.l.b16 %v4115
        %v4248 = vunpack.c.l.b16 %v4116
        %v4249 = vunpack.c.l.b16 %v4117
        %v4250 = vunpack.c.l.b16 %v4118
        %v4251 = vunpack.c.l.b16 %v4119
        %v4252 = vunpack.c.l.b16 %v4120
        %v4253 = vunpack.c.l.b16 %v4121
        %v4254 = vunpack.c.l.b16 %v4122
        %v4255 = vunpack.c.l.b16 %v4123
        %v4256 = vunpack.c.l.b16 %v4124
        %v4257 = vunpack.c.l.b16 %v4125
        %v4258 = vunpack.c.l.b16 %v4126
        %v4259 = vunpack.c.l.b16 %v4127
        %v4260 = vunpack.c.l.b16 %v4128
        %v4261 = vunpack.c.l.b16 %v4129
        %v4262 = vunpack.c.l.b16 %v4130
        %v4263 = vunpack.c.l.b16 %v4131
        %v4264 = vunpack.c.l.b16 %v4132
        %v4265 = vunpack.c.l.b16 %v4133
        %v4266 = vunpack.c.l.b16 %v4134
        %v4267 = vpack.c.b16 %v4204, %v4203
        %v4268 = vpack.c.b16 %v4206, %v4205
        %v4269 = vpack.c.b16 %v4208, %v4207
        %v4270 = vpack.c.b16 %v4210, %v4209
        %v4271 = vpack.c.b16 %v4212, %v4211
        %v4272 = vpack.c.b16 %v4214, %v4213
        %v4273 = vpack.c.b16 %v4216, %v4215
        %v4274 = vpack.c.b16 %v4218, %v4217
        %v4275 = vpack.c.b16 %v4220, %v4219
        %v4276 = vpack.c.b16 %v4222, %v4221
        %v4277 = vpack.c.b16 %v4224, %v4223
        %v4278 = vpack.c.b16 %v4226, %v4225
        %v4279 = vpack.c.b16 %v4228, %v4227
        %v4280 = vpack.c.b16 %v4230, %v4229
        %v4281 = vpack.c.b16 %v4232, %v4231
        %v4282 = vpack.c.b16 %v4234, %v4233
        %v4283 = vpack.c.b16 %v4236, %v4235
        %v4284 = vpack.c.b16 %v4238, %v4237
        %v4285 = vpack.c.b16 %v4240, %v4239
        %v4286 = vpack.c.b16 %v4242, %v4241
        %v4287 = vpack.c.b16 %v4244, %v4243
        %v4288 = vpack.c.b16 %v4246, %v4245
        %v4289 = vpack.c.b16 %v4248, %v4247
        %v4290 = vpack.c.b16 %v4250, %v4249
        %v4291 = vpack.c.b16 %v4252, %v4251
        %v4292 = vpack.c.b16 %v4254, %v4253
        %v4293 = vpack.c.b16 %v4256, %v4255
        %v4294 = vpack.c.b16 %v4258, %v4257
        %v4295 = vpack.c.b16 %v4260, %v4259
        %v4296 = vpack.c.b16 %v4262, %v4261
        %v4297 = vpack.c.b16 %v4264, %v4263
        %v4298 = vpack.c.b16 %v4266, %v4265
        %4331 = vmatprep.subr.bf16.mxu0 0
        %4332 = vmatpush1.bf16.msra.mxu0 %v4267
        %4333 = vmatprep.subr.bf16.mxu0 0
        %4334 = vmatpush1.bf16.msra.mxu0 %v4268
        %4335 = vmatprep.subr.bf16.mxu0 0
        %4336 = vmatpush1.bf16.msra.mxu0 %v4269
        %4337 = vmatprep.subr.bf16.mxu0 0
        %4338 = vmatpush1.bf16.msra.mxu0 %v4270
        %4339 = vmatprep.subr.bf16.mxu0 0
        %4340 = vmatpush1.bf16.msra.mxu0 %v4271
        %4341 = vmatprep.subr.bf16.mxu0 0
        %4342 = vmatpush1.bf16.msra.mxu0 %v4272
        %4343 = vmatprep.subr.bf16.mxu0 0
        %4344 = vmatpush1.bf16.msra.mxu0 %v4273
        %4345 = vmatprep.subr.bf16.mxu0 0
        %4346 = vmatpush1.bf16.msra.mxu0 %v4274
        %4347 = vmatprep.subr.bf16.mxu0 0
        %4348 = vmatpush1.bf16.msra.mxu0 %v4275
        %4349 = vmatprep.subr.bf16.mxu0 0
        %4350 = vmatpush1.bf16.msra.mxu0 %v4276
        %4351 = vmatprep.subr.bf16.mxu0 0
        %4352 = vmatpush1.bf16.msra.mxu0 %v4277
        %4353 = vmatprep.subr.bf16.mxu0 0
        %4354 = vmatpush1.bf16.msra.mxu0 %v4278
        %4355 = vmatprep.subr.bf16.mxu0 0
        %4356 = vmatpush1.bf16.msra.mxu0 %v4279
        %4357 = vmatprep.subr.bf16.mxu0 0
        %4358 = vmatpush1.bf16.msra.mxu0 %v4280
        %4359 = vmatprep.subr.bf16.mxu0 0
        %4360 = vmatpush1.bf16.msra.mxu0 %v4281
        %4361 = vmatprep.subr.bf16.mxu0 0
        %4362 = vmatpush1.bf16.msra.mxu0 %v4282
        %4363 = vmatprep.mubr.bf16.mxu0 %v4040
        %4364 = vmatmul.mubr.bf16.gmra.mrb[0].mxu0 %v4039
        %v4365 = vpop.f32.mrb[0].mxu0
        %v4366 = vadd.f32 %v4138, %v4365
        %v4367 = vpop.f32.mrb[0].mxu0
        %v4368 = vpop.f32.mrb[0].mxu0
        %v4369 = vadd.f32 %v4138, %v4368
        %v4370 = vpop.f32.mrb[0].mxu0
        %4371 = vmatprep.mubr.bf16.mxu0 %v4044
        %4372 = vmatmul.mubr.bf16.gmra.mrb[0].mxu0 %v4043
        %v4373 = vpop.f32.mrb[0].mxu0
        %v4374 = vadd.f32 %v4138, %v4373
        %v4375 = vpop.f32.mrb[0].mxu0
        %v4376 = vpop.f32.mrb[0].mxu0
        %v4377 = vadd.f32 %v4138, %v4376
        %v4378 = vpop.f32.mrb[0].mxu0
        %4379 = vmatprep.mubr.bf16.mxu0 %v4048
        %4380 = vmatmul.mubr.bf16.gmra.mrb[0].mxu0 %v4047
        %v4381 = vpop.f32.mrb[0].mxu0
        %v4382 = vadd.f32 %v4138, %v4381
        %v4383 = vpop.f32.mrb[0].mxu0
        %v4384 = vpop.f32.mrb[0].mxu0
        %v4385 = vadd.f32 %v4138, %v4384
        %v4386 = vpop.f32.mrb[0].mxu0
        %4387 = vmatprep.mubr.bf16.mxu0 %v4052
        %4388 = vmatmul.mubr.bf16.gmra.mrb[0].mxu0 %v4051
        %v4389 = vpop.f32.mrb[0].mxu0
        %v4390 = vadd.f32 %v4138, %v4389
        %v4391 = vpop.f32.mrb[0].mxu0
        %v4392 = vpop.f32.mrb[0].mxu0
        %v4393 = vadd.f32 %v4138, %v4392
        %v4394 = vpop.f32.mrb[0].mxu0
        %4395 = vmatprep.mubr.bf16.mxu0 %v4056
        %4396 = vmatmul.mubr.bf16.gmra.mrb[0].mxu0 %v4055
        %v4397 = vpop.f32.mrb[0].mxu0
        %v4398 = vadd.f32 %v4138, %v4397
        %v4399 = vpop.f32.mrb[0].mxu0
        %v4400 = vpop.f32.mrb[0].mxu0
        %v4401 = vadd.f32 %v4138, %v4400
        %v4402 = vpop.f32.mrb[0].mxu0
        %4403 = vmatprep.mubr.bf16.mxu0 %v4060
        %4404 = vmatmul.mubr.bf16.gmra.mrb[0].mxu0 %v4059
        %v4405 = vpop.f32.mrb[0].mxu0
        %v4406 = vadd.f32 %v4138, %v4405
        %v4407 = vpop.f32.mrb[0].mxu0
        %v4408 = vpop.f32.mrb[0].mxu0
        %v4409 = vadd.f32 %v4138, %v4408
        %v4410 = vpop.f32.mrb[0].mxu0
        %4411 = vmatprep.mubr.bf16.mxu0 %v4064
        %4412 = vmatmul.mubr.bf16.gmra.mrb[0].mxu0 %v4063
        %v4413 = vpop.f32.mrb[0].mxu0
        %v4414 = vadd.f32 %v4138, %v4413
        %v4415 = vpop.f32.mrb[0].mxu0
        %v4416 = vpop.f32.mrb[0].mxu0
        %v4417 = vadd.f32 %v4138, %v4416
        %v4418 = vpop.f32.mrb[0].mxu0
        %4419 = vmatprep.mubr.bf16.mxu0 %v4068
        %4420 = vmatmul.mubr.bf16.gmra.mrb[0].mxu0 %v4067
        %v4421 = vpop.f32.mrb[0].mxu0
        %v4422 = vadd.f32 %v4138, %v4421
        %v4423 = vpop.f32.mrb[0].mxu0
        %v4424 = vpop.f32.mrb[0].mxu0
        %v4425 = vadd.f32 %v4138, %v4424
        %v4426 = vpop.f32.mrb[0].mxu0
        %4427 = vdwg.mxu0
        %4428 = vmatprep.subr.bf16.mxu0 0
        %4429 = vmatpush1.bf16.msra.mxu0 %v4283
        %4430 = vmatprep.subr.bf16.mxu0 0
        %4431 = vmatpush1.bf16.msra.mxu0 %v4284
        %4432 = vmatprep.subr.bf16.mxu0 0
        %4433 = vmatpush1.bf16.msra.mxu0 %v4285
        %4434 = vmatprep.subr.bf16.mxu0 0
        %4435 = vmatpush1.bf16.msra.mxu0 %v4286
        %4436 = vmatprep.subr.bf16.mxu0 0
        %4437 = vmatpush1.bf16.msra.mxu0 %v4287
        %4438 = vmatprep.subr.bf16.mxu0 0
        %4439 = vmatpush1.bf16.msra.mxu0 %v4288
        %4440 = vmatprep.subr.bf16.mxu0 0
        %4441 = vmatpush1.bf16.msra.mxu0 %v4289
        %4442 = vmatprep.subr.bf16.mxu0 0
        %4443 = vmatpush1.bf16.msra.mxu0 %v4290
        %4444 = vmatprep.subr.bf16.mxu0 0
        %4445 = vmatpush1.bf16.msra.mxu0 %v4291
        %4446 = vmatprep.subr.bf16.mxu0 0
        %4447 = vmatpush1.bf16.msra.mxu0 %v4292
        %4448 = vmatprep.subr.bf16.mxu0 0
        %4449 = vmatpush1.bf16.msra.mxu0 %v4293
        %4450 = vmatprep.subr.bf16.mxu0 0
        %4451 = vmatpush1.bf16.msra.mxu0 %v4294
        %4452 = vmatprep.subr.bf16.mxu0 0
        %4453 = vmatpush1.bf16.msra.mxu0 %v4295
        %4454 = vmatprep.subr.bf16.mxu0 0
        %4455 = vmatpush1.bf16.msra.mxu0 %v4296
        %4456 = vmatprep.subr.bf16.mxu0 0
        %4457 = vmatpush1.bf16.msra.mxu0 %v4297
        %4458 = vmatprep.subr.bf16.mxu0 0
        %4459 = vmatpush1.bf16.msra.mxu0 %v4298
        %4460 = vmatprep.mubr.bf16.mxu0 %v4042
        %4461 = vmatmul.mubr.bf16.gmra.mrb[0].mxu0 %v4041
        %v4462 = vpop.f32.mrb[0].mxu0
        %v4463 = vadd.f32 %v4366, %v4462
        %v4464 = vpop.f32.mrb[0].mxu0
        %v4465 = vpop.f32.mrb[0].mxu0
        %v4466 = vadd.f32 %v4369, %v4465
        %v4467 = vpop.f32.mrb[0].mxu0
        %4468 = vmatprep.mubr.bf16.mxu0 %v4046
        %4469 = vmatmul.mubr.bf16.gmra.mrb[0].mxu0 %v4045
        %v4470 = vpop.f32.mrb[0].mxu0
        %v4471 = vadd.f32 %v4374, %v4470
        %v4472 = vpop.f32.mrb[0].mxu0
        %v4473 = vpop.f32.mrb[0].mxu0
        %v4474 = vadd.f32 %v4377, %v4473
        %v4475 = vpop.f32.mrb[0].mxu0
        %4476 = vmatprep.mubr.bf16.mxu0 %v4050
        %4477 = vmatmul.mubr.bf16.gmra.mrb[0].mxu0 %v4049
        %v4478 = vpop.f32.mrb[0].mxu0
        %v4479 = vadd.f32 %v4382, %v4478
        %v4480 = vpop.f32.mrb[0].mxu0
        %v4481 = vpop.f32.mrb[0].mxu0
        %v4482 = vadd.f32 %v4385, %v4481
        %v4483 = vpop.f32.mrb[0].mxu0
        %4484 = vmatprep.mubr.bf16.mxu0 %v4054
        %4485 = vmatmul.mubr.bf16.gmra.mrb[0].mxu0 %v4053
        %v4486 = vpop.f32.mrb[0].mxu0
        %v4487 = vadd.f32 %v4390, %v4486
        %v4488 = vpop.f32.mrb[0].mxu0
        %v4489 = vpop.f32.mrb[0].mxu0
        %v4490 = vadd.f32 %v4393, %v4489
        %v4491 = vpop.f32.mrb[0].mxu0
        %4492 = vmatprep.mubr.bf16.mxu0 %v4058
        %4493 = vmatmul.mubr.bf16.gmra.mrb[0].mxu0 %v4057
        %v4494 = vpop.f32.mrb[0].mxu0
        %v4495 = vadd.f32 %v4398, %v4494
        %v4496 = vpop.f32.mrb[0].mxu0
        %v4497 = vpop.f32.mrb[0].mxu0
        %v4498 = vadd.f32 %v4401, %v4497
        %v4499 = vpop.f32.mrb[0].mxu0
        %4500 = vmatprep.mubr.bf16.mxu0 %v4062
        %4501 = vmatmul.mubr.bf16.gmra.mrb[0].mxu0 %v4061
        %v4502 = vpop.f32.mrb[0].mxu0
        %v4503 = vadd.f32 %v4406, %v4502
        %v4504 = vpop.f32.mrb[0].mxu0
        %v4505 = vpop.f32.mrb[0].mxu0
        %v4506 = vadd.f32 %v4409, %v4505
        %v4507 = vpop.f32.mrb[0].mxu0
        %4508 = vmatprep.mubr.bf16.mxu0 %v4066
        %4509 = vmatmul.mubr.bf16.gmra.mrb[0].mxu0 %v4065
        %v4510 = vpop.f32.mrb[0].mxu0
        %v4511 = vadd.f32 %v4414, %v4510
        %v4512 = vpop.f32.mrb[0].mxu0
        %v4513 = vpop.f32.mrb[0].mxu0
        %v4514 = vadd.f32 %v4417, %v4513
        %v4515 = vpop.f32.mrb[0].mxu0
        %4516 = vmatprep.mubr.bf16.mxu0 %v4070
        %4517 = vmatmul.mubr.bf16.gmra.mrb[0].mxu0 %v4069
        %v4518 = vpop.f32.mrb[0].mxu0
        %v4519 = vadd.f32 %v4422, %v4518
        %v4520 = vpop.f32.mrb[0].mxu0
        %v4521 = vpop.f32.mrb[0].mxu0
        %v4522 = vadd.f32 %v4425, %v4521
        %v4523 = vpop.f32.mrb[0].mxu0
        %4524 = vdwg.mxu0
        %v4525 = vadd.f32 %v3296, %v4463
        %v4526 = vadd.f32 %v3297, %v4466
        %v4527 = vadd.f32 %v3298, %v4471
        %v4528 = vadd.f32 %v3299, %v4474
        %v4529 = vadd.f32 %v3300, %v4479
        %v4530 = vadd.f32 %v3301, %v4482
        %v4531 = vadd.f32 %v3302, %v4487
        %v4532 = vadd.f32 %v3303, %v4490
        %v4533 = vadd.f32 %v3304, %v4495
        %v4534 = vadd.f32 %v3305, %v4498
        %v4535 = vadd.f32 %v3306, %v4503
        %v4536 = vadd.f32 %v3307, %v4506
        %v4537 = vadd.f32 %v3308, %v4511
        %v4538 = vadd.f32 %v3309, %v4514
        %v4539 = vadd.f32 %v3310, %v4519
        %v4540 = vadd.f32 %v3311, %v4522
        %4541 = vst [vmem:[%s367] sm:$0xff] %v4525
        %4542 = vst [vmem:[%s367 + $0x8] sm:$0xff] %v4526
        %4543 = vst [vmem:[%s367 + $0x10] sm:$0xff] %v4527
        %4544 = vst [vmem:[%s367 + $0x18] sm:$0xff] %v4528
        %4545 = vst [vmem:[%s367 + $0x20] sm:$0xff] %v4529
        %4546 = vst [vmem:[%s367 + $0x28] sm:$0xff] %v4530
        %4547 = vst [vmem:[%s367 + $0x30] sm:$0xff] %v4531
        %4548 = vst [vmem:[%s367 + $0x38] sm:$0xff] %v4532
        %4549 = vst [vmem:[%s367 + $0x40] sm:$0xff] %v4533
        %4550 = vst [vmem:[%s367 + $0x48] sm:$0xff] %v4534
        %4551 = vst [vmem:[%s367 + $0x50] sm:$0xff] %v4535
        %4552 = vst [vmem:[%s367 + $0x58] sm:$0xff] %v4536
        %4553 = vst [vmem:[%s367 + $0x60] sm:$0xff] %v4537
        %4554 = vst [vmem:[%s367 + $0x68] sm:$0xff] %v4538
        %4555 = vst [vmem:[%s367 + $0x70] sm:$0xff] %v4539
        %4556 = vst [vmem:[%s367 + $0x78] sm:$0xff] %v4540
        %s4557 = sand.u32 %s187, 1
        %s4558 = scalar_lea.sflag [#allocation4], %s4557
        %s4559 = sand.u32 %s187, 1
        %s4560 = smul.addr %s4559, 128
        %s4561 = scalar_lea.vmem [#allocation13], %s4560
        // Predicated region
        $region73: #{tpu_custom_call.1} parent=47 // pred_check
          %p4562 = pneg %p197
        $region74: #{tpu_custom_call.1} parent=47 // pred_check_branch
          %4564 = sbr.rel (%p4562) target = $region76
        $region75: #{tpu_custom_call.1} parent=47 // pred_region
          %s4565 = smul.u32 16, %s27
          %s4567 = ssub.s32 2048, 2048
          %4568 = vsyncadd %s4558, %s4567
          %s4569 = smul.addr %s4565, 128
          %s4570 = scalar_lea.hbm %s7, %s4569
          %s4571 = sshll.u32 %s4561, 4
          %s4572 = int_to_ptr.vmem [resolvable:$true] %s4571
          %4577 = dma.vmem_to_hbm [thread:$0]  %s4572, 2048, %s4570, %s4558, 128, 128, 8
        $region76: #{tpu_custom_call.1} parent=47 // pred_fallthru
          _
      $region48: #{tpu_custom_call.1} parent=5 // pred_fallthru
        _
      %p4578 = scmp.le.s32.totalorder 2, %s22
      // Predicated region
      $region77: #{tpu_custom_call.1} parent=5 // pred_check
        %p4579 = pneg %p4578
      $region78: #{tpu_custom_call.1} parent=5 // pred_check_branch
        %4581 = sbr.rel (%p4579) target = $region80
      $region79: #{tpu_custom_call.1} parent=5 // pred_region
        %s4582 = ssub.s32 %s22, 2
        // Predicated region
        $region81: #{tpu_custom_call.1} parent=79 // pred_check
          %p4583 = pneg %p203
        $region82: #{tpu_custom_call.1} parent=79 // pred_check_branch
          %4585 = sbr.rel (%p4583) target = $region84
        $region83: #{tpu_custom_call.1} parent=79 // pred_region
          %s4586 = sand.u32 %s188, 1
          %s4587 = scalar_lea.sflag [#allocation4], %s4586
          %s4588 = sand.u32 %s188, 1
          %s4589 = smul.addr %s4588, 128
          %s4590 = scalar_lea.vmem [#allocation13], %s4589
          %4591 = dma.done %s4587, 2048
        $region84: #{tpu_custom_call.1} parent=79 // pred_fallthru
          _
      $region80: #{tpu_custom_call.1} parent=5 // pred_fallthru
        _
    $region6: #{tpu_custom_call.1} parent=1 // loop_footer
      %s26 = sadd.s32 1, %s22
    $region7: #{tpu_custom_call.1} parent=1 // loop_footer_branch
      %21 = sbr.rel target = $region3
    $region8: #{tpu_custom_call.1} parent=1 // loop_exit
      _
    %4592 = vsyncpa [#allocation3], 1
    %s4593 = scalar_lea.sflag [#allocation3], 1
    %4594 = vsyncpa %s4593, 1
    %4595 = vsyncpa [#allocation6], 1
    %4596 = vsyncpa [#allocation9], 1
    %4597 = vsyncpa [#allocation12], 1
    %4598 = vsyncpa [#allocation4], 1
    %s4599 = scalar_lea.sflag [#allocation4], 1
    %4600 = vsyncpa %s4599, 1

</llo_original>
